<compile_context>
chip_gen: v7x
topology: tpu7x:2x2x1
jax: 0.10.0
libtpu: 0.0.40
codegen_flags: <defaults>
</compile_context>

<pallas_src>
import functools
import math

import jax
import jax.numpy as jnp
from jax.experimental import pallas as pl
from jax.experimental.pallas import tpu as pltpu


NEG_INF = -1e9  # HF-style large negative additive mask


def _round_up(n, m):
    return ((n + m - 1) // m) * m


# ----------------------------- in-kernel helpers -----------------------------

def _layernorm(x, g, b, eps=1e-12):
    mu = jnp.mean(x, axis=-1, keepdims=True)
    var = jnp.mean(jnp.square(x - mu), axis=-1, keepdims=True)
    return (x - mu) * jax.lax.rsqrt(var + eps) * g + b


def _gelu(x):
    # TODO(synk): HF BERT uses exact (erf) GELU; tanh approximation used here.
    c = math.sqrt(2.0 / math.pi)
    return 0.5 * x * (1.0 + jnp.tanh(c * (x + 0.044715 * x * x * x)))


# --------------------------------- fused kernel -------------------------------

def bert_fused_kernel(emb_ref, mask_ref, eg_ref, eb_ref,
                      wqkv_ref, bqkv_ref, wo_ref, bo_ref, g1_ref, b1_ref,
                      wi_ref, bi_ref, wo2_ref, bo2_ref, g2_ref, b2_ref,
                      w1h_ref, b1h_ref, w2h_ref, b2h_ref,
                      out_ref, x_sc, *, num_heads):
    """Grid = (example b [parallel], layer l [arbitrary]).

    emb_ref : (1, S, H) f32   summed embeddings for example b
    mask_ref: (1, 1, S) f32   additive key-padding mask row for example b
    x_sc    : (S, H)    f32   hidden states, resident in VMEM across layers
    out_ref : (1, R, Cp) f32  padded head output (row 0 = CLS), R <= 8
    """
    layer = pl.program_id(1)

    # ---- embeddings LayerNorm, once, before the first layer of each example ----
    @pl.when(layer == 0)
    def _():
        x_sc[...] = _layernorm(emb_ref[0], eg_ref[...], eb_ref[...])

    x = x_sc[...]                                   # (S, H) f32
    H = x.shape[-1]
    hd = H // num_heads
    scale = 1.0 / math.sqrt(hd)
    mask = mask_ref[0]                              # (1, S) additive key mask

    xb = x.astype(jnp.bfloat16)

    # ---- fused QKV projection (one MXU matmul, biases added once) ----
    qkv = jnp.dot(xb, wqkv_ref[0],
                  preferred_element_type=jnp.float32) + bqkv_ref[0]   # (S, 3H)
    qb = (qkv[:, :H] * scale).astype(jnp.bfloat16)  # fold 1/sqrt(hd) into q
    kb = qkv[:, H:2 * H].astype(jnp.bfloat16)
    vb = qkv[:, 2 * H:].astype(jnp.bfloat16)

    # ---- multi-head self-attention (per-example, (S, S) scores per head) ----
    # ctx @ Wo == sum_h ctx_h @ Wo[h*hd:(h+1)*hd, :]  (no lane concat needed)
    wo = wo_ref[0]                                  # (H, H) bf16
    attn = jnp.zeros_like(x)                        # (S, H) f32 accumulator
    for h in range(num_heads):                      # static, small (unrolled)
        sl = slice(h * hd, (h + 1) * hd)
        qh, kh, vh = qb[:, sl], kb[:, sl], vb[:, sl]
        s = jax.lax.dot_general(qh, kh, (((1,), (1,)), ((), ())),
                                preferred_element_type=jnp.float32) + mask
        s = s - jnp.max(s, axis=-1, keepdims=True)
        p = jnp.exp(s)
        p = p * pl.reciprocal(jnp.sum(p, axis=-1, keepdims=True), approx=True)
        ch = jnp.dot(p.astype(jnp.bfloat16), vh,
                     preferred_element_type=jnp.float32)              # (S, hd)
        attn = attn + jnp.dot(ch.astype(jnp.bfloat16), wo[sl, :],
                              preferred_element_type=jnp.float32)     # (S, H)
    attn = attn + bo_ref[0]

    # ---- residual + LayerNorm, FFN, residual + LayerNorm ----
    h1 = _layernorm(attn + x, g1_ref[0], b1_ref[0])
    inter = _gelu(jnp.dot(h1.astype(jnp.bfloat16), wi_ref[0],
                          preferred_element_type=jnp.float32) + bi_ref[0])
    ffn = jnp.dot(inter.astype(jnp.bfloat16), wo2_ref[0],
                  preferred_element_type=jnp.float32) + bo2_ref[0]
    x_new = _layernorm(ffn + h1, g2_ref[0], b2_ref[0])
    x_sc[...] = x_new

    # ---- classifier head on the last layer, only on the CLS tile ----
    # R (<= 8) rows containing the CLS row (row 0); lane-padded to 128 cols.
    # frozen=True path: cls.detach() is a no-op for this inference-only forward.
    @pl.when(layer == pl.num_programs(1) - 1)
    def _():
        R = out_ref.shape[1]
        cls = x_new[0:R, :]
        hh = jnp.dot(cls.astype(jnp.bfloat16), w1h_ref[...],
                     preferred_element_type=jnp.float32) + b1h_ref[...]
        hh = jnp.maximum(hh, 0.0)
        out_ref[0] = jnp.dot(hh.astype(jnp.bfloat16), w2h_ref[...],
                             preferred_element_type=jnp.float32) + b2h_ref[...]


# -------------------------------- forward wrapper ------------------------------

def bert_enron_forward(params, input_ids, attn_masks):
    """BertEnron.forward: BERT encoder -> CLS token -> MLP classifier head."""
    B, S = input_ids.shape
    H = params["word_emb"].shape[1]
    FF = params["wi"].shape[-1]
    L = params["wqkv"].shape[0]
    nh = params["num_heads"]
    R = 8 if S >= 8 else S   # CLS tile rows (row 0 is the CLS token)

    # Embeddings (word + position + token_type(=0)) -- plain-JAX gather glue.
    emb = (params["word_emb"][input_ids]
           + params["pos_emb"][:S][None, :, :]
           + params["type_emb"][0][None, None, :]).astype(jnp.float32)   # (B,S,H)

    # Per-example additive key-padding mask row: (B, 1, S), 0 or NEG_INF.
    key_valid = attn_masks.astype(jnp.float32) > 0.5
    mask = jnp.where(key_valid, 0.0, NEG_INF).astype(jnp.float32)[:, None, :]

    # Lane-dense classifier head: zero-pad hidden (100) and classes (4) to 128.
    M0 = params["w1"].shape[1]
    C0 = params["w2"].shape[1]
    Mp = _round_up(M0, 128)
    Cp = _round_up(C0, 128)
    w1p = jnp.pad(params["w1"], ((0, 0), (0, Mp - M0))).astype(jnp.bfloat16)
    b1p = jnp.pad(params["b1"], ((0, 0), (0, Mp - M0))).astype(jnp.float32)
    w2p = jnp.pad(params["w2"], ((0, Mp - M0), (0, Cp - C0))).astype(jnp.bfloat16)
    b2p = jnp.pad(params["b2"], ((0, 0), (0, Cp - C0))).astype(jnp.float32)

    kernel = functools.partial(bert_fused_kernel, num_heads=nh)

    def _const(shape):
        return pl.BlockSpec(shape, lambda b, l: (0,) * len(shape))

    def _perex(shape):
        return pl.BlockSpec(shape, lambda b, l: (b,) + (0,) * (len(shape) - 1))

    def _layer(shape):
        return pl.BlockSpec(shape, lambda b, l: (l,) + (0,) * (len(shape) - 1))

    # Explicit VMEM budget: 2x-buffered per-layer weights + constants + scratch.
    def nbytes(shape, dt):
        return math.prod(shape) * jnp.dtype(dt).itemsize

    per_layer = (nbytes((H, 3 * H), jnp.bfloat16) + nbytes((1, 3 * H), jnp.float32)
                 + nbytes((H, H), jnp.bfloat16) + 5 * nbytes((1, H), jnp.float32)
                 + nbytes((H, FF), jnp.bfloat16) + nbytes((1, FF), jnp.float32)
                 + nbytes((FF, H), jnp.bfloat16) + nbytes((1, H), jnp.float32))
    const = (nbytes((S, H), jnp.float32) + nbytes((1, S), jnp.float32)
             + 2 * nbytes((1, H), jnp.float32)
             + nbytes((H, Mp), jnp.bfloat16) + nbytes((1, Mp), jnp.float32)
             + nbytes((Mp, Cp), jnp.bfloat16) + nbytes((1, Cp), jnp.float32)
             + nbytes((R, Cp), jnp.float32))
    scratch = nbytes((S, H), jnp.float32)
    vmem_budget = int(min(max(2 * (2 * per_layer + 2 * const + scratch), 32 << 20),
                          63 << 20))

    out = pl.pallas_call(
        kernel,
        out_shape=jax.ShapeDtypeStruct((B, R, Cp), jnp.float32),
        grid_spec=pltpu.PrefetchScalarGridSpec(
            num_scalar_prefetch=0,
            grid=(B, L),                       # (example, layer)
            in_specs=[
                _perex((1, S, H)),             # emb (per example)
                _perex((1, 1, S)),             # additive key-padding mask row
                _const((1, H)),                # emb LN gamma
                _const((1, H)),                # emb LN beta
                _layer((1, H, 3 * H)),         # wqkv   (stacked per layer)
                _layer((1, 1, 3 * H)),         # bqkv
                _layer((1, H, H)),             # wo
                _layer((1, 1, H)),             # bo
                _layer((1, 1, H)),             # ln1 gamma
                _layer((1, 1, H)),             # ln1 beta
                _layer((1, H, FF)),            # wi
                _layer((1, 1, FF)),            # bi
                _layer((1, FF, H)),            # wo2
                _layer((1, 1, H)),             # bo2
                _layer((1, 1, H)),             # ln2 gamma
                _layer((1, 1, H)),             # ln2 beta
                _const((H, Mp)),               # head w1 (padded)
                _const((1, Mp)),               # head b1
                _const((Mp, Cp)),              # head w2 (padded)
                _const((1, Cp)),               # head b2
            ],
            out_specs=pl.BlockSpec((1, R, Cp), lambda b, l: (b, 0, 0)),
            scratch_shapes=[pltpu.VMEM((S, H), jnp.float32)],  # resident hidden
        ),
        compiler_params=pltpu.CompilerParams(
            dimension_semantics=("parallel", "arbitrary"),  # batch || layers seq
            vmem_limit_bytes=vmem_budget,
        ),
    )(emb, mask, params["emb_g"], params["emb_b"],
      params["wqkv"].astype(jnp.bfloat16), params["bqkv"],
      params["wo"].astype(jnp.bfloat16), params["bo"],
      params["ln1_g"], params["ln1_b"],
      params["wi"].astype(jnp.bfloat16), params["bi"],
      params["wo2"].astype(jnp.bfloat16), params["bo2"],
      params["ln2_g"], params["ln2_b"],
      w1p, b1p, w2p, b2p)

    # CLS is row 0 of each example's output tile; keep only real class columns.
    logits = out[:, 0, :C0]
    return logits


# ------------------------------ parameter init ---------------------------------

def init_params(key, *, vocab=64, H=128, FF=512, nheads=4, nlayers=2,
                max_pos=16, mlp_hidden=100, nclasses=4):
    # TODO(synk): real BertEnron loads pretrained HF BERT weights; random init here.
    ks = jax.random.split(key, 9)

    def dense(k, shape):
        return (0.02 * jax.random.normal(k, shape)).astype(jnp.float32)

    params = {
        "num_heads": nheads,
        "word_emb": dense(ks[0], (vocab, H)),
        "pos_emb": dense(ks[1], (max_pos, H)),
        "type_emb": dense(ks[2], (2, H)),
        "emb_g": jnp.ones((1, H), jnp.float32),
        "emb_b": jnp.zeros((1, H), jnp.float32),
        # Stacked per-layer encoder weights ([L, ...] selected by grid index_map).
        "wqkv": dense(ks[3], (nlayers, H, 3 * H)),
        "bqkv": jnp.zeros((nlayers, 1, 3 * H), jnp.float32),
        "wo": dense(ks[4], (nlayers, H, H)),
        "bo": jnp.zeros((nlayers, 1, H), jnp.float32),
        "ln1_g": jnp.ones((nlayers, 1, H), jnp.float32),
        "ln1_b": jnp.zeros((nlayers, 1, H), jnp.float32),
        "wi": dense(ks[5], (nlayers, H, FF)),
        "bi": jnp.zeros((nlayers, 1, FF), jnp.float32),
        "wo2": dense(ks[6], (nlayers, FF, H)),
        "bo2": jnp.zeros((nlayers, 1, H), jnp.float32),
        "ln2_g": jnp.ones((nlayers, 1, H), jnp.float32),
        "ln2_b": jnp.zeros((nlayers, 1, H), jnp.float32),
        # Classifier head (mlp=True path): Linear(H,100) -> ReLU -> Linear(100,C).
        "w1": dense(ks[7], (H, mlp_hidden)),
        "b1": jnp.zeros((1, mlp_hidden), jnp.float32),
        "w2": dense(ks[8], (mlp_hidden, nclasses)),
        "b2": jnp.zeros((1, nclasses), jnp.float32),
    }
    return params


# ----------------------------------- main --------------------------------------

if __name__ == "__main__":
    key = jax.random.PRNGKey(0)
    pkey, ikey = jax.random.split(key)

    B, S, VOCAB, NCLASSES = 2, 8, 64, 4
    params = init_params(pkey, vocab=VOCAB, H=128, FF=512, nheads=4, nlayers=2,
                         max_pos=16, mlp_hidden=100, nclasses=NCLASSES)

    input_ids = jax.random.randint(ikey, (B, S), 0, VOCAB, dtype=jnp.int32)
    attn_masks = jnp.ones((B, S), jnp.float32).at[1, 6:].set(0.0)  # pad 2 tokens

    logits = bert_enron_forward(params, input_ids, attn_masks)
    jax.block_until_ready(logits)
    assert logits.shape == (B, NCLASSES) and logits.dtype == jnp.float32
    assert bool(jnp.all(jnp.isfinite(logits)))
    print("KERNEL_OK")
</pallas_src>

<mosaic_0001>
module attributes {stable_mosaic.version = 11 : i64} {
  func.func @bert_fused_kernel(%arg0: i32, %arg1: i32, %arg2: memref<1x8x128xf32, #tpu.memory_space<vmem>>, %arg3: memref<1x1x8xf32, #tpu.memory_space<vmem>>, %arg4: memref<1x128xf32, #tpu.memory_space<vmem>>, %arg5: memref<1x128xf32, #tpu.memory_space<vmem>>, %arg6: memref<1x128x384xbf16, #tpu.memory_space<vmem>>, %arg7: memref<1x1x384xf32, #tpu.memory_space<vmem>>, %arg8: memref<1x128x128xbf16, #tpu.memory_space<vmem>>, %arg9: memref<1x1x128xf32, #tpu.memory_space<vmem>>, %arg10: memref<1x1x128xf32, #tpu.memory_space<vmem>>, %arg11: memref<1x1x128xf32, #tpu.memory_space<vmem>>, %arg12: memref<1x128x512xbf16, #tpu.memory_space<vmem>>, %arg13: memref<1x1x512xf32, #tpu.memory_space<vmem>>, %arg14: memref<1x512x128xbf16, #tpu.memory_space<vmem>>, %arg15: memref<1x1x128xf32, #tpu.memory_space<vmem>>, %arg16: memref<1x1x128xf32, #tpu.memory_space<vmem>>, %arg17: memref<1x1x128xf32, #tpu.memory_space<vmem>>, %arg18: memref<128x128xbf16, #tpu.memory_space<vmem>>, %arg19: memref<1x128xf32, #tpu.memory_space<vmem>>, %arg20: memref<128x128xbf16, #tpu.memory_space<vmem>>, %arg21: memref<1x128xf32, #tpu.memory_space<vmem>>, %arg22: memref<1x8x128xf32, #tpu.memory_space<vmem>>, %arg23: memref<8x128xf32, #tpu.memory_space<vmem>>) attributes {dimension_semantics = [#tpu.dimension_semantics<parallel>, #tpu.dimension_semantics<arbitrary>], iteration_bounds = array<i64: 2, 2>, scalar_prefetch = 0 : i64, scratch_operands = 1 : i64, tpu.core_type = #tpu.core_type<tc>, window_params = [{transform_indices = @transform_0, window_bounds = array<i64: 1, 8, 128>}, {transform_indices = @transform_1, window_bounds = array<i64: 1, 1, 8>}, {pipeline_mode = #tpu.pipeline_mode<synchronous>, transform_indices = @transform_2, window_bounds = array<i64: 1, 128>}, {pipeline_mode = #tpu.pipeline_mode<synchronous>, transform_indices = @transform_3, window_bounds = array<i64: 1, 128>}, {transform_indices = @transform_4, window_bounds = array<i64: 1, 128, 384>}, {transform_indices = @transform_5, window_bounds = array<i64: 1, 1, 384>}, {transform_indices = @transform_6, window_bounds = array<i64: 1, 128, 128>}, {transform_indices = @transform_7, window_bounds = array<i64: 1, 1, 128>}, {transform_indices = @transform_8, window_bounds = array<i64: 1, 1, 128>}, {transform_indices = @transform_9, window_bounds = array<i64: 1, 1, 128>}, {transform_indices = @transform_10, window_bounds = array<i64: 1, 128, 512>}, {transform_indices = @transform_11, window_bounds = array<i64: 1, 1, 512>}, {transform_indices = @transform_12, window_bounds = array<i64: 1, 512, 128>}, {transform_indices = @transform_13, window_bounds = array<i64: 1, 1, 128>}, {transform_indices = @transform_14, window_bounds = array<i64: 1, 1, 128>}, {transform_indices = @transform_15, window_bounds = array<i64: 1, 1, 128>}, {pipeline_mode = #tpu.pipeline_mode<synchronous>, transform_indices = @transform_16, window_bounds = array<i64: 128, 128>}, {pipeline_mode = #tpu.pipeline_mode<synchronous>, transform_indices = @transform_17, window_bounds = array<i64: 1, 128>}, {pipeline_mode = #tpu.pipeline_mode<synchronous>, transform_indices = @transform_18, window_bounds = array<i64: 128, 128>}, {pipeline_mode = #tpu.pipeline_mode<synchronous>, transform_indices = @transform_19, window_bounds = array<i64: 1, 128>}, {transform_indices = @transform_20, window_bounds = array<i64: 1, 8, 128>}]} {
    %c0_i32 = arith.constant 0 : i32
    %0 = arith.cmpi eq, %arg1, %c0_i32 : i32
    %1 = arith.extui %0 : i1 to i32
    %c0_i32_0 = arith.constant 0 : i32
    %2 = arith.cmpi ne, %1, %c0_i32_0 : i32
    scf.if %2 {
      %c0_82 = arith.constant 0 : index
      %c0_83 = arith.constant 0 : index
      %c0_84 = arith.constant 0 : index
      %204 = vector.load %arg2[%c0_82, %c0_83, %c0_84] : memref<1x8x128xf32, #tpu.memory_space<vmem>>, vector<1x8x128xf32>
      %205 = vector.shape_cast %204 : vector<1x8x128xf32> to vector<8x128xf32>
      %c0_85 = arith.constant 0 : index
      %c0_86 = arith.constant 0 : index
      %206 = vector.load %arg4[%c0_85, %c0_86] : memref<1x128xf32, #tpu.memory_space<vmem>>, vector<1x128xf32>
      %c0_87 = arith.constant 0 : index
      %c0_88 = arith.constant 0 : index
      %207 = vector.load %arg5[%c0_87, %c0_88] : memref<1x128xf32, #tpu.memory_space<vmem>>, vector<1x128xf32>
      %cst_89 = arith.constant dense<0.000000e+00> : vector<8xf32>
      %208 = vector.multi_reduction <add>, %205, %cst_89 [1] : vector<8x128xf32> to vector<8xf32>
      %209 = vector.shape_cast %208 : vector<8xf32> to vector<8x1xf32>
      %cst_90 = arith.constant 1.280000e+02 : f32
      %210 = vector.broadcast %cst_90 : f32 to vector<8x1xf32>
      %211 = arith.divf %209, %210 : vector<8x1xf32>
      %212 = vector.broadcast %211 : vector<8x1xf32> to vector<8x128xf32>
      %213 = arith.subf %205, %212 : vector<8x128xf32>
      %214 = arith.mulf %213, %213 : vector<8x128xf32>
      %cst_91 = arith.constant dense<0.000000e+00> : vector<8xf32>
      %215 = vector.multi_reduction <add>, %214, %cst_91 [1] : vector<8x128xf32> to vector<8xf32>
      %216 = vector.shape_cast %215 : vector<8xf32> to vector<8x1xf32>
      %cst_92 = arith.constant 1.280000e+02 : f32
      %217 = vector.broadcast %cst_92 : f32 to vector<8x1xf32>
      %218 = arith.divf %216, %217 : vector<8x1xf32>
      %219 = vector.broadcast %211 : vector<8x1xf32> to vector<8x128xf32>
      %220 = arith.subf %205, %219 : vector<8x128xf32>
      %cst_93 = arith.constant 9.99999996E-13 : f32
      %221 = vector.broadcast %cst_93 : f32 to vector<8x1xf32>
      %222 = arith.addf %218, %221 : vector<8x1xf32>
      %223 = math.rsqrt %222 : vector<8x1xf32>
      %224 = vector.broadcast %223 : vector<8x1xf32> to vector<8x128xf32>
      %225 = arith.mulf %220, %224 : vector<8x128xf32>
      %226 = vector.broadcast %206 : vector<1x128xf32> to vector<8x128xf32>
      %227 = arith.mulf %225, %226 : vector<8x128xf32>
      %228 = vector.broadcast %207 : vector<1x128xf32> to vector<8x128xf32>
      %229 = arith.addf %227, %228 : vector<8x128xf32>
      %c0_94 = arith.constant 0 : index
      %c0_95 = arith.constant 0 : index
      %230 = vector.load %arg23[%c0_94, %c0_95] : memref<8x128xf32, #tpu.memory_space<vmem>>, vector<8x128xf32>
      tpu.vector_store %arg23[%c0_94, %c0_95], %229 {strides = array<i32>} : memref<8x128xf32, #tpu.memory_space<vmem>>, vector<8x128xf32>,
    } else {
    }
    %c0 = arith.constant 0 : index
    %c0_1 = arith.constant 0 : index
    %3 = vector.load %arg23[%c0, %c0_1] : memref<8x128xf32, #tpu.memory_space<vmem>>, vector<8x128xf32>
    %c0_2 = arith.constant 0 : index
    %c0_3 = arith.constant 0 : index
    %c0_4 = arith.constant 0 : index
    %4 = vector.load %arg3[%c0_2, %c0_3, %c0_4] : memref<1x1x8xf32, #tpu.memory_space<vmem>>, vector<1x1x8xf32>
    %5 = vector.shape_cast %4 : vector<1x1x8xf32> to vector<1x8xf32>
    %6 = arith.truncf %3 : vector<8x128xf32> to vector<8x128xbf16>
    %c0_5 = arith.constant 0 : index
    %c0_6 = arith.constant 0 : index
    %c0_7 = arith.constant 0 : index
    %7 = vector.load %arg6[%c0_5, %c0_6, %c0_7] : memref<1x128x384xbf16, #tpu.memory_space<vmem>>, vector<1x128x384xbf16>
    %8 = vector.shape_cast %7 : vector<1x128x384xbf16> to vector<128x384xbf16>
    %cst = arith.constant dense<0.000000e+00> : vector<8x384xf32>
    %9 = tpu.matmul %6, %8, %cst {dimension_numbers = #tpu.dot_dimension_numbers<[1], [0], [0], [1], [0, 0, 1, 1], [], []>} : vector<8x128xbf16>, vector<128x384xbf16>, vector<8x384xf32> -> vector<8x384xf32>
    %c0_8 = arith.constant 0 : index
    %c0_9 = arith.constant 0 : index
    %c0_10 = arith.constant 0 : index
    %10 = vector.load %arg7[%c0_8, %c0_9, %c0_10] : memref<1x1x384xf32, #tpu.memory_space<vmem>>, vector<1x1x384xf32>
    %11 = vector.shape_cast %10 : vector<1x1x384xf32> to vector<1x384xf32>
    %12 = vector.broadcast %11 : vector<1x384xf32> to vector<8x384xf32>
    %13 = arith.addf %9, %12 : vector<8x384xf32>
    %14 = vector.extract_strided_slice %13 {offsets = [0, 0], sizes = [8, 128], strides = [1, 1]} : vector<8x384xf32> to vector<8x128xf32>
    %cst_11 = arith.constant 0.176776692 : f32
    %15 = vector.broadcast %cst_11 : f32 to vector<8x128xf32>
    %16 = arith.mulf %14, %15 : vector<8x128xf32>
    %17 = arith.truncf %16 : vector<8x128xf32> to vector<8x128xbf16>
    %18 = vector.extract_strided_slice %13 {offsets = [0, 128], sizes = [8, 128], strides = [1, 1]} : vector<8x384xf32> to vector<8x128xf32>
    %19 = arith.truncf %18 : vector<8x128xf32> to vector<8x128xbf16>
    %20 = vector.extract_strided_slice %13 {offsets = [0, 256], sizes = [8, 128], strides = [1, 1]} : vector<8x384xf32> to vector<8x128xf32>
    %21 = arith.truncf %20 : vector<8x128xf32> to vector<8x128xbf16>
    %c0_12 = arith.constant 0 : index
    %c0_13 = arith.constant 0 : index
    %c0_14 = arith.constant 0 : index
    %22 = vector.load %arg8[%c0_12, %c0_13, %c0_14] : memref<1x128x128xbf16, #tpu.memory_space<vmem>>, vector<1x128x128xbf16>
    %23 = vector.shape_cast %22 : vector<1x128x128xbf16> to vector<128x128xbf16>
    %cst_15 = arith.constant 0.000000e+00 : f32
    %24 = vector.broadcast %cst_15 : f32 to vector<8x128xf32>
    %25 = vector.extract_strided_slice %17 {offsets = [0, 0], sizes = [8, 32], strides = [1, 1]} : vector<8x128xbf16> to vector<8x32xbf16>
    %26 = vector.extract_strided_slice %19 {offsets = [0, 0], sizes = [8, 32], strides = [1, 1]} : vector<8x128xbf16> to vector<8x32xbf16>
    %27 = vector.extract_strided_slice %21 {offsets = [0, 0], sizes = [8, 32], strides = [1, 1]} : vector<8x128xbf16> to vector<8x32xbf16>
    %cst_16 = arith.constant dense<0.000000e+00> : vector<8x8xf32>
    %28 = tpu.matmul %25, %26, %cst_16 {dimension_numbers = #tpu.dot_dimension_numbers<[1], [1], [0], [0], [0, 0, 1, 0], [], []>} : vector<8x32xbf16>, vector<8x32xbf16>, vector<8x8xf32> -> vector<8x8xf32>
    %29 = vector.broadcast %5 : vector<1x8xf32> to vector<8x8xf32>
    %30 = arith.addf %28, %29 : vector<8x8xf32>
    %cst_17 = arith.constant dense<0xFF800000> : vector<8xf32>
    %31 = vector.multi_reduction <maximumf>, %30, %cst_17 [1] : vector<8x8xf32> to vector<8xf32>
    %32 = vector.shape_cast %31 : vector<8xf32> to vector<8x1xf32>
    %33 = vector.broadcast %32 : vector<8x1xf32> to vector<8x8xf32>
    %34 = arith.subf %30, %33 : vector<8x8xf32>
    %35 = math.exp %34 : vector<8x8xf32>
    %cst_18 = arith.constant dense<0.000000e+00> : vector<8xf32>
    %36 = vector.multi_reduction <add>, %35, %cst_18 [1] : vector<8x8xf32> to vector<8xf32>
    %37 = vector.shape_cast %36 : vector<8xf32> to vector<8x1xf32>
    %38 = tpu.reciprocal %37 {approx = true} : vector<8x1xf32> -> vector<8x1xf32>
    %39 = vector.broadcast %38 : vector<8x1xf32> to vector<8x8xf32>
    %40 = arith.mulf %35, %39 : vector<8x8xf32>
    %41 = arith.truncf %40 : vector<8x8xf32> to vector<8x8xbf16>
    %cst_19 = arith.constant dense<0.000000e+00> : vector<8x32xf32>
    %42 = tpu.matmul %41, %27, %cst_19 {dimension_numbers = #tpu.dot_dimension_numbers<[1], [0], [0], [1], [0, 0, 1, 1], [], []>} : vector<8x8xbf16>, vector<8x32xbf16>, vector<8x32xf32> -> vector<8x32xf32>
    %43 = arith.truncf %42 : vector<8x32xf32> to vector<8x32xbf16>
    %44 = vector.extract_strided_slice %23 {offsets = [0, 0], sizes = [32, 128], strides = [1, 1]} : vector<128x128xbf16> to vector<32x128xbf16>
    %cst_20 = arith.constant dense<0.000000e+00> : vector<8x128xf32>
    %45 = tpu.matmul %43, %44, %cst_20 {dimension_numbers = #tpu.dot_dimension_numbers<[1], [0], [0], [1], [0, 0, 1, 1], [], []>} : vector<8x32xbf16>, vector<32x128xbf16>, vector<8x128xf32> -> vector<8x128xf32>
    %46 = arith.addf %24, %45 : vector<8x128xf32>
    %47 = vector.extract_strided_slice %17 {offsets = [0, 32], sizes = [8, 32], strides = [1, 1]} : vector<8x128xbf16> to vector<8x32xbf16>
    %48 = vector.extract_strided_slice %19 {offsets = [0, 32], sizes = [8, 32], strides = [1, 1]} : vector<8x128xbf16> to vector<8x32xbf16>
    %49 = vector.extract_strided_slice %21 {offsets = [0, 32], sizes = [8, 32], strides = [1, 1]} : vector<8x128xbf16> to vector<8x32xbf16>
    %cst_21 = arith.constant dense<0.000000e+00> : vector<8x8xf32>
    %50 = tpu.matmul %47, %48, %cst_21 {dimension_numbers = #tpu.dot_dimension_numbers<[1], [1], [0], [0], [0, 0, 1, 0], [], []>} : vector<8x32xbf16>, vector<8x32xbf16>, vector<8x8xf32> -> vector<8x8xf32>
    %51 = vector.broadcast %5 : vector<1x8xf32> to vector<8x8xf32>
    %52 = arith.addf %50, %51 : vector<8x8xf32>
    %cst_22 = arith.constant dense<0xFF800000> : vector<8xf32>
    %53 = vector.multi_reduction <maximumf>, %52, %cst_22 [1] : vector<8x8xf32> to vector<8xf32>
    %54 = vector.shape_cast %53 : vector<8xf32> to vector<8x1xf32>
    %55 = vector.broadcast %54 : vector<8x1xf32> to vector<8x8xf32>
    %56 = arith.subf %52, %55 : vector<8x8xf32>
    %57 = math.exp %56 : vector<8x8xf32>
    %cst_23 = arith.constant dense<0.000000e+00> : vector<8xf32>
    %58 = vector.multi_reduction <add>, %57, %cst_23 [1] : vector<8x8xf32> to vector<8xf32>
    %59 = vector.shape_cast %58 : vector<8xf32> to vector<8x1xf32>
    %60 = tpu.reciprocal %59 {approx = true} : vector<8x1xf32> -> vector<8x1xf32>
    %61 = vector.broadcast %60 : vector<8x1xf32> to vector<8x8xf32>
    %62 = arith.mulf %57, %61 : vector<8x8xf32>
    %63 = arith.truncf %62 : vector<8x8xf32> to vector<8x8xbf16>
    %cst_24 = arith.constant dense<0.000000e+00> : vector<8x32xf32>
    %64 = tpu.matmul %63, %49, %cst_24 {dimension_numbers = #tpu.dot_dimension_numbers<[1], [0], [0], [1], [0, 0, 1, 1], [], []>} : vector<8x8xbf16>, vector<8x32xbf16>, vector<8x32xf32> -> vector<8x32xf32>
    %65 = arith.truncf %64 : vector<8x32xf32> to vector<8x32xbf16>
    %66 = vector.extract_strided_slice %23 {offsets = [32, 0], sizes = [32, 128], strides = [1, 1]} : vector<128x128xbf16> to vector<32x128xbf16>
    %cst_25 = arith.constant dense<0.000000e+00> : vector<8x128xf32>
    %67 = tpu.matmul %65, %66, %cst_25 {dimension_numbers = #tpu.dot_dimension_numbers<[1], [0], [0], [1], [0, 0, 1, 1], [], []>} : vector<8x32xbf16>, vector<32x128xbf16>, vector<8x128xf32> -> vector<8x128xf32>
    %68 = arith.addf %46, %67 : vector<8x128xf32>
    %69 = vector.extract_strided_slice %17 {offsets = [0, 64], sizes = [8, 32], strides = [1, 1]} : vector<8x128xbf16> to vector<8x32xbf16>
    %70 = vector.extract_strided_slice %19 {offsets = [0, 64], sizes = [8, 32], strides = [1, 1]} : vector<8x128xbf16> to vector<8x32xbf16>
    %71 = vector.extract_strided_slice %21 {offsets = [0, 64], sizes = [8, 32], strides = [1, 1]} : vector<8x128xbf16> to vector<8x32xbf16>
    %cst_26 = arith.constant dense<0.000000e+00> : vector<8x8xf32>
    %72 = tpu.matmul %69, %70, %cst_26 {dimension_numbers = #tpu.dot_dimension_numbers<[1], [1], [0], [0], [0, 0, 1, 0], [], []>} : vector<8x32xbf16>, vector<8x32xbf16>, vector<8x8xf32> -> vector<8x8xf32>
    %73 = vector.broadcast %5 : vector<1x8xf32> to vector<8x8xf32>
    %74 = arith.addf %72, %73 : vector<8x8xf32>
    %cst_27 = arith.constant dense<0xFF800000> : vector<8xf32>
    %75 = vector.multi_reduction <maximumf>, %74, %cst_27 [1] : vector<8x8xf32> to vector<8xf32>
    %76 = vector.shape_cast %75 : vector<8xf32> to vector<8x1xf32>
    %77 = vector.broadcast %76 : vector<8x1xf32> to vector<8x8xf32>
    %78 = arith.subf %74, %77 : vector<8x8xf32>
    %79 = math.exp %78 : vector<8x8xf32>
    %cst_28 = arith.constant dense<0.000000e+00> : vector<8xf32>
    %80 = vector.multi_reduction <add>, %79, %cst_28 [1] : vector<8x8xf32> to vector<8xf32>
    %81 = vector.shape_cast %80 : vector<8xf32> to vector<8x1xf32>
    %82 = tpu.reciprocal %81 {approx = true} : vector<8x1xf32> -> vector<8x1xf32>
    %83 = vector.broadcast %82 : vector<8x1xf32> to vector<8x8xf32>
    %84 = arith.mulf %79, %83 : vector<8x8xf32>
    %85 = arith.truncf %84 : vector<8x8xf32> to vector<8x8xbf16>
    %cst_29 = arith.constant dense<0.000000e+00> : vector<8x32xf32>
    %86 = tpu.matmul %85, %71, %cst_29 {dimension_numbers = #tpu.dot_dimension_numbers<[1], [0], [0], [1], [0, 0, 1, 1], [], []>} : vector<8x8xbf16>, vector<8x32xbf16>, vector<8x32xf32> -> vector<8x32xf32>
    %87 = arith.truncf %86 : vector<8x32xf32> to vector<8x32xbf16>
    %88 = vector.extract_strided_slice %23 {offsets = [64, 0], sizes = [32, 128], strides = [1, 1]} : vector<128x128xbf16> to vector<32x128xbf16>
    %cst_30 = arith.constant dense<0.000000e+00> : vector<8x128xf32>
    %89 = tpu.matmul %87, %88, %cst_30 {dimension_numbers = #tpu.dot_dimension_numbers<[1], [0], [0], [1], [0, 0, 1, 1], [], []>} : vector<8x32xbf16>, vector<32x128xbf16>, vector<8x128xf32> -> vector<8x128xf32>
    %90 = arith.addf %68, %89 : vector<8x128xf32>
    %91 = vector.extract_strided_slice %17 {offsets = [0, 96], sizes = [8, 32], strides = [1, 1]} : vector<8x128xbf16> to vector<8x32xbf16>
    %92 = vector.extract_strided_slice %19 {offsets = [0, 96], sizes = [8, 32], strides = [1, 1]} : vector<8x128xbf16> to vector<8x32xbf16>
    %93 = vector.extract_strided_slice %21 {offsets = [0, 96], sizes = [8, 32], strides = [1, 1]} : vector<8x128xbf16> to vector<8x32xbf16>
    %cst_31 = arith.constant dense<0.000000e+00> : vector<8x8xf32>
    %94 = tpu.matmul %91, %92, %cst_31 {dimension_numbers = #tpu.dot_dimension_numbers<[1], [1], [0], [0], [0, 0, 1, 0], [], []>} : vector<8x32xbf16>, vector<8x32xbf16>, vector<8x8xf32> -> vector<8x8xf32>
    %95 = vector.broadcast %5 : vector<1x8xf32> to vector<8x8xf32>
    %96 = arith.addf %94, %95 : vector<8x8xf32>
    %cst_32 = arith.constant dense<0xFF800000> : vector<8xf32>
    %97 = vector.multi_reduction <maximumf>, %96, %cst_32 [1] : vector<8x8xf32> to vector<8xf32>
    %98 = vector.shape_cast %97 : vector<8xf32> to vector<8x1xf32>
    %99 = vector.broadcast %98 : vector<8x1xf32> to vector<8x8xf32>
    %100 = arith.subf %96, %99 : vector<8x8xf32>
    %101 = math.exp %100 : vector<8x8xf32>
    %cst_33 = arith.constant dense<0.000000e+00> : vector<8xf32>
    %102 = vector.multi_reduction <add>, %101, %cst_33 [1] : vector<8x8xf32> to vector<8xf32>
    %103 = vector.shape_cast %102 : vector<8xf32> to vector<8x1xf32>
    %104 = tpu.reciprocal %103 {approx = true} : vector<8x1xf32> -> vector<8x1xf32>
    %105 = vector.broadcast %104 : vector<8x1xf32> to vector<8x8xf32>
    %106 = arith.mulf %101, %105 : vector<8x8xf32>
    %107 = arith.truncf %106 : vector<8x8xf32> to vector<8x8xbf16>
    %cst_34 = arith.constant dense<0.000000e+00> : vector<8x32xf32>
    %108 = tpu.matmul %107, %93, %cst_34 {dimension_numbers = #tpu.dot_dimension_numbers<[1], [0], [0], [1], [0, 0, 1, 1], [], []>} : vector<8x8xbf16>, vector<8x32xbf16>, vector<8x32xf32> -> vector<8x32xf32>
    %109 = arith.truncf %108 : vector<8x32xf32> to vector<8x32xbf16>
    %110 = vector.extract_strided_slice %23 {offsets = [96, 0], sizes = [32, 128], strides = [1, 1]} : vector<128x128xbf16> to vector<32x128xbf16>
    %cst_35 = arith.constant dense<0.000000e+00> : vector<8x128xf32>
    %111 = tpu.matmul %109, %110, %cst_35 {dimension_numbers = #tpu.dot_dimension_numbers<[1], [0], [0], [1], [0, 0, 1, 1], [], []>} : vector<8x32xbf16>, vector<32x128xbf16>, vector<8x128xf32> -> vector<8x128xf32>
    %112 = arith.addf %90, %111 : vector<8x128xf32>
    %c0_36 = arith.constant 0 : index
    %c0_37 = arith.constant 0 : index
    %c0_38 = arith.constant 0 : index
    %113 = vector.load %arg9[%c0_36, %c0_37, %c0_38] : memref<1x1x128xf32, #tpu.memory_space<vmem>>, vector<1x1x128xf32>
    %114 = vector.shape_cast %113 : vector<1x1x128xf32> to vector<1x128xf32>
    %115 = vector.broadcast %114 : vector<1x128xf32> to vector<8x128xf32>
    %116 = arith.addf %112, %115 : vector<8x128xf32>
    %117 = arith.addf %116, %3 : vector<8x128xf32>
    %c0_39 = arith.constant 0 : index
    %c0_40 = arith.constant 0 : index
    %c0_41 = arith.constant 0 : index
    %118 = vector.load %arg10[%c0_39, %c0_40, %c0_41] : memref<1x1x128xf32, #tpu.memory_space<vmem>>, vector<1x1x128xf32>
    %119 = vector.shape_cast %118 : vector<1x1x128xf32> to vector<1x128xf32>
    %c0_42 = arith.constant 0 : index
    %c0_43 = arith.constant 0 : index
    %c0_44 = arith.constant 0 : index
    %120 = vector.load %arg11[%c0_42, %c0_43, %c0_44] : memref<1x1x128xf32, #tpu.memory_space<vmem>>, vector<1x1x128xf32>
    %121 = vector.shape_cast %120 : vector<1x1x128xf32> to vector<1x128xf32>
    %cst_45 = arith.constant dense<0.000000e+00> : vector<8xf32>
    %122 = vector.multi_reduction <add>, %117, %cst_45 [1] : vector<8x128xf32> to vector<8xf32>
    %123 = vector.shape_cast %122 : vector<8xf32> to vector<8x1xf32>
    %cst_46 = arith.constant 1.280000e+02 : f32
    %124 = vector.broadcast %cst_46 : f32 to vector<8x1xf32>
    %125 = arith.divf %123, %124 : vector<8x1xf32>
    %126 = vector.broadcast %125 : vector<8x1xf32> to vector<8x128xf32>
    %127 = arith.subf %117, %126 : vector<8x128xf32>
    %128 = arith.mulf %127, %127 : vector<8x128xf32>
    %cst_47 = arith.constant dense<0.000000e+00> : vector<8xf32>
    %129 = vector.multi_reduction <add>, %128, %cst_47 [1] : vector<8x128xf32> to vector<8xf32>
    %130 = vector.shape_cast %129 : vector<8xf32> to vector<8x1xf32>
    %cst_48 = arith.constant 1.280000e+02 : f32
    %131 = vector.broadcast %cst_48 : f32 to vector<8x1xf32>
    %132 = arith.divf %130, %131 : vector<8x1xf32>
    %133 = vector.broadcast %125 : vector<8x1xf32> to vector<8x128xf32>
    %134 = arith.subf %117, %133 : vector<8x128xf32>
    %cst_49 = arith.constant 9.99999996E-13 : f32
    %135 = vector.broadcast %cst_49 : f32 to vector<8x1xf32>
    %136 = arith.addf %132, %135 : vector<8x1xf32>
    %137 = math.rsqrt %136 : vector<8x1xf32>
    %138 = vector.broadcast %137 : vector<8x1xf32> to vector<8x128xf32>
    %139 = arith.mulf %134, %138 : vector<8x128xf32>
    %140 = vector.broadcast %119 : vector<1x128xf32> to vector<8x128xf32>
    %141 = arith.mulf %139, %140 : vector<8x128xf32>
    %142 = vector.broadcast %121 : vector<1x128xf32> to vector<8x128xf32>
    %143 = arith.addf %141, %142 : vector<8x128xf32>
    %144 = arith.truncf %143 : vector<8x128xf32> to vector<8x128xbf16>
    %c0_50 = arith.constant 0 : index
    %c0_51 = arith.constant 0 : index
    %c0_52 = arith.constant 0 : index
    %145 = vector.load %arg12[%c0_50, %c0_51, %c0_52] : memref<1x128x512xbf16, #tpu.memory_space<vmem>>, vector<1x128x512xbf16>
    %146 = vector.shape_cast %145 : vector<1x128x512xbf16> to vector<128x512xbf16>
    %cst_53 = arith.constant dense<0.000000e+00> : vector<8x512xf32>
    %147 = tpu.matmul %144, %146, %cst_53 {dimension_numbers = #tpu.dot_dimension_numbers<[1], [0], [0], [1], [0, 0, 1, 1], [], []>} : vector<8x128xbf16>, vector<128x512xbf16>, vector<8x512xf32> -> vector<8x512xf32>
    %c0_54 = arith.constant 0 : index
    %c0_55 = arith.constant 0 : index
    %c0_56 = arith.constant 0 : index
    %148 = vector.load %arg13[%c0_54, %c0_55, %c0_56] : memref<1x1x512xf32, #tpu.memory_space<vmem>>, vector<1x1x512xf32>
    %149 = vector.shape_cast %148 : vector<1x1x512xf32> to vector<1x512xf32>
    %150 = vector.broadcast %149 : vector<1x512xf32> to vector<8x512xf32>
    %151 = arith.addf %147, %150 : vector<8x512xf32>
    %cst_57 = arith.constant 5.000000e-01 : f32
    %152 = vector.broadcast %cst_57 : f32 to vector<8x512xf32>
    %153 = arith.mulf %152, %151 : vector<8x512xf32>
    %cst_58 = arith.constant 4.471500e-02 : f32
    %154 = vector.broadcast %cst_58 : f32 to vector<8x512xf32>
    %155 = arith.mulf %154, %151 : vector<8x512xf32>
    %156 = arith.mulf %155, %151 : vector<8x512xf32>
    %157 = arith.mulf %156, %151 : vector<8x512xf32>
    %158 = arith.addf %151, %157 : vector<8x512xf32>
    %cst_59 = arith.constant 0.797884583 : f32
    %159 = vector.broadcast %cst_59 : f32 to vector<8x512xf32>
    %160 = arith.mulf %159, %158 : vector<8x512xf32>
    %161 = math.tanh %160 : vector<8x512xf32>
    %cst_60 = arith.constant 1.000000e+00 : f32
    %162 = vector.broadcast %cst_60 : f32 to vector<8x512xf32>
    %163 = arith.addf %162, %161 : vector<8x512xf32>
    %164 = arith.mulf %153, %163 : vector<8x512xf32>
    %165 = arith.truncf %164 : vector<8x512xf32> to vector<8x512xbf16>
    %c0_61 = arith.constant 0 : index
    %c0_62 = arith.constant 0 : index
    %c0_63 = arith.constant 0 : index
    %166 = vector.load %arg14[%c0_61, %c0_62, %c0_63] : memref<1x512x128xbf16, #tpu.memory_space<vmem>>, vector<1x512x128xbf16>
    %167 = vector.shape_cast %166 : vector<1x512x128xbf16> to vector<512x128xbf16>
    %cst_64 = arith.constant dense<0.000000e+00> : vector<8x128xf32>
    %168 = tpu.matmul %165, %167, %cst_64 {dimension_numbers = #tpu.dot_dimension_numbers<[1], [0], [0], [1], [0, 0, 1, 1], [], []>} : vector<8x512xbf16>, vector<512x128xbf16>, vector<8x128xf32> -> vector<8x128xf32>
    %c0_65 = arith.constant 0 : index
    %c0_66 = arith.constant 0 : index
    %c0_67 = arith.constant 0 : index
    %169 = vector.load %arg15[%c0_65, %c0_66, %c0_67] : memref<1x1x128xf32, #tpu.memory_space<vmem>>, vector<1x1x128xf32>
    %170 = vector.shape_cast %169 : vector<1x1x128xf32> to vector<1x128xf32>
    %171 = vector.broadcast %170 : vector<1x128xf32> to vector<8x128xf32>
    %172 = arith.addf %168, %171 : vector<8x128xf32>
    %173 = arith.addf %172, %143 : vector<8x128xf32>
    %c0_68 = arith.constant 0 : index
    %c0_69 = arith.constant 0 : index
    %c0_70 = arith.constant 0 : index
    %174 = vector.load %arg16[%c0_68, %c0_69, %c0_70] : memref<1x1x128xf32, #tpu.memory_space<vmem>>, vector<1x1x128xf32>
    %175 = vector.shape_cast %174 : vector<1x1x128xf32> to vector<1x128xf32>
    %c0_71 = arith.constant 0 : index
    %c0_72 = arith.constant 0 : index
    %c0_73 = arith.constant 0 : index
    %176 = vector.load %arg17[%c0_71, %c0_72, %c0_73] : memref<1x1x128xf32, #tpu.memory_space<vmem>>, vector<1x1x128xf32>
    %177 = vector.shape_cast %176 : vector<1x1x128xf32> to vector<1x128xf32>
    %cst_74 = arith.constant dense<0.000000e+00> : vector<8xf32>
    %178 = vector.multi_reduction <add>, %173, %cst_74 [1] : vector<8x128xf32> to vector<8xf32>
    %179 = vector.shape_cast %178 : vector<8xf32> to vector<8x1xf32>
    %cst_75 = arith.constant 1.280000e+02 : f32
    %180 = vector.broadcast %cst_75 : f32 to vector<8x1xf32>
    %181 = arith.divf %179, %180 : vector<8x1xf32>
    %182 = vector.broadcast %181 : vector<8x1xf32> to vector<8x128xf32>
    %183 = arith.subf %173, %182 : vector<8x128xf32>
    %184 = arith.mulf %183, %183 : vector<8x128xf32>
    %cst_76 = arith.constant dense<0.000000e+00> : vector<8xf32>
    %185 = vector.multi_reduction <add>, %184, %cst_76 [1] : vector<8x128xf32> to vector<8xf32>
    %186 = vector.shape_cast %185 : vector<8xf32> to vector<8x1xf32>
    %cst_77 = arith.constant 1.280000e+02 : f32
    %187 = vector.broadcast %cst_77 : f32 to vector<8x1xf32>
    %188 = arith.divf %186, %187 : vector<8x1xf32>
    %189 = vector.broadcast %181 : vector<8x1xf32> to vector<8x128xf32>
    %190 = arith.subf %173, %189 : vector<8x128xf32>
    %cst_78 = arith.constant 9.99999996E-13 : f32
    %191 = vector.broadcast %cst_78 : f32 to vector<8x1xf32>
    %192 = arith.addf %188, %191 : vector<8x1xf32>
    %193 = math.rsqrt %192 : vector<8x1xf32>
    %194 = vector.broadcast %193 : vector<8x1xf32> to vector<8x128xf32>
    %195 = arith.mulf %190, %194 : vector<8x128xf32>
    %196 = vector.broadcast %175 : vector<1x128xf32> to vector<8x128xf32>
    %197 = arith.mulf %195, %196 : vector<8x128xf32>
    %198 = vector.broadcast %177 : vector<1x128xf32> to vector<8x128xf32>
    %199 = arith.addf %197, %198 : vector<8x128xf32>
    %c0_79 = arith.constant 0 : index
    %c0_80 = arith.constant 0 : index
    %200 = vector.load %arg23[%c0_79, %c0_80] : memref<8x128xf32, #tpu.memory_space<vmem>>, vector<8x128xf32>
    tpu.vector_store %arg23[%c0_79, %c0_80], %199 {strides = array<i32>} : memref<8x128xf32, #tpu.memory_space<vmem>>, vector<8x128xf32>,
    %c1_i32 = arith.constant 1 : i32
    %201 = arith.cmpi eq, %arg1, %c1_i32 : i32
    %202 = arith.extui %201 : i1 to i32
    %c0_i32_81 = arith.constant 0 : i32
    %203 = arith.cmpi ne, %202, %c0_i32_81 : i32
    scf.if %203 {
      %204 = arith.truncf %199 : vector<8x128xf32> to vector<8x128xbf16>
      %c0_82 = arith.constant 0 : index
      %c0_83 = arith.constant 0 : index
      %205 = vector.load %arg18[%c0_82, %c0_83] : memref<128x128xbf16, #tpu.memory_space<vmem>>, vector<128x128xbf16>
      %cst_84 = arith.constant dense<0.000000e+00> : vector<8x128xf32>
      %206 = tpu.matmul %204, %205, %cst_84 {dimension_numbers = #tpu.dot_dimension_numbers<[1], [0], [0], [1], [0, 0, 1, 1], [], []>} : vector<8x128xbf16>, vector<128x128xbf16>, vector<8x128xf32> -> vector<8x128xf32>
      %c0_85 = arith.constant 0 : index
      %c0_86 = arith.constant 0 : index
      %207 = vector.load %arg19[%c0_85, %c0_86] : memref<1x128xf32, #tpu.memory_space<vmem>>, vector<1x128xf32>
      %208 = vector.broadcast %207 : vector<1x128xf32> to vector<8x128xf32>
      %209 = arith.addf %206, %208 : vector<8x128xf32>
      %cst_87 = arith.constant 0.000000e+00 : f32
      %210 = vector.broadcast %cst_87 : f32 to vector<8x128xf32>
      %211 = arith.maximumf %209, %210 : vector<8x128xf32>
      %212 = arith.truncf %211 : vector<8x128xf32> to vector<8x128xbf16>
      %c0_88 = arith.constant 0 : index
      %c0_89 = arith.constant 0 : index
      %213 = vector.load %arg20[%c0_88, %c0_89] : memref<128x128xbf16, #tpu.memory_space<vmem>>, vector<128x128xbf16>
      %cst_90 = arith.constant dense<0.000000e+00> : vector<8x128xf32>
      %214 = tpu.matmul %212, %213, %cst_90 {dimension_numbers = #tpu.dot_dimension_numbers<[1], [0], [0], [1], [0, 0, 1, 1], [], []>} : vector<8x128xbf16>, vector<128x128xbf16>, vector<8x128xf32> -> vector<8x128xf32>
      %c0_91 = arith.constant 0 : index
      %c0_92 = arith.constant 0 : index
      %215 = vector.load %arg21[%c0_91, %c0_92] : memref<1x128xf32, #tpu.memory_space<vmem>>, vector<1x128xf32>
      %216 = vector.broadcast %215 : vector<1x128xf32> to vector<8x128xf32>
      %217 = arith.addf %214, %216 : vector<8x128xf32>
      %c0_93 = arith.constant 0 : index
      %c0_94 = arith.constant 0 : index
      %c0_95 = arith.constant 0 : index
      %218 = vector.load %arg22[%c0_93, %c0_94, %c0_95] : memref<1x8x128xf32, #tpu.memory_space<vmem>>, vector<1x8x128xf32>
      %219 = vector.shape_cast %218 : vector<1x8x128xf32> to vector<8x128xf32>
      %220 = vector.shape_cast %217 : vector<8x128xf32> to vector<1x8x128xf32>
      tpu.vector_store %arg22[%c0_93, %c0_94, %c0_95], %220 {strides = array<i32>} : memref<1x8x128xf32, #tpu.memory_space<vmem>>, vector<1x8x128xf32>,
    } else {
    }
    return
  }
  func.func @transform_0(%arg0: i32, %arg1: i32) -> (i32, i32, i32) {
    %c0_i32 = arith.constant 0 : i32
    %c0_i32_0 = arith.constant 0 : i32
    %c0_i32_1 = arith.constant 0 : i32
    return %arg0, %c0_i32, %c0_i32_0 : i32, i32, i32
  }
  func.func @transform_1(%arg0: i32, %arg1: i32) -> (i32, i32, i32) {
    %c0_i32 = arith.constant 0 : i32
    %c0_i32_0 = arith.constant 0 : i32
    %c0_i32_1 = arith.constant 0 : i32
    return %arg0, %c0_i32, %c0_i32_0 : i32, i32, i32
  }
  func.func @transform_2(%arg0: i32, %arg1: i32) -> (i32, i32) {
    %c0_i32 = arith.constant 0 : i32
    %c0_i32_0 = arith.constant 0 : i32
    %c0_i32_1 = arith.constant 0 : i32
    return %c0_i32, %c0_i32_0 : i32, i32
  }
  func.func @transform_3(%arg0: i32, %arg1: i32) -> (i32, i32) {
    %c0_i32 = arith.constant 0 : i32
    %c0_i32_0 = arith.constant 0 : i32
    %c0_i32_1 = arith.constant 0 : i32
    return %c0_i32, %c0_i32_0 : i32, i32
  }
  func.func @transform_4(%arg0: i32, %arg1: i32) -> (i32, i32, i32) {
    %c0_i32 = arith.constant 0 : i32
    %c0_i32_0 = arith.constant 0 : i32
    %c0_i32_1 = arith.constant 0 : i32
    return %arg1, %c0_i32, %c0_i32_0 : i32, i32, i32
  }
  func.func @transform_5(%arg0: i32, %arg1: i32) -> (i32, i32, i32) {
    %c0_i32 = arith.constant 0 : i32
    %c0_i32_0 = arith.constant 0 : i32
    %c0_i32_1 = arith.constant 0 : i32
    return %arg1, %c0_i32, %c0_i32_0 : i32, i32, i32
  }
  func.func @transform_6(%arg0: i32, %arg1: i32) -> (i32, i32, i32) {
    %c0_i32 = arith.constant 0 : i32
    %c0_i32_0 = arith.constant 0 : i32
    %c0_i32_1 = arith.constant 0 : i32
    return %arg1, %c0_i32, %c0_i32_0 : i32, i32, i32
  }
  func.func @transform_7(%arg0: i32, %arg1: i32) -> (i32, i32, i32) {
    %c0_i32 = arith.constant 0 : i32
    %c0_i32_0 = arith.constant 0 : i32
    %c0_i32_1 = arith.constant 0 : i32
    return %arg1, %c0_i32, %c0_i32_0 : i32, i32, i32
  }
  func.func @transform_8(%arg0: i32, %arg1: i32) -> (i32, i32, i32) {
    %c0_i32 = arith.constant 0 : i32
    %c0_i32_0 = arith.constant 0 : i32
    %c0_i32_1 = arith.constant 0 : i32
    return %arg1, %c0_i32, %c0_i32_0 : i32, i32, i32
  }
  func.func @transform_9(%arg0: i32, %arg1: i32) -> (i32, i32, i32) {
    %c0_i32 = arith.constant 0 : i32
    %c0_i32_0 = arith.constant 0 : i32
    %c0_i32_1 = arith.constant 0 : i32
    return %arg1, %c0_i32, %c0_i32_0 : i32, i32, i32
  }
  func.func @transform_10(%arg0: i32, %arg1: i32) -> (i32, i32, i32) {
    %c0_i32 = arith.constant 0 : i32
    %c0_i32_0 = arith.constant 0 : i32
    %c0_i32_1 = arith.constant 0 : i32
    return %arg1, %c0_i32, %c0_i32_0 : i32, i32, i32
  }
  func.func @transform_11(%arg0: i32, %arg1: i32) -> (i32, i32, i32) {
    %c0_i32 = arith.constant 0 : i32
    %c0_i32_0 = arith.constant 0 : i32
    %c0_i32_1 = arith.constant 0 : i32
    return %arg1, %c0_i32, %c0_i32_0 : i32, i32, i32
  }
  func.func @transform_12(%arg0: i32, %arg1: i32) -> (i32, i32, i32) {
    %c0_i32 = arith.constant 0 : i32
    %c0_i32_0 = arith.constant 0 : i32
    %c0_i32_1 = arith.constant 0 : i32
    return %arg1, %c0_i32, %c0_i32_0 : i32, i32, i32
  }
  func.func @transform_13(%arg0: i32, %arg1: i32) -> (i32, i32, i32) {
    %c0_i32 = arith.constant 0 : i32
    %c0_i32_0 = arith.constant 0 : i32
    %c0_i32_1 = arith.constant 0 : i32
    return %arg1, %c0_i32, %c0_i32_0 : i32, i32, i32
  }
  func.func @transform_14(%arg0: i32, %arg1: i32) -> (i32, i32, i32) {
    %c0_i32 = arith.constant 0 : i32
    %c0_i32_0 = arith.constant 0 : i32
    %c0_i32_1 = arith.constant 0 : i32
    return %arg1, %c0_i32, %c0_i32_0 : i32, i32, i32
  }
  func.func @transform_15(%arg0: i32, %arg1: i32) -> (i32, i32, i32) {
    %c0_i32 = arith.constant 0 : i32
    %c0_i32_0 = arith.constant 0 : i32
    %c0_i32_1 = arith.constant 0 : i32
    return %arg1, %c0_i32, %c0_i32_0 : i32, i32, i32
  }
  func.func @transform_16(%arg0: i32, %arg1: i32) -> (i32, i32) {
    %c0_i32 = arith.constant 0 : i32
    %c0_i32_0 = arith.constant 0 : i32
    %c0_i32_1 = arith.constant 0 : i32
    return %c0_i32, %c0_i32_0 : i32, i32
  }
  func.func @transform_17(%arg0: i32, %arg1: i32) -> (i32, i32) {
    %c0_i32 = arith.constant 0 : i32
    %c0_i32_0 = arith.constant 0 : i32
    %c0_i32_1 = arith.constant 0 : i32
    return %c0_i32, %c0_i32_0 : i32, i32
  }
  func.func @transform_18(%arg0: i32, %arg1: i32) -> (i32, i32) {
    %c0_i32 = arith.constant 0 : i32
    %c0_i32_0 = arith.constant 0 : i32
    %c0_i32_1 = arith.constant 0 : i32
    return %c0_i32, %c0_i32_0 : i32, i32
  }
  func.func @transform_19(%arg0: i32, %arg1: i32) -> (i32, i32) {
    %c0_i32 = arith.constant 0 : i32
    %c0_i32_0 = arith.constant 0 : i32
    %c0_i32_1 = arith.constant 0 : i32
    return %c0_i32, %c0_i32_0 : i32, i32
  }
  func.func @transform_20(%arg0: i32, %arg1: i32) -> (i32, i32, i32) {
    %c0_i32 = arith.constant 0 : i32
    %c0_i32_0 = arith.constant 0 : i32
    %c0_i32_1 = arith.constant 0 : i32
    return %arg0, %c0_i32, %c0_i32_0 : i32, i32, i32
  }
}

</mosaic_0001>

<llo_original>
// kernel: tpu_custom_call.1
$region0: #{tpu_custom_call.1}
  #allocation0 [shape = 'u32[]', space=smem, size = 0x4, offset = 0x4, fixed_abs, tag = 'smem constant byte address 0x4 - core index']
  #allocation1 [shape = 'u32[144,128]{1,0:T(1,128)}', space=vmem, size = 0x12000, scoped, tag = 'internal scratch']
  #allocation2 [shape = 'f32[8,128]{1,0:T(8,128)}', space=vmem, size = 0x1000, scoped, tag = 'scratch operand']
  %s0 = inlined_call_operand.hbm [shape: f32[2,8,128], index: 0, kind: input, shape index: {}]
  %s1 = inlined_call_operand.vmem [shape: f32[2,1,8], index: 1, kind: input, shape index: {}]
  %s2 = inlined_call_operand.hbm [shape: f32[1,128], index: 2, kind: input, shape index: {}]
  %s3 = inlined_call_operand.hbm [shape: f32[1,128], index: 3, kind: input, shape index: {}]
  %s4 = inlined_call_operand.hbm [shape: bf16[2,128,384], index: 4, kind: input, shape index: {}]
  %s5 = inlined_call_operand.hbm [shape: f32[2,1,384], index: 5, kind: input, shape index: {}]
  %s6 = inlined_call_operand.hbm [shape: bf16[2,128,128], index: 6, kind: input, shape index: {}]
  %s7 = inlined_call_operand.vmem [shape: f32[2,1,128], index: 7, kind: input, shape index: {}]
  %s8 = inlined_call_operand.hbm [shape: f32[2,1,128], index: 8, kind: input, shape index: {}]
  %s9 = inlined_call_operand.hbm [shape: f32[2,1,128], index: 9, kind: input, shape index: {}]
  %s10 = inlined_call_operand.hbm [shape: bf16[2,128,512], index: 10, kind: input, shape index: {}]
  %s11 = inlined_call_operand.hbm [shape: f32[2,1,512], index: 11, kind: input, shape index: {}]
  %s12 = inlined_call_operand.hbm [shape: bf16[2,512,128], index: 12, kind: input, shape index: {}]
  %s13 = inlined_call_operand.hbm [shape: f32[2,1,128], index: 13, kind: input, shape index: {}]
  %s14 = inlined_call_operand.hbm [shape: f32[2,1,128], index: 14, kind: input, shape index: {}]
  %s15 = inlined_call_operand.hbm [shape: f32[2,1,128], index: 15, kind: input, shape index: {}]
  %s16 = inlined_call_operand.hbm [shape: bf16[128,128], index: 16, kind: input, shape index: {}]
  %s17 = inlined_call_operand.hbm [shape: f32[1,128], index: 17, kind: input, shape index: {}]
  %s18 = inlined_call_operand.vmem [shape: bf16[128,128], index: 18, kind: input, shape index: {}]
  %s19 = inlined_call_operand.vmem [shape: f32[1,128], index: 19, kind: input, shape index: {}]
  %s20 = inlined_call_operand.hbm [shape: f32[2,8,128], index: 20, kind: output, shape index: {}]
  %s21 = sld [smem:[#allocation0]]
  $region185: #{tpu_custom_call.1} parent=0
    _
  %s23 = ssub.s32 1, %s21
  %s24 = scalar_select 0, %s23, %s21
  $region1: #{tpu_custom_call.1} parent=0
    #allocation3 [shape = 'u8[8192]{0}', space=vmem, size = 0x2000, scoped, tag = 'input window, operand 0']
    #allocation4 [shape = 's32[2]{0}', space=sflag, size = 0x8, scoped, tag = 'scoped memory for tpu_custom_call.1']
    #allocation5 [shape = 's32[2]{0}', space=sflag, size = 0x8, scoped, tag = 'scoped memory for tpu_custom_call.1']
    #allocation6 [shape = 'u8[512]{0}', space=vmem, size = 0x400, scoped, tag = 'input window, operand 2, single buffered']
    #allocation7 [shape = 's32[1]{0}', space=sflag, size = 0x4, scoped, tag = 'scoped memory for tpu_custom_call.1']
    #allocation8 [shape = 'u8[512]{0}', space=vmem, size = 0x400, scoped, tag = 'input window, operand 3, single buffered']
    #allocation9 [shape = 'u8[196608]{0}', space=vmem, size = 0x30000, scoped, tag = 'input window, operand 4']
    #allocation10 [shape = 's32[2]{0}', space=sflag, size = 0x8, scoped, tag = 'scoped memory for tpu_custom_call.1']
    #allocation11 [shape = 'u8[3072]{0}', space=vmem, size = 0xc00, scoped, tag = 'input window, operand 5']
    #allocation12 [shape = 'u8[65536]{0}', space=vmem, size = 0x10000, scoped, tag = 'input window, operand 6']
    #allocation13 [shape = 's32[2]{0}', space=sflag, size = 0x8, scoped, tag = 'scoped memory for tpu_custom_call.1']
    #allocation14 [shape = 'u8[1024]{0}', space=vmem, size = 0x400, scoped, tag = 'input window, operand 8']
    #allocation15 [shape = 'u8[1024]{0}', space=vmem, size = 0x400, scoped, tag = 'input window, operand 9']
    #allocation16 [shape = 's32[2]{0}', space=sflag, size = 0x8, scoped, tag = 'scoped memory for tpu_custom_call.1']
    #allocation17 [shape = 'u8[262144]{0}', space=vmem, size = 0x40000, scoped, tag = 'input window, operand 10']
    #allocation18 [shape = 'u8[4096]{0}', space=vmem, size = 0x1000, scoped, tag = 'input window, operand 11']
    #allocation19 [shape = 's32[2]{0}', space=sflag, size = 0x8, scoped, tag = 'scoped memory for tpu_custom_call.1']
    #allocation20 [shape = 'u8[262144]{0}', space=vmem, size = 0x40000, scoped, tag = 'input window, operand 12']
    #allocation21 [shape = 'u8[1024]{0}', space=vmem, size = 0x400, scoped, tag = 'input window, operand 13']
    #allocation22 [shape = 's32[2]{0}', space=sflag, size = 0x8, scoped, tag = 'scoped memory for tpu_custom_call.1']
    #allocation23 [shape = 'u8[1024]{0}', space=vmem, size = 0x400, scoped, tag = 'input window, operand 14']
    #allocation24 [shape = 'u8[1024]{0}', space=vmem, size = 0x400, scoped, tag = 'input window, operand 15']
    #allocation25 [shape = 's32[2]{0}', space=sflag, size = 0x8, scoped, tag = 'scoped memory for tpu_custom_call.1']
    #allocation26 [shape = 'u8[32768]{0}', space=vmem, size = 0x8000, scoped, tag = 'input window, operand 16, single buffered']
    #allocation27 [shape = 'u8[512]{0}', space=vmem, size = 0x400, scoped, tag = 'input window, operand 17, single buffered']
    #allocation28 [shape = 's32[1]{0}', space=sflag, size = 0x4, scoped, tag = 'scoped memory for tpu_custom_call.1']
    #allocation29 [shape = 'u8[8192]{0}', space=vmem, size = 0x2000, scoped, tag = 'output window, operand 0']
    %25 = vsyncpa [#allocation4], 0
    %s26 = scalar_lea.sflag [#allocation4], 1
    %27 = vsyncpa %s26, 0
    %28 = vsyncpa [#allocation7], 0
    %29 = vsyncpa [#allocation10], 0
    %s30 = scalar_lea.sflag [#allocation10], 1
    %31 = vsyncpa %s30, 0
    %32 = vsyncpa [#allocation13], 0
    %s33 = scalar_lea.sflag [#allocation13], 1
    %34 = vsyncpa %s33, 0
    %35 = vsyncpa [#allocation16], 0
    %s36 = scalar_lea.sflag [#allocation16], 1
    %37 = vsyncpa %s36, 0
    %38 = vsyncpa [#allocation19], 0
    %s39 = scalar_lea.sflag [#allocation19], 1
    %40 = vsyncpa %s39, 0
    %41 = vsyncpa [#allocation22], 0
    %s42 = scalar_lea.sflag [#allocation22], 1
    %43 = vsyncpa %s42, 0
    %44 = vsyncpa [#allocation25], 0
    %s45 = scalar_lea.sflag [#allocation25], 1
    %46 = vsyncpa %s45, 0
    %47 = vsyncpa [#allocation28], 0
    %48 = vsyncpa [#allocation5], 0
    %s49 = scalar_lea.sflag [#allocation5], 1
    %50 = vsyncpa %s49, 0
    loop: start=0, step=1, limit=6
    $region2: #{tpu_custom_call.1} parent=1 // loop_pre_header
      _
    $region3: #{tpu_custom_call.1} parent=1 // loop_header
      %s52 = sphi 0, %s56
      %p53 = scmp.ge.s32.totalorder %s52, 6
      %s59 = sphi 0, %s71
      %s60 = sphi 0, %s67
      %s61 = sphi 0, %s59
      %s62 = sphi 0, %s60
      %s63 = sphi 0, %s61
      %s64 = sphi 0, %s62
      %s74 = sphi 0, %s76
      %s77 = sphi 0, %s74
      %s78 = sphi 0, %s77
      %s94 = sphi 0, %s78
      %s100 = sphi 0, %s102
      %s103 = sphi 0, %s100
      %s104 = sphi 0, %s103
      %s120 = sphi 0, %s104
      %s124 = sphi 0, %s124
      %s126 = sphi 0, %s124
      %s127 = sphi 0, %s126
      %s141 = sphi 0, %s127
      %s145 = sphi 0, %s145
      %s147 = sphi 0, %s145
      %s148 = sphi 0, %s147
      %s162 = sphi 0, %s148
      %s168 = sphi 0, %s170
      %s171 = sphi 0, %s168
      %s172 = sphi 0, %s171
      %s188 = sphi 0, %s172
      %s194 = sphi 0, %s196
      %s197 = sphi 0, %s194
      %s198 = sphi 0, %s197
      %s214 = sphi 0, %s198
      %s220 = sphi 0, %s222
      %s223 = sphi 0, %s220
      %s224 = sphi 0, %s223
      %s240 = sphi 0, %s224
      %s246 = sphi 0, %s248
      %s249 = sphi 0, %s246
      %s250 = sphi 0, %s249
      %s266 = sphi 0, %s250
      %s272 = sphi 0, %s274
      %s275 = sphi 0, %s272
      %s276 = sphi 0, %s275
      %s292 = sphi 0, %s276
      %s298 = sphi 0, %s300
      %s301 = sphi 0, %s298
      %s302 = sphi 0, %s301
      %s318 = sphi 0, %s302
      %s324 = sphi 0, %s326
      %s327 = sphi 0, %s324
      %s328 = sphi 0, %s327
      %s344 = sphi 0, %s328
      %s350 = sphi 0, %s352
      %s353 = sphi 0, %s350
      %s354 = sphi 0, %s353
      %s370 = sphi 0, %s354
      %s376 = sphi 0, %s378
      %s379 = sphi 0, %s376
      %s380 = sphi 0, %s379
      %s396 = sphi 0, %s380
      %s402 = sphi 0, %s404
      %s405 = sphi 0, %s402
      %s406 = sphi 0, %s405
      %s422 = sphi 0, %s406
      %s428 = sphi 0, %s430
      %s431 = sphi 0, %s428
      %s432 = sphi 0, %s431
      %s448 = sphi 0, %s432
      %s454 = sphi 0, %s456
      %s457 = sphi 0, %s454
      %s458 = sphi 0, %s457
      %s474 = sphi 0, %s458
      %s478 = sphi 0, %s478
      %s480 = sphi 0, %s478
      %s481 = sphi 0, %s480
      %s495 = sphi 0, %s481
      %s499 = sphi 0, %s499
      %s501 = sphi 0, %s499
      %s502 = sphi 0, %s501
      %s516 = sphi 0, %s502
      %s520 = sphi 0, %s520
      %s522 = sphi 0, %s520
      %s523 = sphi 0, %s522
      %s537 = sphi 0, %s523
      %s541 = sphi 0, %s541
      %s543 = sphi 0, %s541
      %s544 = sphi 0, %s543
      %s558 = sphi 0, %s544
      %s564 = sphi 0, %s566
      %s567 = sphi 0, %s564
      %s568 = sphi 0, %s567
      %s584 = sphi 0, %s568
    $region4: #{tpu_custom_call.1} parent=1 // loop_header_branch
      %55 = sbr.rel (%p53) target = $region8
    $region5: #{tpu_custom_call.1} parent=1 // loop_body
      %s57 = ssub.s32 %s52, 1
      %s58 = ssub.s32 %s52, 2
      %s65 = sadd.s32 1, %s60
      %p66 = scmp.ge.s32.totalorder %s65, 2
      %s67 = scalar_select %p66, 0, %s65
      %s68 = sadd.s32 1, %s59
      %s69 = scalar_select %p66, %s68, %s59
      %p70 = scmp.ge.s32.totalorder %s69, 2
      %s71 = scalar_select %p70, 0, %s69
      %s72 = ssub.s32 %s59, %s71
      %p73 = scmp.eq.s32.totalorder %s72, 0
      %s75 = sadd.s32 %s74, 1
      %s76 = scalar_select %p73, %s74, %s75
      %p79 = pneg %p73
      %p80 = scmp.eq.s32.totalorder %s52, 3
      %p81 = por %p79, %p80
      %p82 = scmp.ne.s32.totalorder %s74, %s77
      %p83 = scmp.eq.s32.totalorder %s52, 0
      %p84 = por %p82, %p83
      %p85 = scmp.ne.s32.totalorder %s74, %s77
      %p86 = scmp.eq.s32.totalorder %s57, 3
      %p87 = por %p85, %p86
      %p88 = scmp.ne.s32.totalorder %s77, %s78
      %p89 = scmp.eq.s32.totalorder %s57, 0
      %p90 = por %p88, %p89
      %p91 = scmp.ne.s32.totalorder %s77, %s78
      %p92 = scmp.eq.s32.totalorder %s58, 3
      %p93 = por %p91, %p92
      %p95 = scmp.ne.s32.totalorder %s78, %s94
      %p96 = scmp.eq.s32.totalorder %s58, 0
      %p97 = por %p95, %p96
      %s98 = ssub.s32 %s59, %s71
      %p99 = scmp.eq.s32.totalorder %s98, 0
      %s101 = sadd.s32 %s100, 1
      %s102 = scalar_select %p99, %s100, %s101
      %p105 = pneg %p99
      %p106 = scmp.eq.s32.totalorder %s52, 3
      %p107 = por %p105, %p106
      %p108 = scmp.ne.s32.totalorder %s100, %s103
      %p109 = scmp.eq.s32.totalorder %s52, 0
      %p110 = por %p108, %p109
      %p111 = scmp.ne.s32.totalorder %s100, %s103
      %p112 = scmp.eq.s32.totalorder %s57, 3
      %p113 = por %p111, %p112
      %p114 = scmp.ne.s32.totalorder %s103, %s104
      %p115 = scmp.eq.s32.totalorder %s57, 0
      %p116 = por %p114, %p115
      %p117 = scmp.ne.s32.totalorder %s103, %s104
      %p118 = scmp.eq.s32.totalorder %s58, 3
      %p119 = por %p117, %p118
      %p121 = scmp.ne.s32.totalorder %s104, %s120
      %p122 = scmp.eq.s32.totalorder %s58, 0
      %p123 = por %p121, %p122
      %s125 = sadd.s32 %s124, 1
      %p128 = scmp.eq.s32.totalorder %s52, 3
      %p129 = scmp.ne.s32.totalorder %s124, %s126
      %p130 = scmp.eq.s32.totalorder %s52, 0
      %p131 = por %p129, %p130
      %p132 = scmp.ne.s32.totalorder %s124, %s126
      %p133 = scmp.eq.s32.totalorder %s57, 3
      %p134 = por %p132, %p133
      %p135 = scmp.ne.s32.totalorder %s126, %s127
      %p136 = scmp.eq.s32.totalorder %s57, 0
      %p137 = por %p135, %p136
      %p138 = scmp.ne.s32.totalorder %s126, %s127
      %p139 = scmp.eq.s32.totalorder %s58, 3
      %p140 = por %p138, %p139
      %p142 = scmp.ne.s32.totalorder %s127, %s141
      %p143 = scmp.eq.s32.totalorder %s58, 0
      %p144 = por %p142, %p143
      %s146 = sadd.s32 %s145, 1
      %p149 = scmp.eq.s32.totalorder %s52, 3
      %p150 = scmp.ne.s32.totalorder %s145, %s147
      %p151 = scmp.eq.s32.totalorder %s52, 0
      %p152 = por %p150, %p151
      %p153 = scmp.ne.s32.totalorder %s145, %s147
      %p154 = scmp.eq.s32.totalorder %s57, 3
      %p155 = por %p153, %p154
      %p156 = scmp.ne.s32.totalorder %s147, %s148
      %p157 = scmp.eq.s32.totalorder %s57, 0
      %p158 = por %p156, %p157
      %p159 = scmp.ne.s32.totalorder %s147, %s148
      %p160 = scmp.eq.s32.totalorder %s58, 3
      %p161 = por %p159, %p160
      %p163 = scmp.ne.s32.totalorder %s148, %s162
      %p164 = scmp.eq.s32.totalorder %s58, 0
      %p165 = por %p163, %p164
      %s166 = ssub.s32 %s60, %s67
      %p167 = scmp.eq.s32.totalorder %s166, 0
      %s169 = sadd.s32 %s168, 1
      %s170 = scalar_select %p167, %s168, %s169
      %p173 = pneg %p167
      %p174 = scmp.eq.s32.totalorder %s52, 3
      %p175 = por %p173, %p174
      %p176 = scmp.ne.s32.totalorder %s168, %s171
      %p177 = scmp.eq.s32.totalorder %s52, 0
      %p178 = por %p176, %p177
      %p179 = scmp.ne.s32.totalorder %s168, %s171
      %p180 = scmp.eq.s32.totalorder %s57, 3
      %p181 = por %p179, %p180
      %p182 = scmp.ne.s32.totalorder %s171, %s172
      %p183 = scmp.eq.s32.totalorder %s57, 0
      %p184 = por %p182, %p183
      %p185 = scmp.ne.s32.totalorder %s171, %s172
      %p186 = scmp.eq.s32.totalorder %s58, 3
      %p187 = por %p185, %p186
      %p189 = scmp.ne.s32.totalorder %s172, %s188
      %p190 = scmp.eq.s32.totalorder %s58, 0
      %p191 = por %p189, %p190
      %s192 = ssub.s32 %s60, %s67
      %p193 = scmp.eq.s32.totalorder %s192, 0
      %s195 = sadd.s32 %s194, 1
      %s196 = scalar_select %p193, %s194, %s195
      %p199 = pneg %p193
      %p200 = scmp.eq.s32.totalorder %s52, 3
      %p201 = por %p199, %p200
      %p202 = scmp.ne.s32.totalorder %s194, %s197
      %p203 = scmp.eq.s32.totalorder %s52, 0
      %p204 = por %p202, %p203
      %p205 = scmp.ne.s32.totalorder %s194, %s197
      %p206 = scmp.eq.s32.totalorder %s57, 3
      %p207 = por %p205, %p206
      %p208 = scmp.ne.s32.totalorder %s197, %s198
      %p209 = scmp.eq.s32.totalorder %s57, 0
      %p210 = por %p208, %p209
      %p211 = scmp.ne.s32.totalorder %s197, %s198
      %p212 = scmp.eq.s32.totalorder %s58, 3
      %p213 = por %p211, %p212
      %p215 = scmp.ne.s32.totalorder %s198, %s214
      %p216 = scmp.eq.s32.totalorder %s58, 0
      %p217 = por %p215, %p216
      %s218 = ssub.s32 %s60, %s67
      %p219 = scmp.eq.s32.totalorder %s218, 0
      %s221 = sadd.s32 %s220, 1
      %s222 = scalar_select %p219, %s220, %s221
      %p225 = pneg %p219
      %p226 = scmp.eq.s32.totalorder %s52, 3
      %p227 = por %p225, %p226
      %p228 = scmp.ne.s32.totalorder %s220, %s223
      %p229 = scmp.eq.s32.totalorder %s52, 0
      %p230 = por %p228, %p229
      %p231 = scmp.ne.s32.totalorder %s220, %s223
      %p232 = scmp.eq.s32.totalorder %s57, 3
      %p233 = por %p231, %p232
      %p234 = scmp.ne.s32.totalorder %s223, %s224
      %p235 = scmp.eq.s32.totalorder %s57, 0
      %p236 = por %p234, %p235
      %p237 = scmp.ne.s32.totalorder %s223, %s224
      %p238 = scmp.eq.s32.totalorder %s58, 3
      %p239 = por %p237, %p238
      %p241 = scmp.ne.s32.totalorder %s224, %s240
      %p242 = scmp.eq.s32.totalorder %s58, 0
      %p243 = por %p241, %p242
      %s244 = ssub.s32 %s60, %s67
      %p245 = scmp.eq.s32.totalorder %s244, 0
      %s247 = sadd.s32 %s246, 1
      %s248 = scalar_select %p245, %s246, %s247
      %p251 = pneg %p245
      %p252 = scmp.eq.s32.totalorder %s52, 3
      %p253 = por %p251, %p252
      %p254 = scmp.ne.s32.totalorder %s246, %s249
      %p255 = scmp.eq.s32.totalorder %s52, 0
      %p256 = por %p254, %p255
      %p257 = scmp.ne.s32.totalorder %s246, %s249
      %p258 = scmp.eq.s32.totalorder %s57, 3
      %p259 = por %p257, %p258
      %p260 = scmp.ne.s32.totalorder %s249, %s250
      %p261 = scmp.eq.s32.totalorder %s57, 0
      %p262 = por %p260, %p261
      %p263 = scmp.ne.s32.totalorder %s249, %s250
      %p264 = scmp.eq.s32.totalorder %s58, 3
      %p265 = por %p263, %p264
      %p267 = scmp.ne.s32.totalorder %s250, %s266
      %p268 = scmp.eq.s32.totalorder %s58, 0
      %p269 = por %p267, %p268
      %s270 = ssub.s32 %s60, %s67
      %p271 = scmp.eq.s32.totalorder %s270, 0
      %s273 = sadd.s32 %s272, 1
      %s274 = scalar_select %p271, %s272, %s273
      %p277 = pneg %p271
      %p278 = scmp.eq.s32.totalorder %s52, 3
      %p279 = por %p277, %p278
      %p280 = scmp.ne.s32.totalorder %s272, %s275
      %p281 = scmp.eq.s32.totalorder %s52, 0
      %p282 = por %p280, %p281
      %p283 = scmp.ne.s32.totalorder %s272, %s275
      %p284 = scmp.eq.s32.totalorder %s57, 3
      %p285 = por %p283, %p284
      %p286 = scmp.ne.s32.totalorder %s275, %s276
      %p287 = scmp.eq.s32.totalorder %s57, 0
      %p288 = por %p286, %p287
      %p289 = scmp.ne.s32.totalorder %s275, %s276
      %p290 = scmp.eq.s32.totalorder %s58, 3
      %p291 = por %p289, %p290
      %p293 = scmp.ne.s32.totalorder %s276, %s292
      %p294 = scmp.eq.s32.totalorder %s58, 0
      %p295 = por %p293, %p294
      %s296 = ssub.s32 %s60, %s67
      %p297 = scmp.eq.s32.totalorder %s296, 0
      %s299 = sadd.s32 %s298, 1
      %s300 = scalar_select %p297, %s298, %s299
      %p303 = pneg %p297
      %p304 = scmp.eq.s32.totalorder %s52, 3
      %p305 = por %p303, %p304
      %p306 = scmp.ne.s32.totalorder %s298, %s301
      %p307 = scmp.eq.s32.totalorder %s52, 0
      %p308 = por %p306, %p307
      %p309 = scmp.ne.s32.totalorder %s298, %s301
      %p310 = scmp.eq.s32.totalorder %s57, 3
      %p311 = por %p309, %p310
      %p312 = scmp.ne.s32.totalorder %s301, %s302
      %p313 = scmp.eq.s32.totalorder %s57, 0
      %p314 = por %p312, %p313
      %p315 = scmp.ne.s32.totalorder %s301, %s302
      %p316 = scmp.eq.s32.totalorder %s58, 3
      %p317 = por %p315, %p316
      %p319 = scmp.ne.s32.totalorder %s302, %s318
      %p320 = scmp.eq.s32.totalorder %s58, 0
      %p321 = por %p319, %p320
      %s322 = ssub.s32 %s60, %s67
      %p323 = scmp.eq.s32.totalorder %s322, 0
      %s325 = sadd.s32 %s324, 1
      %s326 = scalar_select %p323, %s324, %s325
      %p329 = pneg %p323
      %p330 = scmp.eq.s32.totalorder %s52, 3
      %p331 = por %p329, %p330
      %p332 = scmp.ne.s32.totalorder %s324, %s327
      %p333 = scmp.eq.s32.totalorder %s52, 0
      %p334 = por %p332, %p333
      %p335 = scmp.ne.s32.totalorder %s324, %s327
      %p336 = scmp.eq.s32.totalorder %s57, 3
      %p337 = por %p335, %p336
      %p338 = scmp.ne.s32.totalorder %s327, %s328
      %p339 = scmp.eq.s32.totalorder %s57, 0
      %p340 = por %p338, %p339
      %p341 = scmp.ne.s32.totalorder %s327, %s328
      %p342 = scmp.eq.s32.totalorder %s58, 3
      %p343 = por %p341, %p342
      %p345 = scmp.ne.s32.totalorder %s328, %s344
      %p346 = scmp.eq.s32.totalorder %s58, 0
      %p347 = por %p345, %p346
      %s348 = ssub.s32 %s60, %s67
      %p349 = scmp.eq.s32.totalorder %s348, 0
      %s351 = sadd.s32 %s350, 1
      %s352 = scalar_select %p349, %s350, %s351
      %p355 = pneg %p349
      %p356 = scmp.eq.s32.totalorder %s52, 3
      %p357 = por %p355, %p356
      %p358 = scmp.ne.s32.totalorder %s350, %s353
      %p359 = scmp.eq.s32.totalorder %s52, 0
      %p360 = por %p358, %p359
      %p361 = scmp.ne.s32.totalorder %s350, %s353
      %p362 = scmp.eq.s32.totalorder %s57, 3
      %p363 = por %p361, %p362
      %p364 = scmp.ne.s32.totalorder %s353, %s354
      %p365 = scmp.eq.s32.totalorder %s57, 0
      %p366 = por %p364, %p365
      %p367 = scmp.ne.s32.totalorder %s353, %s354
      %p368 = scmp.eq.s32.totalorder %s58, 3
      %p369 = por %p367, %p368
      %p371 = scmp.ne.s32.totalorder %s354, %s370
      %p372 = scmp.eq.s32.totalorder %s58, 0
      %p373 = por %p371, %p372
      %s374 = ssub.s32 %s60, %s67
      %p375 = scmp.eq.s32.totalorder %s374, 0
      %s377 = sadd.s32 %s376, 1
      %s378 = scalar_select %p375, %s376, %s377
      %p381 = pneg %p375
      %p382 = scmp.eq.s32.totalorder %s52, 3
      %p383 = por %p381, %p382
      %p384 = scmp.ne.s32.totalorder %s376, %s379
      %p385 = scmp.eq.s32.totalorder %s52, 0
      %p386 = por %p384, %p385
      %p387 = scmp.ne.s32.totalorder %s376, %s379
      %p388 = scmp.eq.s32.totalorder %s57, 3
      %p389 = por %p387, %p388
      %p390 = scmp.ne.s32.totalorder %s379, %s380
      %p391 = scmp.eq.s32.totalorder %s57, 0
      %p392 = por %p390, %p391
      %p393 = scmp.ne.s32.totalorder %s379, %s380
      %p394 = scmp.eq.s32.totalorder %s58, 3
      %p395 = por %p393, %p394
      %p397 = scmp.ne.s32.totalorder %s380, %s396
      %p398 = scmp.eq.s32.totalorder %s58, 0
      %p399 = por %p397, %p398
      %s400 = ssub.s32 %s60, %s67
      %p401 = scmp.eq.s32.totalorder %s400, 0
      %s403 = sadd.s32 %s402, 1
      %s404 = scalar_select %p401, %s402, %s403
      %p407 = pneg %p401
      %p408 = scmp.eq.s32.totalorder %s52, 3
      %p409 = por %p407, %p408
      %p410 = scmp.ne.s32.totalorder %s402, %s405
      %p411 = scmp.eq.s32.totalorder %s52, 0
      %p412 = por %p410, %p411
      %p413 = scmp.ne.s32.totalorder %s402, %s405
      %p414 = scmp.eq.s32.totalorder %s57, 3
      %p415 = por %p413, %p414
      %p416 = scmp.ne.s32.totalorder %s405, %s406
      %p417 = scmp.eq.s32.totalorder %s57, 0
      %p418 = por %p416, %p417
      %p419 = scmp.ne.s32.totalorder %s405, %s406
      %p420 = scmp.eq.s32.totalorder %s58, 3
      %p421 = por %p419, %p420
      %p423 = scmp.ne.s32.totalorder %s406, %s422
      %p424 = scmp.eq.s32.totalorder %s58, 0
      %p425 = por %p423, %p424
      %s426 = ssub.s32 %s60, %s67
      %p427 = scmp.eq.s32.totalorder %s426, 0
      %s429 = sadd.s32 %s428, 1
      %s430 = scalar_select %p427, %s428, %s429
      %p433 = pneg %p427
      %p434 = scmp.eq.s32.totalorder %s52, 3
      %p435 = por %p433, %p434
      %p436 = scmp.ne.s32.totalorder %s428, %s431
      %p437 = scmp.eq.s32.totalorder %s52, 0
      %p438 = por %p436, %p437
      %p439 = scmp.ne.s32.totalorder %s428, %s431
      %p440 = scmp.eq.s32.totalorder %s57, 3
      %p441 = por %p439, %p440
      %p442 = scmp.ne.s32.totalorder %s431, %s432
      %p443 = scmp.eq.s32.totalorder %s57, 0
      %p444 = por %p442, %p443
      %p445 = scmp.ne.s32.totalorder %s431, %s432
      %p446 = scmp.eq.s32.totalorder %s58, 3
      %p447 = por %p445, %p446
      %p449 = scmp.ne.s32.totalorder %s432, %s448
      %p450 = scmp.eq.s32.totalorder %s58, 0
      %p451 = por %p449, %p450
      %s452 = ssub.s32 %s60, %s67
      %p453 = scmp.eq.s32.totalorder %s452, 0
      %s455 = sadd.s32 %s454, 1
      %s456 = scalar_select %p453, %s454, %s455
      %p459 = pneg %p453
      %p460 = scmp.eq.s32.totalorder %s52, 3
      %p461 = por %p459, %p460
      %p462 = scmp.ne.s32.totalorder %s454, %s457
      %p463 = scmp.eq.s32.totalorder %s52, 0
      %p464 = por %p462, %p463
      %p465 = scmp.ne.s32.totalorder %s454, %s457
      %p466 = scmp.eq.s32.totalorder %s57, 3
      %p467 = por %p465, %p466
      %p468 = scmp.ne.s32.totalorder %s457, %s458
      %p469 = scmp.eq.s32.totalorder %s57, 0
      %p470 = por %p468, %p469
      %p471 = scmp.ne.s32.totalorder %s457, %s458
      %p472 = scmp.eq.s32.totalorder %s58, 3
      %p473 = por %p471, %p472
      %p475 = scmp.ne.s32.totalorder %s458, %s474
      %p476 = scmp.eq.s32.totalorder %s58, 0
      %p477 = por %p475, %p476
      %s479 = sadd.s32 %s478, 1
      %p482 = scmp.eq.s32.totalorder %s52, 3
      %p483 = scmp.ne.s32.totalorder %s478, %s480
      %p484 = scmp.eq.s32.totalorder %s52, 0
      %p485 = por %p483, %p484
      %p486 = scmp.ne.s32.totalorder %s478, %s480
      %p487 = scmp.eq.s32.totalorder %s57, 3
      %p488 = por %p486, %p487
      %p489 = scmp.ne.s32.totalorder %s480, %s481
      %p490 = scmp.eq.s32.totalorder %s57, 0
      %p491 = por %p489, %p490
      %p492 = scmp.ne.s32.totalorder %s480, %s481
      %p493 = scmp.eq.s32.totalorder %s58, 3
      %p494 = por %p492, %p493
      %p496 = scmp.ne.s32.totalorder %s481, %s495
      %p497 = scmp.eq.s32.totalorder %s58, 0
      %p498 = por %p496, %p497
      %s500 = sadd.s32 %s499, 1
      %p503 = scmp.eq.s32.totalorder %s52, 3
      %p504 = scmp.ne.s32.totalorder %s499, %s501
      %p505 = scmp.eq.s32.totalorder %s52, 0
      %p506 = por %p504, %p505
      %p507 = scmp.ne.s32.totalorder %s499, %s501
      %p508 = scmp.eq.s32.totalorder %s57, 3
      %p509 = por %p507, %p508
      %p510 = scmp.ne.s32.totalorder %s501, %s502
      %p511 = scmp.eq.s32.totalorder %s57, 0
      %p512 = por %p510, %p511
      %p513 = scmp.ne.s32.totalorder %s501, %s502
      %p514 = scmp.eq.s32.totalorder %s58, 3
      %p515 = por %p513, %p514
      %p517 = scmp.ne.s32.totalorder %s502, %s516
      %p518 = scmp.eq.s32.totalorder %s58, 0
      %p519 = por %p517, %p518
      %s521 = sadd.s32 %s520, 1
      %p524 = scmp.eq.s32.totalorder %s52, 3
      %p525 = scmp.ne.s32.totalorder %s520, %s522
      %p526 = scmp.eq.s32.totalorder %s52, 0
      %p527 = por %p525, %p526
      %p528 = scmp.ne.s32.totalorder %s520, %s522
      %p529 = scmp.eq.s32.totalorder %s57, 3
      %p530 = por %p528, %p529
      %p531 = scmp.ne.s32.totalorder %s522, %s523
      %p532 = scmp.eq.s32.totalorder %s57, 0
      %p533 = por %p531, %p532
      %p534 = scmp.ne.s32.totalorder %s522, %s523
      %p535 = scmp.eq.s32.totalorder %s58, 3
      %p536 = por %p534, %p535
      %p538 = scmp.ne.s32.totalorder %s523, %s537
      %p539 = scmp.eq.s32.totalorder %s58, 0
      %p540 = por %p538, %p539
      %s542 = sadd.s32 %s541, 1
      %p545 = scmp.eq.s32.totalorder %s52, 3
      %p546 = scmp.ne.s32.totalorder %s541, %s543
      %p547 = scmp.eq.s32.totalorder %s52, 0
      %p548 = por %p546, %p547
      %p549 = scmp.ne.s32.totalorder %s541, %s543
      %p550 = scmp.eq.s32.totalorder %s57, 3
      %p551 = por %p549, %p550
      %p552 = scmp.ne.s32.totalorder %s543, %s544
      %p553 = scmp.eq.s32.totalorder %s57, 0
      %p554 = por %p552, %p553
      %p555 = scmp.ne.s32.totalorder %s543, %s544
      %p556 = scmp.eq.s32.totalorder %s58, 3
      %p557 = por %p555, %p556
      %p559 = scmp.ne.s32.totalorder %s544, %s558
      %p560 = scmp.eq.s32.totalorder %s58, 0
      %p561 = por %p559, %p560
      %s562 = ssub.s32 %s59, %s71
      %p563 = scmp.eq.s32.totalorder %s562, 0
      %s565 = sadd.s32 %s564, 1
      %s566 = scalar_select %p563, %s564, %s565
      %p569 = pneg %p563
      %p570 = scmp.eq.s32.totalorder %s52, 3
      %p571 = por %p569, %p570
      %p572 = scmp.ne.s32.totalorder %s564, %s567
      %p573 = scmp.eq.s32.totalorder %s52, 0
      %p574 = por %p572, %p573
      %p575 = scmp.ne.s32.totalorder %s564, %s567
      %p576 = scmp.eq.s32.totalorder %s57, 3
      %p577 = por %p575, %p576
      %p578 = scmp.ne.s32.totalorder %s567, %s568
      %p579 = scmp.eq.s32.totalorder %s57, 0
      %p580 = por %p578, %p579
      %p581 = scmp.ne.s32.totalorder %s567, %s568
      %p582 = scmp.eq.s32.totalorder %s58, 3
      %p583 = por %p581, %p582
      %p585 = scmp.ne.s32.totalorder %s568, %s584
      %p586 = scmp.eq.s32.totalorder %s58, 0
      %p587 = por %p585, %p586
      %p588 = scmp.le.s32.totalorder 1, %s52
      %p589 = scmp.lt.s32.totalorder %s52, 5
      %p590 = pnand %p588, %p589
      %p591 = pneg %p590
      // Predicated region
      $region9: #{tpu_custom_call.1} parent=5 // pred_check
        _
      $region10: #{tpu_custom_call.1} parent=5 // pred_check_branch
        %593 = sbr.rel (%p590) target = $region12
      $region11: #{tpu_custom_call.1} parent=5 // pred_region
        %s594 = ssub.s32 %s52, 1
        // Predicated region
        $region13: #{tpu_custom_call.1} parent=11 // pred_check
          %p595 = pneg %p137
        $region14: #{tpu_custom_call.1} parent=11 // pred_check_branch
          %597 = sbr.rel (%p595) target = $region16
        $region15: #{tpu_custom_call.1} parent=11 // pred_region
          %s599 = ssub.s32 16, 16
          %600 = vsyncadd [#allocation7], %s599
          %s602 = sshll.u32 [#allocation6], 4
          %s603 = int_to_ptr.vmem [resolvable:$true] %s602
          %605 = dma.hbm_to_vmem [thread:$0]  %s2, 16, %s603, [#allocation7]
        $region16: #{tpu_custom_call.1} parent=11 // pred_fallthru
          _
        // Predicated region
        $region17: #{tpu_custom_call.1} parent=11 // pred_check
          %p606 = pneg %p158
        $region18: #{tpu_custom_call.1} parent=11 // pred_check_branch
          %608 = sbr.rel (%p606) target = $region20
        $region19: #{tpu_custom_call.1} parent=11 // pred_region
          %s610 = ssub.s32 16, 16
          %611 = vsyncadd [#allocation7], %s610
          %s613 = sshll.u32 [#allocation8], 4
          %s614 = int_to_ptr.vmem [resolvable:$true] %s613
          %616 = dma.hbm_to_vmem [thread:$0]  %s3, 16, %s614, [#allocation7]
        $region20: #{tpu_custom_call.1} parent=11 // pred_fallthru
          _
        // Predicated region
        $region21: #{tpu_custom_call.1} parent=11 // pred_check
          %p617 = pneg %p491
        $region22: #{tpu_custom_call.1} parent=11 // pred_check_branch
          %619 = sbr.rel (%p617) target = $region24
        $region23: #{tpu_custom_call.1} parent=11 // pred_region
          %s621 = ssub.s32 1024, 1024
          %622 = vsyncadd [#allocation25], %s621
          %s623 = sshll.u32 [#allocation26], 4
          %s624 = int_to_ptr.vmem [resolvable:$true] %s623
          %629 = dma.hbm_to_vmem [thread:$0]  %s16, 1024, %s624, [#allocation25], 64, 64, 4
        $region24: #{tpu_custom_call.1} parent=11 // pred_fallthru
          _
        // Predicated region
        $region25: #{tpu_custom_call.1} parent=11 // pred_check
          %p630 = pneg %p512
        $region26: #{tpu_custom_call.1} parent=11 // pred_check_branch
          %632 = sbr.rel (%p630) target = $region28
        $region27: #{tpu_custom_call.1} parent=11 // pred_region
          %s634 = ssub.s32 16, 16
          %635 = vsyncadd [#allocation28], %s634
          %s637 = sshll.u32 [#allocation27], 4
          %s638 = int_to_ptr.vmem [resolvable:$true] %s637
          %640 = dma.hbm_to_vmem [thread:$0]  %s17, 16, %s638, [#allocation28]
        $region28: #{tpu_custom_call.1} parent=11 // pred_fallthru
          _
        // Predicated region
        $region29: #{tpu_custom_call.1} parent=11 // pred_check
          %p641 = pneg %p533
        $region30: #{tpu_custom_call.1} parent=11 // pred_check_branch
          %643 = sbr.rel (%p641) target = $region32
        $region31: #{tpu_custom_call.1} parent=11 // pred_region
          _
        $region32: #{tpu_custom_call.1} parent=11 // pred_fallthru
          _
        // Predicated region
        $region33: #{tpu_custom_call.1} parent=11 // pred_check
          %p644 = pneg %p554
        $region34: #{tpu_custom_call.1} parent=11 // pred_check_branch
          %646 = sbr.rel (%p644) target = $region36
        $region35: #{tpu_custom_call.1} parent=11 // pred_region
          _
        $region36: #{tpu_custom_call.1} parent=11 // pred_fallthru
          _
      $region12: #{tpu_custom_call.1} parent=5 // pred_fallthru
        _
      %p647 = scmp.lt.s32.totalorder %s52, 4
      // Predicated region
      $region37: #{tpu_custom_call.1} parent=5 // pred_check
        %p648 = pneg %p647
      $region38: #{tpu_custom_call.1} parent=5 // pred_check_branch
        %650 = sbr.rel (%p648) target = $region40
      $region39: #{tpu_custom_call.1} parent=5 // pred_region
        // Predicated region
        $region41: #{tpu_custom_call.1} parent=39 // pred_check
          %p651 = pneg %p84
        $region42: #{tpu_custom_call.1} parent=39 // pred_check_branch
          %653 = sbr.rel (%p651) target = $region44
        $region43: #{tpu_custom_call.1} parent=39 // pred_region
          %s654 = sand.u32 %s74, 1
          %s655 = scalar_lea.sflag [#allocation4], %s654
          %s656 = sand.u32 %s74, 1
          %s657 = smul.addr %s656, 8
          %s658 = scalar_lea.vmem [#allocation3], %s657
          %s660 = ssub.s32 128, 128
          %661 = vsyncadd %s655, %s660
          %s662 = smul.addr %s59, 128
          %s663 = scalar_lea.hbm %s0, %s662
          %s665 = sshll.u32 %s658, 4
          %s666 = int_to_ptr.vmem [resolvable:$true] %s665
          %668 = dma.hbm_to_vmem [thread:$0]  %s663, 128, %s666, %s655
        $region44: #{tpu_custom_call.1} parent=39 // pred_fallthru
          _
        // Predicated region
        $region45: #{tpu_custom_call.1} parent=39 // pred_check
          %p669 = pneg %p110
        $region46: #{tpu_custom_call.1} parent=39 // pred_check_branch
          %671 = sbr.rel (%p669) target = $region48
        $region47: #{tpu_custom_call.1} parent=39 // pred_region
          %p672 = scmp.lt.s32.totalorder %s59, 1
          %s673 = scalar_select %p672, %s59, 1
          %s674 = scalar_lea.vmem %s1, %s673
        $region48: #{tpu_custom_call.1} parent=39 // pred_fallthru
          _
        // Predicated region
        $region49: #{tpu_custom_call.1} parent=39 // pred_check
          %p675 = pneg %p178
        $region50: #{tpu_custom_call.1} parent=39 // pred_check_branch
          %677 = sbr.rel (%p675) target = $region52
        $region51: #{tpu_custom_call.1} parent=39 // pred_region
          %s678 = sand.u32 %s52, 1
          %s679 = scalar_lea.sflag [#allocation10], %s678
          %s680 = sand.u32 %s168, 1
          %s681 = smul.addr %s680, 192
          %s682 = scalar_lea.vmem [#allocation9], %s681
          %s684 = ssub.s32 3072, 3072
          %685 = vsyncadd %s679, %s684
          %s686 = smul.addr %s60, 48
          %s687 = smul.addr %s686, 64
          %s688 = scalar_lea.hbm %s4, %s687
          %s689 = sshll.u32 %s682, 4
          %s690 = int_to_ptr.vmem [resolvable:$true] %s689
          %695 = dma.hbm_to_vmem [thread:$0]  %s688, 3072, %s690, %s679, 192, 192, 12
        $region52: #{tpu_custom_call.1} parent=39 // pred_fallthru
          _
        // Predicated region
        $region53: #{tpu_custom_call.1} parent=39 // pred_check
          %p696 = pneg %p204
        $region54: #{tpu_custom_call.1} parent=39 // pred_check_branch
          %698 = sbr.rel (%p696) target = $region56
        $region55: #{tpu_custom_call.1} parent=39 // pred_region
          %s699 = sand.u32 %s52, 1
          %s700 = scalar_lea.sflag [#allocation10], %s699
          %s701 = sand.u32 %s194, 1
          %s702 = smul.addr %s701, 3
          %s703 = scalar_lea.vmem [#allocation11], %s702
          %s705 = ssub.s32 48, 48
          %706 = vsyncadd %s700, %s705
          %s707 = smul.addr %s60, 3
          %s708 = smul.addr %s707, 16
          %s709 = scalar_lea.hbm %s5, %s708
          %s711 = sshll.u32 %s703, 4
          %s712 = int_to_ptr.vmem [resolvable:$true] %s711
          %714 = dma.hbm_to_vmem [thread:$0]  %s709, 48, %s712, %s700
        $region56: #{tpu_custom_call.1} parent=39 // pred_fallthru
          _
        // Predicated region
        $region57: #{tpu_custom_call.1} parent=39 // pred_check
          %p715 = pneg %p230
        $region58: #{tpu_custom_call.1} parent=39 // pred_check_branch
          %717 = sbr.rel (%p715) target = $region60
        $region59: #{tpu_custom_call.1} parent=39 // pred_region
          %s718 = sand.u32 %s52, 1
          %s719 = scalar_lea.sflag [#allocation13], %s718
          %s720 = sand.u32 %s220, 1
          %s721 = smul.addr %s720, 64
          %s722 = scalar_lea.vmem [#allocation12], %s721
          %s724 = ssub.s32 1024, 1024
          %725 = vsyncadd %s719, %s724
          %s726 = smul.addr %s60, 16
          %s727 = smul.addr %s726, 64
          %s728 = scalar_lea.hbm %s6, %s727
          %s729 = sshll.u32 %s722, 4
          %s730 = int_to_ptr.vmem [resolvable:$true] %s729
          %735 = dma.hbm_to_vmem [thread:$0]  %s728, 1024, %s730, %s719, 64, 64, 4
        $region60: #{tpu_custom_call.1} parent=39 // pred_fallthru
          _
        // Predicated region
        $region61: #{tpu_custom_call.1} parent=39 // pred_check
          %p736 = pneg %p256
        $region62: #{tpu_custom_call.1} parent=39 // pred_check_branch
          %738 = sbr.rel (%p736) target = $region64
        $region63: #{tpu_custom_call.1} parent=39 // pred_region
          %p739 = scmp.lt.s32.totalorder %s60, 1
          %s740 = scalar_select %p739, %s60, 1
          %s741 = scalar_lea.vmem %s7, %s740
        $region64: #{tpu_custom_call.1} parent=39 // pred_fallthru
          _
        // Predicated region
        $region65: #{tpu_custom_call.1} parent=39 // pred_check
          %p742 = pneg %p282
        $region66: #{tpu_custom_call.1} parent=39 // pred_check_branch
          %744 = sbr.rel (%p742) target = $region68
        $region67: #{tpu_custom_call.1} parent=39 // pred_region
          %s745 = sand.u32 %s52, 1
          %s746 = scalar_lea.sflag [#allocation13], %s745
          %s747 = sand.u32 %s272, 1
          %s748 = scalar_lea.vmem [#allocation14], %s747
          %s750 = ssub.s32 16, 16
          %751 = vsyncadd %s746, %s750
          %s752 = smul.addr %s60, 16
          %s753 = scalar_lea.hbm %s8, %s752
          %s755 = sshll.u32 %s748, 4
          %s756 = int_to_ptr.vmem [resolvable:$true] %s755
          %758 = dma.hbm_to_vmem [thread:$0]  %s753, 16, %s756, %s746
        $region68: #{tpu_custom_call.1} parent=39 // pred_fallthru
          _
        // Predicated region
        $region69: #{tpu_custom_call.1} parent=39 // pred_check
          %p759 = pneg %p308
        $region70: #{tpu_custom_call.1} parent=39 // pred_check_branch
          %761 = sbr.rel (%p759) target = $region72
        $region71: #{tpu_custom_call.1} parent=39 // pred_region
          %s762 = sand.u32 %s52, 1
          %s763 = scalar_lea.sflag [#allocation16], %s762
          %s764 = sand.u32 %s298, 1
          %s765 = scalar_lea.vmem [#allocation15], %s764
          %s767 = ssub.s32 16, 16
          %768 = vsyncadd %s763, %s767
          %s769 = smul.addr %s60, 16
          %s770 = scalar_lea.hbm %s9, %s769
          %s772 = sshll.u32 %s765, 4
          %s773 = int_to_ptr.vmem [resolvable:$true] %s772
          %775 = dma.hbm_to_vmem [thread:$0]  %s770, 16, %s773, %s763
        $region72: #{tpu_custom_call.1} parent=39 // pred_fallthru
          _
        // Predicated region
        $region73: #{tpu_custom_call.1} parent=39 // pred_check
          %p776 = pneg %p334
        $region74: #{tpu_custom_call.1} parent=39 // pred_check_branch
          %778 = sbr.rel (%p776) target = $region76
        $region75: #{tpu_custom_call.1} parent=39 // pred_region
          %s779 = sand.u32 %s52, 1
          %s780 = scalar_lea.sflag [#allocation16], %s779
          %s781 = sand.u32 %s324, 1
          %s782 = smul.addr %s781, 256
          %s783 = scalar_lea.vmem [#allocation17], %s782
          %s785 = ssub.s32 4096, 4096
          %786 = vsyncadd %s780, %s785
          %s787 = smul.addr %s60, 64
          %s788 = smul.addr %s787, 64
          %s789 = scalar_lea.hbm %s10, %s788
          %s790 = sshll.u32 %s783, 4
          %s791 = int_to_ptr.vmem [resolvable:$true] %s790
          %796 = dma.hbm_to_vmem [thread:$0]  %s789, 4096, %s791, %s780, 256, 256, 16
        $region76: #{tpu_custom_call.1} parent=39 // pred_fallthru
          _
        // Predicated region
        $region77: #{tpu_custom_call.1} parent=39 // pred_check
          %p797 = pneg %p360
        $region78: #{tpu_custom_call.1} parent=39 // pred_check_branch
          %799 = sbr.rel (%p797) target = $region80
        $region79: #{tpu_custom_call.1} parent=39 // pred_region
          %s800 = sand.u32 %s52, 1
          %s801 = scalar_lea.sflag [#allocation19], %s800
          %s802 = sand.u32 %s350, 1
          %s803 = smul.addr %s802, 4
          %s804 = scalar_lea.vmem [#allocation18], %s803
          %s806 = ssub.s32 64, 64
          %807 = vsyncadd %s801, %s806
          %s808 = smul.addr %s60, 4
          %s809 = smul.addr %s808, 16
          %s810 = scalar_lea.hbm %s11, %s809
          %s812 = sshll.u32 %s804, 4
          %s813 = int_to_ptr.vmem [resolvable:$true] %s812
          %815 = dma.hbm_to_vmem [thread:$0]  %s810, 64, %s813, %s801
        $region80: #{tpu_custom_call.1} parent=39 // pred_fallthru
          _
        // Predicated region
        $region81: #{tpu_custom_call.1} parent=39 // pred_check
          %p816 = pneg %p386
        $region82: #{tpu_custom_call.1} parent=39 // pred_check_branch
          %818 = sbr.rel (%p816) target = $region84
        $region83: #{tpu_custom_call.1} parent=39 // pred_region
          %s819 = sand.u32 %s52, 1
          %s820 = scalar_lea.sflag [#allocation19], %s819
          %s821 = sand.u32 %s376, 1
          %s822 = smul.addr %s821, 256
          %s823 = scalar_lea.vmem [#allocation20], %s822
          %s825 = ssub.s32 4096, 4096
          %826 = vsyncadd %s820, %s825
          %s827 = smul.addr %s60, 64
          %s828 = smul.addr %s827, 64
          %s829 = scalar_lea.hbm %s12, %s828
          %s830 = sshll.u32 %s823, 4
          %s831 = int_to_ptr.vmem [resolvable:$true] %s830
          %836 = dma.hbm_to_vmem [thread:$0]  %s829, 4096, %s831, %s820, 64, 64, 4
        $region84: #{tpu_custom_call.1} parent=39 // pred_fallthru
          _
        // Predicated region
        $region85: #{tpu_custom_call.1} parent=39 // pred_check
          %p837 = pneg %p412
        $region86: #{tpu_custom_call.1} parent=39 // pred_check_branch
          %839 = sbr.rel (%p837) target = $region88
        $region87: #{tpu_custom_call.1} parent=39 // pred_region
          %s840 = sand.u32 %s52, 1
          %s841 = scalar_lea.sflag [#allocation22], %s840
          %s842 = sand.u32 %s402, 1
          %s843 = scalar_lea.vmem [#allocation21], %s842
          %s845 = ssub.s32 16, 16
          %846 = vsyncadd %s841, %s845
          %s847 = smul.addr %s60, 16
          %s848 = scalar_lea.hbm %s13, %s847
          %s850 = sshll.u32 %s843, 4
          %s851 = int_to_ptr.vmem [resolvable:$true] %s850
          %853 = dma.hbm_to_vmem [thread:$0]  %s848, 16, %s851, %s841
        $region88: #{tpu_custom_call.1} parent=39 // pred_fallthru
          _
        // Predicated region
        $region89: #{tpu_custom_call.1} parent=39 // pred_check
          %p854 = pneg %p438
        $region90: #{tpu_custom_call.1} parent=39 // pred_check_branch
          %856 = sbr.rel (%p854) target = $region92
        $region91: #{tpu_custom_call.1} parent=39 // pred_region
          %s857 = sand.u32 %s52, 1
          %s858 = scalar_lea.sflag [#allocation22], %s857
          %s859 = sand.u32 %s428, 1
          %s860 = scalar_lea.vmem [#allocation23], %s859
          %s862 = ssub.s32 16, 16
          %863 = vsyncadd %s858, %s862
          %s864 = smul.addr %s60, 16
          %s865 = scalar_lea.hbm %s14, %s864
          %s867 = sshll.u32 %s860, 4
          %s868 = int_to_ptr.vmem [resolvable:$true] %s867
          %870 = dma.hbm_to_vmem [thread:$0]  %s865, 16, %s868, %s858
        $region92: #{tpu_custom_call.1} parent=39 // pred_fallthru
          _
        // Predicated region
        $region93: #{tpu_custom_call.1} parent=39 // pred_check
          %p871 = pneg %p464
        $region94: #{tpu_custom_call.1} parent=39 // pred_check_branch
          %873 = sbr.rel (%p871) target = $region96
        $region95: #{tpu_custom_call.1} parent=39 // pred_region
          %s874 = sand.u32 %s52, 1
          %s875 = scalar_lea.sflag [#allocation25], %s874
          %s876 = sand.u32 %s454, 1
          %s877 = scalar_lea.vmem [#allocation24], %s876
          %s879 = ssub.s32 16, 16
          %880 = vsyncadd %s875, %s879
          %s881 = smul.addr %s60, 16
          %s882 = scalar_lea.hbm %s15, %s881
          %s884 = sshll.u32 %s877, 4
          %s885 = int_to_ptr.vmem [resolvable:$true] %s884
          %887 = dma.hbm_to_vmem [thread:$0]  %s882, 16, %s885, %s875
        $region96: #{tpu_custom_call.1} parent=39 // pred_fallthru
          _
      $region40: #{tpu_custom_call.1} parent=5 // pred_fallthru
        _
      %p888 = scmp.le.s32.totalorder 1, %s52
      %p889 = scmp.lt.s32.totalorder %s52, 5
      %p890 = pnand %p888, %p889
      %p891 = pneg %p890
      // Predicated region
      $region97: #{tpu_custom_call.1} parent=5 // pred_check
        _
      $region98: #{tpu_custom_call.1} parent=5 // pred_check_branch
        %893 = sbr.rel (%p890) target = $region100
      $region99: #{tpu_custom_call.1} parent=5 // pred_region
        %s894 = ssub.s32 %s52, 1
        %s895 = sand.u32 %s77, 1
        %s896 = scalar_lea.sflag [#allocation4], %s895
        %s897 = sand.u32 %s77, 1
        %s898 = smul.addr %s897, 8
        %s899 = scalar_lea.vmem [#allocation3], %s898
        // Predicated region
        $region101: #{tpu_custom_call.1} parent=99 // pred_check
          %p900 = pneg %p90
        $region102: #{tpu_custom_call.1} parent=99 // pred_check_branch
          %902 = sbr.rel (%p900) target = $region104
        $region103: #{tpu_custom_call.1} parent=99 // pred_region
          %903 = dma.done %s896, 128
        $region104: #{tpu_custom_call.1} parent=99 // pred_fallthru
          _
        // Predicated region
        $region105: #{tpu_custom_call.1} parent=99 // pred_check
          %p904 = pneg %p137
        $region106: #{tpu_custom_call.1} parent=99 // pred_check_branch
          %906 = sbr.rel (%p904) target = $region108
        $region107: #{tpu_custom_call.1} parent=99 // pred_region
          %907 = dma.done [#allocation7], 16
        $region108: #{tpu_custom_call.1} parent=99 // pred_fallthru
          _
        // Predicated region
        $region109: #{tpu_custom_call.1} parent=99 // pred_check
          %p908 = pneg %p158
        $region110: #{tpu_custom_call.1} parent=99 // pred_check_branch
          %910 = sbr.rel (%p908) target = $region112
        $region111: #{tpu_custom_call.1} parent=99 // pred_region
          %911 = dma.done [#allocation7], 16
        $region112: #{tpu_custom_call.1} parent=99 // pred_fallthru
          _
        %s912 = sand.u32 %s57, 1
        %s913 = scalar_lea.sflag [#allocation10], %s912
        %s914 = sand.u32 %s171, 1
        %s915 = smul.addr %s914, 192
        %s916 = scalar_lea.vmem [#allocation9], %s915
        // Predicated region
        $region113: #{tpu_custom_call.1} parent=99 // pred_check
          %p917 = pneg %p184
        $region114: #{tpu_custom_call.1} parent=99 // pred_check_branch
          %919 = sbr.rel (%p917) target = $region116
        $region115: #{tpu_custom_call.1} parent=99 // pred_region
          %920 = dma.done %s913, 3072
        $region116: #{tpu_custom_call.1} parent=99 // pred_fallthru
          _
        %s921 = sand.u32 %s57, 1
        %s922 = scalar_lea.sflag [#allocation10], %s921
        %s923 = sand.u32 %s197, 1
        %s924 = smul.addr %s923, 3
        %s925 = scalar_lea.vmem [#allocation11], %s924
        // Predicated region
        $region117: #{tpu_custom_call.1} parent=99 // pred_check
          %p926 = pneg %p210
        $region118: #{tpu_custom_call.1} parent=99 // pred_check_branch
          %928 = sbr.rel (%p926) target = $region120
        $region119: #{tpu_custom_call.1} parent=99 // pred_region
          %929 = dma.done %s922, 48
        $region120: #{tpu_custom_call.1} parent=99 // pred_fallthru
          _
        %s930 = sand.u32 %s57, 1
        %s931 = scalar_lea.sflag [#allocation13], %s930
        %s932 = sand.u32 %s223, 1
        %s933 = smul.addr %s932, 64
        %s934 = scalar_lea.vmem [#allocation12], %s933
        // Predicated region
        $region121: #{tpu_custom_call.1} parent=99 // pred_check
          %p935 = pneg %p236
        $region122: #{tpu_custom_call.1} parent=99 // pred_check_branch
          %937 = sbr.rel (%p935) target = $region124
        $region123: #{tpu_custom_call.1} parent=99 // pred_region
          %938 = dma.done %s931, 1024
        $region124: #{tpu_custom_call.1} parent=99 // pred_fallthru
          _
        %s939 = sand.u32 %s57, 1
        %s940 = scalar_lea.sflag [#allocation13], %s939
        %s941 = sand.u32 %s275, 1
        %s942 = scalar_lea.vmem [#allocation14], %s941
        // Predicated region
        $region125: #{tpu_custom_call.1} parent=99 // pred_check
          %p943 = pneg %p288
        $region126: #{tpu_custom_call.1} parent=99 // pred_check_branch
          %945 = sbr.rel (%p943) target = $region128
        $region127: #{tpu_custom_call.1} parent=99 // pred_region
          %946 = dma.done %s940, 16
        $region128: #{tpu_custom_call.1} parent=99 // pred_fallthru
          _
        %s947 = sand.u32 %s57, 1
        %s948 = scalar_lea.sflag [#allocation16], %s947
        %s949 = sand.u32 %s301, 1
        %s950 = scalar_lea.vmem [#allocation15], %s949
        // Predicated region
        $region129: #{tpu_custom_call.1} parent=99 // pred_check
          %p951 = pneg %p314
        $region130: #{tpu_custom_call.1} parent=99 // pred_check_branch
          %953 = sbr.rel (%p951) target = $region132
        $region131: #{tpu_custom_call.1} parent=99 // pred_region
          %954 = dma.done %s948, 16
        $region132: #{tpu_custom_call.1} parent=99 // pred_fallthru
          _
        %s955 = sand.u32 %s57, 1
        %s956 = scalar_lea.sflag [#allocation16], %s955
        %s957 = sand.u32 %s327, 1
        %s958 = smul.addr %s957, 256
        %s959 = scalar_lea.vmem [#allocation17], %s958
        // Predicated region
        $region133: #{tpu_custom_call.1} parent=99 // pred_check
          %p960 = pneg %p340
        $region134: #{tpu_custom_call.1} parent=99 // pred_check_branch
          %962 = sbr.rel (%p960) target = $region136
        $region135: #{tpu_custom_call.1} parent=99 // pred_region
          %963 = dma.done %s956, 4096
        $region136: #{tpu_custom_call.1} parent=99 // pred_fallthru
          _
        %s964 = sand.u32 %s57, 1
        %s965 = scalar_lea.sflag [#allocation19], %s964
        %s966 = sand.u32 %s353, 1
        %s967 = smul.addr %s966, 4
        %s968 = scalar_lea.vmem [#allocation18], %s967
        // Predicated region
        $region137: #{tpu_custom_call.1} parent=99 // pred_check
          %p969 = pneg %p366
        $region138: #{tpu_custom_call.1} parent=99 // pred_check_branch
          %971 = sbr.rel (%p969) target = $region140
        $region139: #{tpu_custom_call.1} parent=99 // pred_region
          %972 = dma.done %s965, 64
        $region140: #{tpu_custom_call.1} parent=99 // pred_fallthru
          _
        %s973 = sand.u32 %s57, 1
        %s974 = scalar_lea.sflag [#allocation19], %s973
        %s975 = sand.u32 %s379, 1
        %s976 = smul.addr %s975, 256
        %s977 = scalar_lea.vmem [#allocation20], %s976
        // Predicated region
        $region141: #{tpu_custom_call.1} parent=99 // pred_check
          %p978 = pneg %p392
        $region142: #{tpu_custom_call.1} parent=99 // pred_check_branch
          %980 = sbr.rel (%p978) target = $region144
        $region143: #{tpu_custom_call.1} parent=99 // pred_region
          %981 = dma.done %s974, 4096
        $region144: #{tpu_custom_call.1} parent=99 // pred_fallthru
          _
        %s982 = sand.u32 %s57, 1
        %s983 = scalar_lea.sflag [#allocation22], %s982
        %s984 = sand.u32 %s405, 1
        %s985 = scalar_lea.vmem [#allocation21], %s984
        // Predicated region
        $region145: #{tpu_custom_call.1} parent=99 // pred_check
          %p986 = pneg %p418
        $region146: #{tpu_custom_call.1} parent=99 // pred_check_branch
          %988 = sbr.rel (%p986) target = $region148
        $region147: #{tpu_custom_call.1} parent=99 // pred_region
          %989 = dma.done %s983, 16
        $region148: #{tpu_custom_call.1} parent=99 // pred_fallthru
          _
        %s990 = sand.u32 %s57, 1
        %s991 = scalar_lea.sflag [#allocation22], %s990
        %s992 = sand.u32 %s431, 1
        %s993 = scalar_lea.vmem [#allocation23], %s992
        // Predicated region
        $region149: #{tpu_custom_call.1} parent=99 // pred_check
          %p994 = pneg %p444
        $region150: #{tpu_custom_call.1} parent=99 // pred_check_branch
          %996 = sbr.rel (%p994) target = $region152
        $region151: #{tpu_custom_call.1} parent=99 // pred_region
          %997 = dma.done %s991, 16
        $region152: #{tpu_custom_call.1} parent=99 // pred_fallthru
          _
        %s998 = sand.u32 %s57, 1
        %s999 = scalar_lea.sflag [#allocation25], %s998
        %s1000 = sand.u32 %s457, 1
        %s1001 = scalar_lea.vmem [#allocation24], %s1000
        // Predicated region
        $region153: #{tpu_custom_call.1} parent=99 // pred_check
          %p1002 = pneg %p470
        $region154: #{tpu_custom_call.1} parent=99 // pred_check_branch
          %1004 = sbr.rel (%p1002) target = $region156
        $region155: #{tpu_custom_call.1} parent=99 // pred_region
          %1005 = dma.done %s999, 16
        $region156: #{tpu_custom_call.1} parent=99 // pred_fallthru
          _
        // Predicated region
        $region157: #{tpu_custom_call.1} parent=99 // pred_check
          %p1006 = pneg %p491
        $region158: #{tpu_custom_call.1} parent=99 // pred_check_branch
          %1008 = sbr.rel (%p1006) target = $region160
        $region159: #{tpu_custom_call.1} parent=99 // pred_region
          %1009 = dma.done [#allocation25], 1024
        $region160: #{tpu_custom_call.1} parent=99 // pred_fallthru
          _
        // Predicated region
        $region161: #{tpu_custom_call.1} parent=99 // pred_check
          %p1010 = pneg %p512
        $region162: #{tpu_custom_call.1} parent=99 // pred_check_branch
          %1012 = sbr.rel (%p1010) target = $region164
        $region163: #{tpu_custom_call.1} parent=99 // pred_region
          %1013 = dma.done [#allocation28], 16
        $region164: #{tpu_custom_call.1} parent=99 // pred_fallthru
          _
        %s1014 = sand.u32 %s77, 1
        %s1015 = scalar_lea.sflag [#allocation4], %s1014
        %s1016 = sand.u32 %s77, 1
        %s1017 = smul.addr %s1016, 8
        %s1018 = scalar_lea.vmem [#allocation3], %s1017
        %p1019 = pneg %p90
        %p1020 = pneg %p87
        %p1021 = scmp.lt.s32.totalorder %s61, 1
        %s1022 = scalar_select %p1021, %s61, 1
        %s1023 = scalar_lea.vmem %s1, %s1022
        %p1024 = pneg %p116
        %p1025 = pneg %p113
        %p1026 = pneg %p137
        %p1027 = pneg %p134
        %p1028 = pneg %p158
        %p1029 = pneg %p155
        %s1030 = sand.u32 %s57, 1
        %s1031 = scalar_lea.sflag [#allocation10], %s1030
        %s1032 = sand.u32 %s171, 1
        %s1033 = smul.addr %s1032, 192
        %s1034 = scalar_lea.vmem [#allocation9], %s1033
        %p1035 = pneg %p184
        %p1036 = pneg %p181
        %s1037 = sand.u32 %s57, 1
        %s1038 = scalar_lea.sflag [#allocation10], %s1037
        %s1039 = sand.u32 %s197, 1
        %s1040 = smul.addr %s1039, 3
        %s1041 = scalar_lea.vmem [#allocation11], %s1040
        %p1042 = pneg %p210
        %p1043 = pneg %p207
        %s1044 = sand.u32 %s57, 1
        %s1045 = scalar_lea.sflag [#allocation13], %s1044
        %s1046 = sand.u32 %s223, 1
        %s1047 = smul.addr %s1046, 64
        %s1048 = scalar_lea.vmem [#allocation12], %s1047
        %p1049 = pneg %p236
        %p1050 = pneg %p233
        %p1051 = scmp.lt.s32.totalorder %s62, 1
        %s1052 = scalar_select %p1051, %s62, 1
        %s1053 = scalar_lea.vmem %s7, %s1052
        %p1054 = pneg %p262
        %p1055 = pneg %p259
        %s1056 = sand.u32 %s57, 1
        %s1057 = scalar_lea.sflag [#allocation13], %s1056
        %s1058 = sand.u32 %s275, 1
        %s1059 = scalar_lea.vmem [#allocation14], %s1058
        %p1060 = pneg %p288
        %p1061 = pneg %p285
        %s1062 = sand.u32 %s57, 1
        %s1063 = scalar_lea.sflag [#allocation16], %s1062
        %s1064 = sand.u32 %s301, 1
        %s1065 = scalar_lea.vmem [#allocation15], %s1064
        %p1066 = pneg %p314
        %p1067 = pneg %p311
        %s1068 = sand.u32 %s57, 1
        %s1069 = scalar_lea.sflag [#allocation16], %s1068
        %s1070 = sand.u32 %s327, 1
        %s1071 = smul.addr %s1070, 256
        %s1072 = scalar_lea.vmem [#allocation17], %s1071
        %p1073 = pneg %p340
        %p1074 = pneg %p337
        %s1075 = sand.u32 %s57, 1
        %s1076 = scalar_lea.sflag [#allocation19], %s1075
        %s1077 = sand.u32 %s353, 1
        %s1078 = smul.addr %s1077, 4
        %s1079 = scalar_lea.vmem [#allocation18], %s1078
        %p1080 = pneg %p366
        %p1081 = pneg %p363
        %s1082 = sand.u32 %s57, 1
        %s1083 = scalar_lea.sflag [#allocation19], %s1082
        %s1084 = sand.u32 %s379, 1
        %s1085 = smul.addr %s1084, 256
        %s1086 = scalar_lea.vmem [#allocation20], %s1085
        %p1087 = pneg %p392
        %p1088 = pneg %p389
        %s1089 = sand.u32 %s57, 1
        %s1090 = scalar_lea.sflag [#allocation22], %s1089
        %s1091 = sand.u32 %s405, 1
        %s1092 = scalar_lea.vmem [#allocation21], %s1091
        %p1093 = pneg %p418
        %p1094 = pneg %p415
        %s1095 = sand.u32 %s57, 1
        %s1096 = scalar_lea.sflag [#allocation22], %s1095
        %s1097 = sand.u32 %s431, 1
        %s1098 = scalar_lea.vmem [#allocation23], %s1097
        %p1099 = pneg %p444
        %p1100 = pneg %p441
        %s1101 = sand.u32 %s57, 1
        %s1102 = scalar_lea.sflag [#allocation25], %s1101
        %s1103 = sand.u32 %s457, 1
        %s1104 = scalar_lea.vmem [#allocation24], %s1103
        %p1105 = pneg %p470
        %p1106 = pneg %p467
        %p1107 = pneg %p491
        %p1108 = pneg %p488
        %p1109 = pneg %p512
        %p1110 = pneg %p509
        %p1111 = pneg %p533
        %p1112 = pneg %p530
        %p1113 = pneg %p554
        %p1114 = pneg %p551
        %p1115 = pneg %p580
        %p1116 = pneg %p577
        %s1117 = sand.u32 %s567, 1
        %s1118 = scalar_lea.sflag [#allocation5], %s1117
        %s1119 = sand.u32 %s567, 1
        %s1120 = smul.addr %s1119, 8
        %s1121 = scalar_lea.vmem [#allocation29], %s1120
        %p1122 = scmp.lt.s32.totalorder %s61, 1
        %s1123 = scalar_select %p1122, %s61, 1
        %s1124 = scalar_lea.vmem %s1, %s1123
        %p1125 = scmp.lt.s32.totalorder %s62, 1
        %s1126 = scalar_select %p1125, %s62, 1
        %s1127 = scalar_lea.vmem %s7, %s1126
        %p1129 = scmp.eq.s32.totalorder %s62, 0
        // Predicated region
        $region165: #{tpu_custom_call.1} parent=99 // pred_check
          %p1130 = pneg %p1129
        $region166: #{tpu_custom_call.1} parent=99 // pred_check_branch
          %1132 = sbr.rel (%p1130) target = $region168
        $region167: #{tpu_custom_call.1} parent=99 // pred_region
          %v1133 = vld [vmem:[%s899] sm:$0xff]
          %v1134 = vld [vmem:[#allocation6] sm:$0x1]
          %v1135 = vld [vmem:[#allocation8] sm:$0x1]
          %1136 = vadd.xlane.f32.xlu0 %v1133
          %v1137 = vpop.xlane.xlu0 %1136
          %v1138 = vrcp.pop 128.0
          %v1139 = vmul.f32 %v1137, %v1138
          %v1140 = vsub.f32 %v1133, %v1139
          %v1141 = vmul.f32 %v1140, %v1140
          %1142 = vadd.xlane.f32.xlu0 %v1141
          %v1143 = vpop.xlane.xlu0 %1142
          %v1144 = vmul.f32 %v1143, %v1138
          %v1145 = vadd.f32 %v1144, 1e-12
          %v1146 = vrsqrt.pop %v1145
          %v1147 = vmul.f32 %v1140, %v1146
          %v1149 = vlaneseq
          %v1150 = vshrl.u32 %v1149, 7
          %v1151 = vsub.s32 0, %v1150
          %v1152 = vrot.slane %v1134, %v1151
          %v1154 = vmul.f32 %v1147, %v1152
          %v1156 = vlaneseq
          %v1157 = vshrl.u32 %v1156, 7
          %v1158 = vsub.s32 0, %v1157
          %v1159 = vrot.slane %v1135, %v1158
          %v1161 = vadd.f32 %v1154, %v1159
          %1162 = vst [vmem:[#allocation2] sm:$0xff] %v1161
        $region168: #{tpu_custom_call.1} parent=99 // pred_fallthru
          _
        %v1163 = vld [vmem:[#allocation2] sm:$0xff]
        %v1164 = vld [vmem:[%s1124] sm:$0x1]
        %v1165 = vpack.c.bf16 %v1163, %v1163
        %v1166 = vld [vmem:[%s916] sm:$0xff]
        %v1167 = vld [vmem:[%s916 + $0x8] sm:$0xf]
        %v1168 = vld [vmem:[%s916 + $0xc] sm:$0xff]
        %v1169 = vld [vmem:[%s916 + $0x14] sm:$0xf]
        %v1170 = vld [vmem:[%s916 + $0x18] sm:$0xff]
        %v1171 = vld [vmem:[%s916 + $0x20] sm:$0xf]
        %v1172 = vld [vmem:[%s916 + $0x24] sm:$0xff]
        %v1173 = vld [vmem:[%s916 + $0x2c] sm:$0xf]
        %v1174 = vld [vmem:[%s916 + $0x30] sm:$0xff]
        %v1175 = vld [vmem:[%s916 + $0x38] sm:$0xf]
        %v1176 = vld [vmem:[%s916 + $0x3c] sm:$0xff]
        %v1177 = vld [vmem:[%s916 + $0x44] sm:$0xf]
        %v1178 = vld [vmem:[%s916 + $0x48] sm:$0xff]
        %v1179 = vld [vmem:[%s916 + $0x50] sm:$0xf]
        %v1180 = vld [vmem:[%s916 + $0x54] sm:$0xff]
        %v1181 = vld [vmem:[%s916 + $0x5c] sm:$0xf]
        %v1182 = vld [vmem:[%s916 + $0x60] sm:$0xff]
        %v1183 = vld [vmem:[%s916 + $0x68] sm:$0xf]
        %v1184 = vld [vmem:[%s916 + $0x6c] sm:$0xff]
        %v1185 = vld [vmem:[%s916 + $0x74] sm:$0xf]
        %v1186 = vld [vmem:[%s916 + $0x78] sm:$0xff]
        %v1187 = vld [vmem:[%s916 + $0x80] sm:$0xf]
        %v1188 = vld [vmem:[%s916 + $0x84] sm:$0xff]
        %v1189 = vld [vmem:[%s916 + $0x8c] sm:$0xf]
        %v1190 = vld [vmem:[%s916 + $0x90] sm:$0xff]
        %v1191 = vld [vmem:[%s916 + $0x98] sm:$0xf]
        %v1192 = vld [vmem:[%s916 + $0x9c] sm:$0xff]
        %v1193 = vld [vmem:[%s916 + $0xa4] sm:$0xf]
        %v1194 = vld [vmem:[%s916 + $0xa8] sm:$0xff]
        %v1195 = vld [vmem:[%s916 + $0xb0] sm:$0xf]
        %v1196 = vld [vmem:[%s916 + $0xb4] sm:$0xff]
        %v1197 = vld [vmem:[%s916 + $0xbc] sm:$0xf]
        %v1198 = vld [vmem:[%s925] sm:$0x7]
        %v1200 = vlaneseq
        %v1201 = vshrl.u32 %v1200, 7
        %v1202 = vsub.s32 0, %v1201
        %v1203 = vrot.slane %v1198, %v1202
        %v1204 = vlaneseq
        %v1205 = vshrl.u32 %v1204, 7
        %v1206 = vsub.s32 1, %v1205
        %v1207 = vrot.slane %v1198, %v1206
        %v1208 = vlaneseq
        %v1209 = vshrl.u32 %v1208, 7
        %v1210 = vsub.s32 2, %v1209
        %v1211 = vrot.slane %v1198, %v1210
        %v1247 = vunpack.c.l.b16 %v1166
        %v1248 = vunpack.c.h.b16 %v1166
        %v1249 = vunpack.c.l.b16 %v1167
        %v1250 = vunpack.c.l.b16 %v1168
        %v1251 = vunpack.c.h.b16 %v1168
        %v1252 = vunpack.c.l.b16 %v1169
        %v1253 = vunpack.c.l.b16 %v1170
        %v1254 = vunpack.c.h.b16 %v1170
        %v1255 = vunpack.c.l.b16 %v1171
        %v1256 = vunpack.c.l.b16 %v1172
        %v1257 = vunpack.c.h.b16 %v1172
        %v1258 = vunpack.c.l.b16 %v1173
        %v1259 = vunpack.c.l.b16 %v1174
        %v1260 = vunpack.c.h.b16 %v1174
        %v1261 = vunpack.c.l.b16 %v1175
        %v1262 = vunpack.c.l.b16 %v1176
        %v1263 = vunpack.c.h.b16 %v1176
        %v1264 = vunpack.c.l.b16 %v1177
        %v1265 = vunpack.c.l.b16 %v1178
        %v1266 = vunpack.c.h.b16 %v1178
        %v1267 = vunpack.c.l.b16 %v1179
        %v1268 = vunpack.c.l.b16 %v1180
        %v1269 = vunpack.c.h.b16 %v1180
        %v1270 = vunpack.c.l.b16 %v1181
        %v1271 = vunpack.c.l.b16 %v1182
        %v1272 = vunpack.c.h.b16 %v1182
        %v1273 = vunpack.c.l.b16 %v1183
        %v1274 = vunpack.c.l.b16 %v1184
        %v1275 = vunpack.c.h.b16 %v1184
        %v1276 = vunpack.c.l.b16 %v1185
        %v1277 = vunpack.c.l.b16 %v1186
        %v1278 = vunpack.c.h.b16 %v1186
        %v1279 = vunpack.c.l.b16 %v1187
        %v1280 = vunpack.c.l.b16 %v1188
        %v1281 = vunpack.c.h.b16 %v1188
        %v1282 = vunpack.c.l.b16 %v1189
        %v1283 = vunpack.c.l.b16 %v1190
        %v1284 = vunpack.c.h.b16 %v1190
        %v1285 = vunpack.c.l.b16 %v1191
        %v1286 = vunpack.c.l.b16 %v1192
        %v1287 = vunpack.c.h.b16 %v1192
        %v1288 = vunpack.c.l.b16 %v1193
        %v1289 = vunpack.c.l.b16 %v1194
        %v1290 = vunpack.c.h.b16 %v1194
        %v1291 = vunpack.c.l.b16 %v1195
        %v1292 = vunpack.c.l.b16 %v1196
        %v1293 = vunpack.c.h.b16 %v1196
        %v1294 = vunpack.c.l.b16 %v1197
        %v1295 = vpack.c.b16 %v1250, %v1247
        %v1296 = vpack.c.b16 %v1251, %v1248
        %v1297 = vpack.c.b16 %v1252, %v1249
        %v1298 = vpack.c.b16 %v1256, %v1253
        %v1299 = vpack.c.b16 %v1257, %v1254
        %v1300 = vpack.c.b16 %v1258, %v1255
        %v1301 = vpack.c.b16 %v1262, %v1259
        %v1302 = vpack.c.b16 %v1263, %v1260
        %v1303 = vpack.c.b16 %v1264, %v1261
        %v1304 = vpack.c.b16 %v1268, %v1265
        %v1305 = vpack.c.b16 %v1269, %v1266
        %v1306 = vpack.c.b16 %v1270, %v1267
        %v1307 = vpack.c.b16 %v1274, %v1271
        %v1308 = vpack.c.b16 %v1275, %v1272
        %v1309 = vpack.c.b16 %v1276, %v1273
        %v1310 = vpack.c.b16 %v1280, %v1277
        %v1311 = vpack.c.b16 %v1281, %v1278
        %v1312 = vpack.c.b16 %v1282, %v1279
        %v1313 = vpack.c.b16 %v1286, %v1283
        %v1314 = vpack.c.b16 %v1287, %v1284
        %v1315 = vpack.c.b16 %v1288, %v1285
        %v1316 = vpack.c.b16 %v1292, %v1289
        %v1317 = vpack.c.b16 %v1293, %v1290
        %v1318 = vpack.c.b16 %v1294, %v1291
        %1343 = vmatprep.subr.bf16.mxu0 %v1296
        %1344 = vmatpush1.bf16.msra.mxu0 %v1295
        %1345 = vmatprep.subr.bf16.mxu0 %v1299
        %1346 = vmatpush1.bf16.msra.mxu0 %v1298
        %1347 = vmatprep.subr.bf16.mxu0 %v1302
        %1348 = vmatpush1.bf16.msra.mxu0 %v1301
        %1349 = vmatprep.subr.bf16.mxu0 %v1305
        %1350 = vmatpush1.bf16.msra.mxu0 %v1304
        %1351 = vmatprep.subr.bf16.mxu0 %v1308
        %1352 = vmatpush1.bf16.msra.mxu0 %v1307
        %1353 = vmatprep.subr.bf16.mxu0 %v1311
        %1354 = vmatpush1.bf16.msra.mxu0 %v1310
        %1355 = vmatprep.subr.bf16.mxu0 %v1314
        %1356 = vmatpush1.bf16.msra.mxu0 %v1313
        %1357 = vmatprep.subr.bf16.mxu0 %v1317
        %1358 = vmatpush1.bf16.msra.mxu0 %v1316
        %1359 = vmatprep.subr.bf16.mxu0 0
        %1360 = vmatpush1.bf16.msra.mxu0 0
        %1361 = vmatprep.subr.bf16.mxu0 0
        %1362 = vmatpush1.bf16.msra.mxu0 0
        %1363 = vmatprep.subr.bf16.mxu0 0
        %1364 = vmatpush1.bf16.msra.mxu0 0
        %1365 = vmatprep.subr.bf16.mxu0 0
        %1366 = vmatpush1.bf16.msra.mxu0 0
        %1367 = vmatprep.subr.bf16.mxu0 0
        %1368 = vmatpush1.bf16.msra.mxu0 0
        %1369 = vmatprep.subr.bf16.mxu0 0
        %1370 = vmatpush1.bf16.msra.mxu0 0
        %1371 = vmatprep.subr.bf16.mxu0 0
        %1372 = vmatpush1.bf16.msra.mxu0 0
        %1373 = vmatprep.subr.bf16.mxu0 0
        %1374 = vmatpush1.bf16.msra.mxu0 0
        %1375 = vmatprep.mubr.bf16.mxu0 0
        %1376 = vmatmul.mubr.bf16.gmra.mrb[0].mxu0 %v1165
        %v1377 = vpop.f32.mrb[0].mxu0
        %v1378 = vadd.f32 %v1203, %v1377
        %v1379 = vpop.f32.mrb[0].mxu0
        %v1380 = vadd.f32 %v1207, %v1379
        %v1381 = vpop.f32.mrb[0].mxu0
        %v1382 = vpop.f32.mrb[0].mxu0
        %1383 = vdwg.mxu0
        %1384 = vmatprep.subr.bf16.mxu0 0
        %1385 = vmatpush1.bf16.msra.mxu0 %v1297
        %1386 = vmatprep.subr.bf16.mxu0 0
        %1387 = vmatpush1.bf16.msra.mxu0 %v1300
        %1388 = vmatprep.subr.bf16.mxu0 0
        %1389 = vmatpush1.bf16.msra.mxu0 %v1303
        %1390 = vmatprep.subr.bf16.mxu0 0
        %1391 = vmatpush1.bf16.msra.mxu0 %v1306
        %1392 = vmatprep.subr.bf16.mxu0 0
        %1393 = vmatpush1.bf16.msra.mxu0 %v1309
        %1394 = vmatprep.subr.bf16.mxu0 0
        %1395 = vmatpush1.bf16.msra.mxu0 %v1312
        %1396 = vmatprep.subr.bf16.mxu0 0
        %1397 = vmatpush1.bf16.msra.mxu0 %v1315
        %1398 = vmatprep.subr.bf16.mxu0 0
        %1399 = vmatpush1.bf16.msra.mxu0 %v1318
        %1400 = vmatprep.subr.bf16.mxu0 0
        %1401 = vmatpush1.bf16.msra.mxu0 0
        %1402 = vmatprep.subr.bf16.mxu0 0
        %1403 = vmatpush1.bf16.msra.mxu0 0
        %1404 = vmatprep.subr.bf16.mxu0 0
        %1405 = vmatpush1.bf16.msra.mxu0 0
        %1406 = vmatprep.subr.bf16.mxu0 0
        %1407 = vmatpush1.bf16.msra.mxu0 0
        %1408 = vmatprep.subr.bf16.mxu0 0
        %1409 = vmatpush1.bf16.msra.mxu0 0
        %1410 = vmatprep.subr.bf16.mxu0 0
        %1411 = vmatpush1.bf16.msra.mxu0 0
        %1412 = vmatprep.subr.bf16.mxu0 0
        %1413 = vmatpush1.bf16.msra.mxu0 0
        %1414 = vmatprep.subr.bf16.mxu0 0
        %1415 = vmatpush1.bf16.msra.mxu0 0
        %1416 = vmatprep.mubr.bf16.mxu0 0
        %1417 = vmatmul.mubr.bf16.gmra.mrb[0].mxu0 %v1165
        %v1418 = vpop.f32.mrb[0].mxu0
        %v1419 = vadd.f32 %v1211, %v1418
        %v1420 = vpop.f32.mrb[0].mxu0
        %v1421 = vpop.f32.mrb[0].mxu0
        %v1422 = vpop.f32.mrb[0].mxu0
        %1423 = vdwg.mxu0
        %v1424 = vmul.f32 %v1378, 0.17677669
        %v1425 = vpack.c.bf16 %v1424, %v1424
        %v1426 = vpack.c.bf16 %v1380, %v1380
        %v1427 = vpack.c.bf16 %v1419, %v1419
        %v1428 = vld [vmem:[%s934] sm:$0xf]
        %v1429 = vld [vmem:[%s934 + $0x4] sm:$0xf]
        %v1430 = vld [vmem:[%s934 + $0x8] sm:$0xf]
        %v1431 = vld [vmem:[%s934 + $0xc] sm:$0xf]
        %v1432 = vld [vmem:[%s934 + $0x10] sm:$0xf]
        %v1433 = vld [vmem:[%s934 + $0x14] sm:$0xf]
        %v1434 = vld [vmem:[%s934 + $0x18] sm:$0xf]
        %v1435 = vld [vmem:[%s934 + $0x1c] sm:$0xf]
        %v1436 = vld [vmem:[%s934 + $0x20] sm:$0xf]
        %v1437 = vld [vmem:[%s934 + $0x24] sm:$0xf]
        %v1438 = vld [vmem:[%s934 + $0x28] sm:$0xf]
        %v1439 = vld [vmem:[%s934 + $0x2c] sm:$0xf]
        %v1440 = vld [vmem:[%s934 + $0x30] sm:$0xf]
        %v1441 = vld [vmem:[%s934 + $0x34] sm:$0xf]
        %v1442 = vld [vmem:[%s934 + $0x38] sm:$0xf]
        %v1443 = vld [vmem:[%s934 + $0x3c] sm:$0xf]
        %v1445 = vlaneseq
        %v1446 = vshrl.u32 %v1445, 7
        %v1447 = vsub.s32 0, %v1446
        %v1448 = vrot.slane %v1164, %v1447
        %vm1450 = vcmask 261120
        %v1452 = vsel %vm1450, %v1425, 0
        %v1455 = vsel %vm1450, %v1426, 0
        %1457 = vmatprep.subr.bf16.mxu0 0
        %1458 = vmatpush1.bf16.xpose.msra.mxu0 %v1455
        %1459 = vmatprep.subr.bf16.mxu0 0
        %1460 = vmatpush1.bf16.xpose.msra.mxu0 0
        %1461 = vmatprep.subr.bf16.mxu0 0
        %1462 = vmatpush1.bf16.xpose.msra.mxu0 0
        %1463 = vmatprep.subr.bf16.mxu0 0
        %1464 = vmatpush1.bf16.xpose.msra.mxu0 0
        %1465 = vmatprep.subr.bf16.mxu0 0
        %1466 = vmatpush1.bf16.xpose.msra.mxu0 0
        %1467 = vmatprep.subr.bf16.mxu0 0
        %1468 = vmatpush1.bf16.xpose.msra.mxu0 0
        %1469 = vmatprep.subr.bf16.mxu0 0
        %1470 = vmatpush1.bf16.xpose.msra.mxu0 0
        %1471 = vmatprep.subr.bf16.mxu0 0
        %1472 = vmatpush1.bf16.xpose.msra.mxu0 0
        %1473 = vmatprep.subr.bf16.mxu0 0
        %1474 = vmatpush1.bf16.xpose.msra.mxu0 0
        %1475 = vmatprep.subr.bf16.mxu0 0
        %1476 = vmatpush1.bf16.xpose.msra.mxu0 0
        %1477 = vmatprep.subr.bf16.mxu0 0
        %1478 = vmatpush1.bf16.xpose.msra.mxu0 0
        %1479 = vmatprep.subr.bf16.mxu0 0
        %1480 = vmatpush1.bf16.xpose.msra.mxu0 0
        %1481 = vmatprep.subr.bf16.mxu0 0
        %1482 = vmatpush1.bf16.xpose.msra.mxu0 0
        %1483 = vmatprep.subr.bf16.mxu0 0
        %1484 = vmatpush1.bf16.xpose.msra.mxu0 0
        %1485 = vmatprep.subr.bf16.mxu0 0
        %1486 = vmatpush1.bf16.xpose.msra.mxu0 0
        %1487 = vmatprep.subr.bf16.mxu0 0
        %1488 = vmatpush1.bf16.xpose.msra.mxu0 0
        %1489 = vmatprep.mubr.bf16.mxu0 0
        %1490 = vmatmul.mubr.bf16.gmra.mrb[0].mxu0 %v1452
        %v1491 = vpop.f32.mrb[0].mxu0
        %v1492 = vadd.f32 %v1448, %v1491
        %v1493 = vpop.f32.mrb[0].mxu0
        %v1494 = vpop.f32.mrb[0].mxu0
        %v1495 = vpop.f32.mrb[0].mxu0
        %1496 = vdwg.mxu0
        %vm1497 = vcmask 64512
        %v1498 = vsel %vm1497, %v1492, -inf
        %1499 = vmax.xlane.f32.xlu0 %v1498
        %v1500 = vpop.xlane.xlu0 %1499
        %v1501 = vsub.f32 %v1492, %v1500
        %v1502 = vmul.f32 %v1501, 1.442695
        %v1503 = vpow.pop %v1502
        %v1504 = vsel %vm1497, %v1503, 0.0
        %1505 = vadd.xlane.f32.xlu0 %v1504
        %v1506 = vpop.xlane.xlu0 %1505
        %v1507 = vrcp.pop %v1506
        %v1508 = vmul.f32 %v1503, %v1507
        %v1509 = vpack.c.bf16 %v1508, %v1508
        %v1511 = vsel %vm1497, %v1509, 0
        %vm1513 = vcmask 1043456
        %v1515 = vsel %vm1513, %v1427, 0
        %1517 = vmatprep.subr.bf16.mxu0 0
        %1518 = vmatpush1.bf16.msra.mxu0 %v1515
        %1519 = vmatprep.subr.bf16.mxu0 0
        %1520 = vmatpush1.bf16.msra.mxu0 0
        %1521 = vmatprep.subr.bf16.mxu0 0
        %1522 = vmatpush1.bf16.msra.mxu0 0
        %1523 = vmatprep.subr.bf16.mxu0 0
        %1524 = vmatpush1.bf16.msra.mxu0 0
        %1525 = vmatprep.subr.bf16.mxu0 0
        %1526 = vmatpush1.bf16.msra.mxu0 0
        %1527 = vmatprep.subr.bf16.mxu0 0
        %1528 = vmatpush1.bf16.msra.mxu0 0
        %1529 = vmatprep.subr.bf16.mxu0 0
        %1530 = vmatpush1.bf16.msra.mxu0 0
        %1531 = vmatprep.subr.bf16.mxu0 0
        %1532 = vmatpush1.bf16.msra.mxu0 0
        %1533 = vmatprep.subr.bf16.mxu0 0
        %1534 = vmatpush1.bf16.msra.mxu0 0
        %1535 = vmatprep.subr.bf16.mxu0 0
        %1536 = vmatpush1.bf16.msra.mxu0 0
        %1537 = vmatprep.subr.bf16.mxu0 0
        %1538 = vmatpush1.bf16.msra.mxu0 0
        %1539 = vmatprep.subr.bf16.mxu0 0
        %1540 = vmatpush1.bf16.msra.mxu0 0
        %1541 = vmatprep.subr.bf16.mxu0 0
        %1542 = vmatpush1.bf16.msra.mxu0 0
        %1543 = vmatprep.subr.bf16.mxu0 0
        %1544 = vmatpush1.bf16.msra.mxu0 0
        %1545 = vmatprep.subr.bf16.mxu0 0
        %1546 = vmatpush1.bf16.msra.mxu0 0
        %1547 = vmatprep.subr.bf16.mxu0 0
        %1548 = vmatpush1.bf16.msra.mxu0 0
        %1549 = vmatprep.mubr.bf16.mxu0 0
        %1550 = vmatmul.mubr.bf16.gmra.mrb[0].mxu0 %v1511
        %v1551 = vpop.f32.mrb[0].mxu0
        %v1552 = vadd.f32 0.0, %v1551
        %v1553 = vpop.f32.mrb[0].mxu0
        %v1554 = vpop.f32.mrb[0].mxu0
        %v1555 = vpop.f32.mrb[0].mxu0
        %1556 = vdwg.mxu0
        %v1557 = vpack.c.bf16 %v1552, %v1552
        %1559 = vrot.lane.b32.xlu0 %v1425, 96
        %v1560 = vpop.permute.xlu0 %1559
        %1562 = vrot.lane.b32.xlu0 %v1426, 96
        %v1563 = vpop.permute.xlu0 %1562
        %v1565 = vsel %vm1450, %v1560, 0
        %v1568 = vsel %vm1450, %v1563, 0
        %1570 = vmatprep.subr.bf16.mxu0 0
        %1571 = vmatpush1.bf16.xpose.msra.mxu0 %v1568
        %1572 = vmatprep.subr.bf16.mxu0 0
        %1573 = vmatpush1.bf16.xpose.msra.mxu0 0
        %1574 = vmatprep.subr.bf16.mxu0 0
        %1575 = vmatpush1.bf16.xpose.msra.mxu0 0
        %1576 = vmatprep.subr.bf16.mxu0 0
        %1577 = vmatpush1.bf16.xpose.msra.mxu0 0
        %1578 = vmatprep.subr.bf16.mxu0 0
        %1579 = vmatpush1.bf16.xpose.msra.mxu0 0
        %1580 = vmatprep.subr.bf16.mxu0 0
        %1581 = vmatpush1.bf16.xpose.msra.mxu0 0
        %1582 = vmatprep.subr.bf16.mxu0 0
        %1583 = vmatpush1.bf16.xpose.msra.mxu0 0
        %1584 = vmatprep.subr.bf16.mxu0 0
        %1585 = vmatpush1.bf16.xpose.msra.mxu0 0
        %1586 = vmatprep.subr.bf16.mxu0 0
        %1587 = vmatpush1.bf16.xpose.msra.mxu0 0
        %1588 = vmatprep.subr.bf16.mxu0 0
        %1589 = vmatpush1.bf16.xpose.msra.mxu0 0
        %1590 = vmatprep.subr.bf16.mxu0 0
        %1591 = vmatpush1.bf16.xpose.msra.mxu0 0
        %1592 = vmatprep.subr.bf16.mxu0 0
        %1593 = vmatpush1.bf16.xpose.msra.mxu0 0
        %1594 = vmatprep.subr.bf16.mxu0 0
        %1595 = vmatpush1.bf16.xpose.msra.mxu0 0
        %1596 = vmatprep.subr.bf16.mxu0 0
        %1597 = vmatpush1.bf16.xpose.msra.mxu0 0
        %1598 = vmatprep.subr.bf16.mxu0 0
        %1599 = vmatpush1.bf16.xpose.msra.mxu0 0
        %1600 = vmatprep.subr.bf16.mxu0 0
        %1601 = vmatpush1.bf16.xpose.msra.mxu0 0
        %1602 = vmatprep.mubr.bf16.mxu0 0
        %1603 = vmatmul.mubr.bf16.gmra.mrb[0].mxu0 %v1565
        %v1604 = vpop.f32.mrb[0].mxu0
        %v1605 = vadd.f32 %v1448, %v1604
        %v1606 = vpop.f32.mrb[0].mxu0
        %v1607 = vpop.f32.mrb[0].mxu0
        %v1608 = vpop.f32.mrb[0].mxu0
        %1609 = vdwg.mxu0
        %v1610 = vsel %vm1497, %v1605, -inf
        %1611 = vmax.xlane.f32.xlu0 %v1610
        %v1612 = vpop.xlane.xlu0 %1611
        %v1613 = vsub.f32 %v1605, %v1612
        %v1614 = vmul.f32 %v1613, 1.442695
        %v1615 = vpow.pop %v1614
        %v1616 = vsel %vm1497, %v1615, 0.0
        %1617 = vadd.xlane.f32.xlu0 %v1616
        %v1618 = vpop.xlane.xlu0 %1617
        %v1619 = vrcp.pop %v1618
        %v1620 = vmul.f32 %v1615, %v1619
        %v1621 = vpack.c.bf16 %v1620, %v1620
        %1623 = vrot.lane.b32.xlu0 %v1427, 96
        %v1624 = vpop.permute.xlu0 %1623
        %v1626 = vsel %vm1497, %v1621, 0
        %v1629 = vsel %vm1513, %v1624, 0
        %1631 = vmatprep.subr.bf16.mxu0 0
        %1632 = vmatpush1.bf16.msra.mxu0 %v1629
        %1633 = vmatprep.subr.bf16.mxu0 0
        %1634 = vmatpush1.bf16.msra.mxu0 0
        %1635 = vmatprep.subr.bf16.mxu0 0
        %1636 = vmatpush1.bf16.msra.mxu0 0
        %1637 = vmatprep.subr.bf16.mxu0 0
        %1638 = vmatpush1.bf16.msra.mxu0 0
        %1639 = vmatprep.subr.bf16.mxu0 0
        %1640 = vmatpush1.bf16.msra.mxu0 0
        %1641 = vmatprep.subr.bf16.mxu0 0
        %1642 = vmatpush1.bf16.msra.mxu0 0
        %1643 = vmatprep.subr.bf16.mxu0 0
        %1644 = vmatpush1.bf16.msra.mxu0 0
        %1645 = vmatprep.subr.bf16.mxu0 0
        %1646 = vmatpush1.bf16.msra.mxu0 0
        %1647 = vmatprep.subr.bf16.mxu0 0
        %1648 = vmatpush1.bf16.msra.mxu0 0
        %1649 = vmatprep.subr.bf16.mxu0 0
        %1650 = vmatpush1.bf16.msra.mxu0 0
        %1651 = vmatprep.subr.bf16.mxu0 0
        %1652 = vmatpush1.bf16.msra.mxu0 0
        %1653 = vmatprep.subr.bf16.mxu0 0
        %1654 = vmatpush1.bf16.msra.mxu0 0
        %1655 = vmatprep.subr.bf16.mxu0 0
        %1656 = vmatpush1.bf16.msra.mxu0 0
        %1657 = vmatprep.subr.bf16.mxu0 0
        %1658 = vmatpush1.bf16.msra.mxu0 0
        %1659 = vmatprep.subr.bf16.mxu0 0
        %1660 = vmatpush1.bf16.msra.mxu0 0
        %1661 = vmatprep.subr.bf16.mxu0 0
        %1662 = vmatpush1.bf16.msra.mxu0 0
        %1663 = vmatprep.mubr.bf16.mxu0 0
        %1664 = vmatmul.mubr.bf16.gmra.mrb[0].mxu0 %v1626
        %v1665 = vpop.f32.mrb[0].mxu0
        %v1666 = vadd.f32 0.0, %v1665
        %v1667 = vpop.f32.mrb[0].mxu0
        %v1668 = vpop.f32.mrb[0].mxu0
        %v1669 = vpop.f32.mrb[0].mxu0
        %1670 = vdwg.mxu0
        %v1671 = vpack.c.bf16 %v1666, %v1666
        %v1676 = vunpack.c.l.b16 %v1432
        %v1677 = vunpack.c.l.b16 %v1433
        %v1678 = vunpack.c.l.b16 %v1434
        %v1679 = vunpack.c.l.b16 %v1435
        %v1680 = vpack.c.b16 %v1677, %v1676
        %v1681 = vpack.c.b16 %v1679, %v1678
        %v1685 = vsel %vm1450, %v1671, 0
        %1687 = vmatprep.subr.bf16.mxu0 0
        %1688 = vmatpush1.bf16.msra.mxu0 %v1680
        %1689 = vmatprep.subr.bf16.mxu0 0
        %1690 = vmatpush1.bf16.msra.mxu0 %v1681
        %1691 = vmatprep.subr.bf16.mxu0 0
        %1692 = vmatpush1.bf16.msra.mxu0 0
        %1693 = vmatprep.subr.bf16.mxu0 0
        %1694 = vmatpush1.bf16.msra.mxu0 0
        %1695 = vmatprep.subr.bf16.mxu0 0
        %1696 = vmatpush1.bf16.msra.mxu0 0
        %1697 = vmatprep.subr.bf16.mxu0 0
        %1698 = vmatpush1.bf16.msra.mxu0 0
        %1699 = vmatprep.subr.bf16.mxu0 0
        %1700 = vmatpush1.bf16.msra.mxu0 0
        %1701 = vmatprep.subr.bf16.mxu0 0
        %1702 = vmatpush1.bf16.msra.mxu0 0
        %1703 = vmatprep.subr.bf16.mxu0 0
        %1704 = vmatpush1.bf16.msra.mxu0 0
        %1705 = vmatprep.subr.bf16.mxu0 0
        %1706 = vmatpush1.bf16.msra.mxu0 0
        %1707 = vmatprep.subr.bf16.mxu0 0
        %1708 = vmatpush1.bf16.msra.mxu0 0
        %1709 = vmatprep.subr.bf16.mxu0 0
        %1710 = vmatpush1.bf16.msra.mxu0 0
        %1711 = vmatprep.subr.bf16.mxu0 0
        %1712 = vmatpush1.bf16.msra.mxu0 0
        %1713 = vmatprep.subr.bf16.mxu0 0
        %1714 = vmatpush1.bf16.msra.mxu0 0
        %1715 = vmatprep.subr.bf16.mxu0 0
        %1716 = vmatpush1.bf16.msra.mxu0 0
        %1717 = vmatprep.subr.bf16.mxu0 0
        %1718 = vmatpush1.bf16.msra.mxu0 0
        %1719 = vmatprep.mubr.bf16.mxu0 0
        %1720 = vmatmul.mubr.bf16.gmra.mrb[0].mxu0 %v1685
        %v1721 = vpop.f32.mrb[0].mxu0
        %v1722 = vadd.f32 0.0, %v1721
        %v1723 = vpop.f32.mrb[0].mxu0
        %v1724 = vpop.f32.mrb[0].mxu0
        %v1725 = vpop.f32.mrb[0].mxu0
        %1726 = vdwg.mxu0
        %v1731 = vunpack.c.l.b16 %v1428
        %v1732 = vunpack.c.l.b16 %v1429
        %v1733 = vunpack.c.l.b16 %v1430
        %v1734 = vunpack.c.l.b16 %v1431
        %v1735 = vpack.c.b16 %v1732, %v1731
        %v1736 = vpack.c.b16 %v1734, %v1733
        %v1740 = vsel %vm1450, %v1557, 0
        %1742 = vmatprep.subr.bf16.mxu0 0
        %1743 = vmatpush1.bf16.msra.mxu0 %v1735
        %1744 = vmatprep.subr.bf16.mxu0 0
        %1745 = vmatpush1.bf16.msra.mxu0 %v1736
        %1746 = vmatprep.subr.bf16.mxu0 0
        %1747 = vmatpush1.bf16.msra.mxu0 0
        %1748 = vmatprep.subr.bf16.mxu0 0
        %1749 = vmatpush1.bf16.msra.mxu0 0
        %1750 = vmatprep.subr.bf16.mxu0 0
        %1751 = vmatpush1.bf16.msra.mxu0 0
        %1752 = vmatprep.subr.bf16.mxu0 0
        %1753 = vmatpush1.bf16.msra.mxu0 0
        %1754 = vmatprep.subr.bf16.mxu0 0
        %1755 = vmatpush1.bf16.msra.mxu0 0
        %1756 = vmatprep.subr.bf16.mxu0 0
        %1757 = vmatpush1.bf16.msra.mxu0 0
        %1758 = vmatprep.subr.bf16.mxu0 0
        %1759 = vmatpush1.bf16.msra.mxu0 0
        %1760 = vmatprep.subr.bf16.mxu0 0
        %1761 = vmatpush1.bf16.msra.mxu0 0
        %1762 = vmatprep.subr.bf16.mxu0 0
        %1763 = vmatpush1.bf16.msra.mxu0 0
        %1764 = vmatprep.subr.bf16.mxu0 0
        %1765 = vmatpush1.bf16.msra.mxu0 0
        %1766 = vmatprep.subr.bf16.mxu0 0
        %1767 = vmatpush1.bf16.msra.mxu0 0
        %1768 = vmatprep.subr.bf16.mxu0 0
        %1769 = vmatpush1.bf16.msra.mxu0 0
        %1770 = vmatprep.subr.bf16.mxu0 0
        %1771 = vmatpush1.bf16.msra.mxu0 0
        %1772 = vmatprep.subr.bf16.mxu0 0
        %1773 = vmatpush1.bf16.msra.mxu0 0
        %1774 = vmatprep.mubr.bf16.mxu0 0
        %1775 = vmatmul.mubr.bf16.gmra.mrb[0].mxu0 %v1740
        %v1776 = vpop.f32.mrb[0].mxu0
        %v1777 = vadd.f32 %v1722, %v1776
        %v1778 = vpop.f32.mrb[0].mxu0
        %v1779 = vpop.f32.mrb[0].mxu0
        %v1780 = vpop.f32.mrb[0].mxu0
        %1781 = vdwg.mxu0
        %1782 = vrot.lane.b32.xlu0 %v1425, 64
        %v1783 = vpop.permute.xlu0 %1782
        %1784 = vrot.lane.b32.xlu0 %v1426, 64
        %v1785 = vpop.permute.xlu0 %1784
        %v1787 = vsel %vm1450, %v1783, 0
        %v1790 = vsel %vm1450, %v1785, 0
        %1792 = vmatprep.subr.bf16.mxu0 0
        %1793 = vmatpush1.bf16.xpose.msra.mxu0 %v1790
        %1794 = vmatprep.subr.bf16.mxu0 0
        %1795 = vmatpush1.bf16.xpose.msra.mxu0 0
        %1796 = vmatprep.subr.bf16.mxu0 0
        %1797 = vmatpush1.bf16.xpose.msra.mxu0 0
        %1798 = vmatprep.subr.bf16.mxu0 0
        %1799 = vmatpush1.bf16.xpose.msra.mxu0 0
        %1800 = vmatprep.subr.bf16.mxu0 0
        %1801 = vmatpush1.bf16.xpose.msra.mxu0 0
        %1802 = vmatprep.subr.bf16.mxu0 0
        %1803 = vmatpush1.bf16.xpose.msra.mxu0 0
        %1804 = vmatprep.subr.bf16.mxu0 0
        %1805 = vmatpush1.bf16.xpose.msra.mxu0 0
        %1806 = vmatprep.subr.bf16.mxu0 0
        %1807 = vmatpush1.bf16.xpose.msra.mxu0 0
        %1808 = vmatprep.subr.bf16.mxu0 0
        %1809 = vmatpush1.bf16.xpose.msra.mxu0 0
        %1810 = vmatprep.subr.bf16.mxu0 0
        %1811 = vmatpush1.bf16.xpose.msra.mxu0 0
        %1812 = vmatprep.subr.bf16.mxu0 0
        %1813 = vmatpush1.bf16.xpose.msra.mxu0 0
        %1814 = vmatprep.subr.bf16.mxu0 0
        %1815 = vmatpush1.bf16.xpose.msra.mxu0 0
        %1816 = vmatprep.subr.bf16.mxu0 0
        %1817 = vmatpush1.bf16.xpose.msra.mxu0 0
        %1818 = vmatprep.subr.bf16.mxu0 0
        %1819 = vmatpush1.bf16.xpose.msra.mxu0 0
        %1820 = vmatprep.subr.bf16.mxu0 0
        %1821 = vmatpush1.bf16.xpose.msra.mxu0 0
        %1822 = vmatprep.subr.bf16.mxu0 0
        %1823 = vmatpush1.bf16.xpose.msra.mxu0 0
        %1824 = vmatprep.mubr.bf16.mxu0 0
        %1825 = vmatmul.mubr.bf16.gmra.mrb[0].mxu0 %v1787
        %v1826 = vpop.f32.mrb[0].mxu0
        %v1827 = vadd.f32 %v1448, %v1826
        %v1828 = vpop.f32.mrb[0].mxu0
        %v1829 = vpop.f32.mrb[0].mxu0
        %v1830 = vpop.f32.mrb[0].mxu0
        %1831 = vdwg.mxu0
        %v1832 = vsel %vm1497, %v1827, -inf
        %1833 = vmax.xlane.f32.xlu0 %v1832
        %v1834 = vpop.xlane.xlu0 %1833
        %v1835 = vsub.f32 %v1827, %v1834
        %v1836 = vmul.f32 %v1835, 1.442695
        %v1837 = vpow.pop %v1836
        %v1838 = vsel %vm1497, %v1837, 0.0
        %1839 = vadd.xlane.f32.xlu0 %v1838
        %v1840 = vpop.xlane.xlu0 %1839
        %v1841 = vrcp.pop %v1840
        %v1842 = vmul.f32 %v1837, %v1841
        %v1843 = vpack.c.bf16 %v1842, %v1842
        %1844 = vrot.lane.b32.xlu0 %v1427, 64
        %v1845 = vpop.permute.xlu0 %1844
        %v1847 = vsel %vm1497, %v1843, 0
        %v1850 = vsel %vm1513, %v1845, 0
        %1852 = vmatprep.subr.bf16.mxu0 0
        %1853 = vmatpush1.bf16.msra.mxu0 %v1850
        %1854 = vmatprep.subr.bf16.mxu0 0
        %1855 = vmatpush1.bf16.msra.mxu0 0
        %1856 = vmatprep.subr.bf16.mxu0 0
        %1857 = vmatpush1.bf16.msra.mxu0 0
        %1858 = vmatprep.subr.bf16.mxu0 0
        %1859 = vmatpush1.bf16.msra.mxu0 0
        %1860 = vmatprep.subr.bf16.mxu0 0
        %1861 = vmatpush1.bf16.msra.mxu0 0
        %1862 = vmatprep.subr.bf16.mxu0 0
        %1863 = vmatpush1.bf16.msra.mxu0 0
        %1864 = vmatprep.subr.bf16.mxu0 0
        %1865 = vmatpush1.bf16.msra.mxu0 0
        %1866 = vmatprep.subr.bf16.mxu0 0
        %1867 = vmatpush1.bf16.msra.mxu0 0
        %1868 = vmatprep.subr.bf16.mxu0 0
        %1869 = vmatpush1.bf16.msra.mxu0 0
        %1870 = vmatprep.subr.bf16.mxu0 0
        %1871 = vmatpush1.bf16.msra.mxu0 0
        %1872 = vmatprep.subr.bf16.mxu0 0
        %1873 = vmatpush1.bf16.msra.mxu0 0
        %1874 = vmatprep.subr.bf16.mxu0 0
        %1875 = vmatpush1.bf16.msra.mxu0 0
        %1876 = vmatprep.subr.bf16.mxu0 0
        %1877 = vmatpush1.bf16.msra.mxu0 0
        %1878 = vmatprep.subr.bf16.mxu0 0
        %1879 = vmatpush1.bf16.msra.mxu0 0
        %1880 = vmatprep.subr.bf16.mxu0 0
        %1881 = vmatpush1.bf16.msra.mxu0 0
        %1882 = vmatprep.subr.bf16.mxu0 0
        %1883 = vmatpush1.bf16.msra.mxu0 0
        %1884 = vmatprep.mubr.bf16.mxu0 0
        %1885 = vmatmul.mubr.bf16.gmra.mrb[0].mxu0 %v1847
        %v1886 = vpop.f32.mrb[0].mxu0
        %v1887 = vadd.f32 0.0, %v1886
        %v1888 = vpop.f32.mrb[0].mxu0
        %v1889 = vpop.f32.mrb[0].mxu0
        %v1890 = vpop.f32.mrb[0].mxu0
        %1891 = vdwg.mxu0
        %v1892 = vpack.c.bf16 %v1887, %v1887
        %v1897 = vunpack.c.l.b16 %v1436
        %v1898 = vunpack.c.l.b16 %v1437
        %v1899 = vunpack.c.l.b16 %v1438
        %v1900 = vunpack.c.l.b16 %v1439
        %v1901 = vpack.c.b16 %v1898, %v1897
        %v1902 = vpack.c.b16 %v1900, %v1899
        %v1906 = vsel %vm1450, %v1892, 0
        %1908 = vmatprep.subr.bf16.mxu0 0
        %1909 = vmatpush1.bf16.msra.mxu0 %v1901
        %1910 = vmatprep.subr.bf16.mxu0 0
        %1911 = vmatpush1.bf16.msra.mxu0 %v1902
        %1912 = vmatprep.subr.bf16.mxu0 0
        %1913 = vmatpush1.bf16.msra.mxu0 0
        %1914 = vmatprep.subr.bf16.mxu0 0
        %1915 = vmatpush1.bf16.msra.mxu0 0
        %1916 = vmatprep.subr.bf16.mxu0 0
        %1917 = vmatpush1.bf16.msra.mxu0 0
        %1918 = vmatprep.subr.bf16.mxu0 0
        %1919 = vmatpush1.bf16.msra.mxu0 0
        %1920 = vmatprep.subr.bf16.mxu0 0
        %1921 = vmatpush1.bf16.msra.mxu0 0
        %1922 = vmatprep.subr.bf16.mxu0 0
        %1923 = vmatpush1.bf16.msra.mxu0 0
        %1924 = vmatprep.subr.bf16.mxu0 0
        %1925 = vmatpush1.bf16.msra.mxu0 0
        %1926 = vmatprep.subr.bf16.mxu0 0
        %1927 = vmatpush1.bf16.msra.mxu0 0
        %1928 = vmatprep.subr.bf16.mxu0 0
        %1929 = vmatpush1.bf16.msra.mxu0 0
        %1930 = vmatprep.subr.bf16.mxu0 0
        %1931 = vmatpush1.bf16.msra.mxu0 0
        %1932 = vmatprep.subr.bf16.mxu0 0
        %1933 = vmatpush1.bf16.msra.mxu0 0
        %1934 = vmatprep.subr.bf16.mxu0 0
        %1935 = vmatpush1.bf16.msra.mxu0 0
        %1936 = vmatprep.subr.bf16.mxu0 0
        %1937 = vmatpush1.bf16.msra.mxu0 0
        %1938 = vmatprep.subr.bf16.mxu0 0
        %1939 = vmatpush1.bf16.msra.mxu0 0
        %1940 = vmatprep.mubr.bf16.mxu0 0
        %1941 = vmatmul.mubr.bf16.gmra.mrb[0].mxu0 %v1906
        %v1942 = vpop.f32.mrb[0].mxu0
        %v1943 = vadd.f32 0.0, %v1942
        %v1944 = vpop.f32.mrb[0].mxu0
        %v1945 = vpop.f32.mrb[0].mxu0
        %v1946 = vpop.f32.mrb[0].mxu0
        %1947 = vdwg.mxu0
        %v1948 = vadd.f32 %v1777, %v1943
        %1949 = vrot.lane.b32.xlu0 %v1425, 32
        %v1950 = vpop.permute.xlu0 %1949
        %1951 = vrot.lane.b32.xlu0 %v1426, 32
        %v1952 = vpop.permute.xlu0 %1951
        %v1954 = vsel %vm1450, %v1950, 0
        %v1957 = vsel %vm1450, %v1952, 0
        %1959 = vmatprep.subr.bf16.mxu0 0
        %1960 = vmatpush1.bf16.xpose.msra.mxu0 %v1957
        %1961 = vmatprep.subr.bf16.mxu0 0
        %1962 = vmatpush1.bf16.xpose.msra.mxu0 0
        %1963 = vmatprep.subr.bf16.mxu0 0
        %1964 = vmatpush1.bf16.xpose.msra.mxu0 0
        %1965 = vmatprep.subr.bf16.mxu0 0
        %1966 = vmatpush1.bf16.xpose.msra.mxu0 0
        %1967 = vmatprep.subr.bf16.mxu0 0
        %1968 = vmatpush1.bf16.xpose.msra.mxu0 0
        %1969 = vmatprep.subr.bf16.mxu0 0
        %1970 = vmatpush1.bf16.xpose.msra.mxu0 0
        %1971 = vmatprep.subr.bf16.mxu0 0
        %1972 = vmatpush1.bf16.xpose.msra.mxu0 0
        %1973 = vmatprep.subr.bf16.mxu0 0
        %1974 = vmatpush1.bf16.xpose.msra.mxu0 0
        %1975 = vmatprep.subr.bf16.mxu0 0
        %1976 = vmatpush1.bf16.xpose.msra.mxu0 0
        %1977 = vmatprep.subr.bf16.mxu0 0
        %1978 = vmatpush1.bf16.xpose.msra.mxu0 0
        %1979 = vmatprep.subr.bf16.mxu0 0
        %1980 = vmatpush1.bf16.xpose.msra.mxu0 0
        %1981 = vmatprep.subr.bf16.mxu0 0
        %1982 = vmatpush1.bf16.xpose.msra.mxu0 0
        %1983 = vmatprep.subr.bf16.mxu0 0
        %1984 = vmatpush1.bf16.xpose.msra.mxu0 0
        %1985 = vmatprep.subr.bf16.mxu0 0
        %1986 = vmatpush1.bf16.xpose.msra.mxu0 0
        %1987 = vmatprep.subr.bf16.mxu0 0
        %1988 = vmatpush1.bf16.xpose.msra.mxu0 0
        %1989 = vmatprep.subr.bf16.mxu0 0
        %1990 = vmatpush1.bf16.xpose.msra.mxu0 0
        %1991 = vmatprep.mubr.bf16.mxu0 0
        %1992 = vmatmul.mubr.bf16.gmra.mrb[0].mxu0 %v1954
        %v1993 = vpop.f32.mrb[0].mxu0
        %v1994 = vadd.f32 %v1448, %v1993
        %v1995 = vpop.f32.mrb[0].mxu0
        %v1996 = vpop.f32.mrb[0].mxu0
        %v1997 = vpop.f32.mrb[0].mxu0
        %1998 = vdwg.mxu0
        %v1999 = vsel %vm1497, %v1994, -inf
        %2000 = vmax.xlane.f32.xlu0 %v1999
        %v2001 = vpop.xlane.xlu0 %2000
        %v2002 = vsub.f32 %v1994, %v2001
        %v2003 = vmul.f32 %v2002, 1.442695
        %v2004 = vpow.pop %v2003
        %v2005 = vsel %vm1497, %v2004, 0.0
        %2006 = vadd.xlane.f32.xlu0 %v2005
        %v2007 = vpop.xlane.xlu0 %2006
        %v2008 = vrcp.pop %v2007
        %v2009 = vmul.f32 %v2004, %v2008
        %v2010 = vpack.c.bf16 %v2009, %v2009
        %2011 = vrot.lane.b32.xlu0 %v1427, 32
        %v2012 = vpop.permute.xlu0 %2011
        %v2014 = vsel %vm1497, %v2010, 0
        %v2017 = vsel %vm1513, %v2012, 0
        %2019 = vmatprep.subr.bf16.mxu0 0
        %2020 = vmatpush1.bf16.msra.mxu0 %v2017
        %2021 = vmatprep.subr.bf16.mxu0 0
        %2022 = vmatpush1.bf16.msra.mxu0 0
        %2023 = vmatprep.subr.bf16.mxu0 0
        %2024 = vmatpush1.bf16.msra.mxu0 0
        %2025 = vmatprep.subr.bf16.mxu0 0
        %2026 = vmatpush1.bf16.msra.mxu0 0
        %2027 = vmatprep.subr.bf16.mxu0 0
        %2028 = vmatpush1.bf16.msra.mxu0 0
        %2029 = vmatprep.subr.bf16.mxu0 0
        %2030 = vmatpush1.bf16.msra.mxu0 0
        %2031 = vmatprep.subr.bf16.mxu0 0
        %2032 = vmatpush1.bf16.msra.mxu0 0
        %2033 = vmatprep.subr.bf16.mxu0 0
        %2034 = vmatpush1.bf16.msra.mxu0 0
        %2035 = vmatprep.subr.bf16.mxu0 0
        %2036 = vmatpush1.bf16.msra.mxu0 0
        %2037 = vmatprep.subr.bf16.mxu0 0
        %2038 = vmatpush1.bf16.msra.mxu0 0
        %2039 = vmatprep.subr.bf16.mxu0 0
        %2040 = vmatpush1.bf16.msra.mxu0 0
        %2041 = vmatprep.subr.bf16.mxu0 0
        %2042 = vmatpush1.bf16.msra.mxu0 0
        %2043 = vmatprep.subr.bf16.mxu0 0
        %2044 = vmatpush1.bf16.msra.mxu0 0
        %2045 = vmatprep.subr.bf16.mxu0 0
        %2046 = vmatpush1.bf16.msra.mxu0 0
        %2047 = vmatprep.subr.bf16.mxu0 0
        %2048 = vmatpush1.bf16.msra.mxu0 0
        %2049 = vmatprep.subr.bf16.mxu0 0
        %2050 = vmatpush1.bf16.msra.mxu0 0
        %2051 = vmatprep.mubr.bf16.mxu0 0
        %2052 = vmatmul.mubr.bf16.gmra.mrb[0].mxu0 %v2014
        %v2053 = vpop.f32.mrb[0].mxu0
        %v2054 = vadd.f32 0.0, %v2053
        %v2055 = vpop.f32.mrb[0].mxu0
        %v2056 = vpop.f32.mrb[0].mxu0
        %v2057 = vpop.f32.mrb[0].mxu0
        %2058 = vdwg.mxu0
        %v2059 = vpack.c.bf16 %v2054, %v2054
        %v2064 = vunpack.c.l.b16 %v1440
        %v2065 = vunpack.c.l.b16 %v1441
        %v2066 = vunpack.c.l.b16 %v1442
        %v2067 = vunpack.c.l.b16 %v1443
        %v2068 = vpack.c.b16 %v2065, %v2064
        %v2069 = vpack.c.b16 %v2067, %v2066
        %v2073 = vsel %vm1450, %v2059, 0
        %2075 = vmatprep.subr.bf16.mxu0 0
        %2076 = vmatpush1.bf16.msra.mxu0 %v2068
        %2077 = vmatprep.subr.bf16.mxu0 0
        %2078 = vmatpush1.bf16.msra.mxu0 %v2069
        %2079 = vmatprep.subr.bf16.mxu0 0
        %2080 = vmatpush1.bf16.msra.mxu0 0
        %2081 = vmatprep.subr.bf16.mxu0 0
        %2082 = vmatpush1.bf16.msra.mxu0 0
        %2083 = vmatprep.subr.bf16.mxu0 0
        %2084 = vmatpush1.bf16.msra.mxu0 0
        %2085 = vmatprep.subr.bf16.mxu0 0
        %2086 = vmatpush1.bf16.msra.mxu0 0
        %2087 = vmatprep.subr.bf16.mxu0 0
        %2088 = vmatpush1.bf16.msra.mxu0 0
        %2089 = vmatprep.subr.bf16.mxu0 0
        %2090 = vmatpush1.bf16.msra.mxu0 0
        %2091 = vmatprep.subr.bf16.mxu0 0
        %2092 = vmatpush1.bf16.msra.mxu0 0
        %2093 = vmatprep.subr.bf16.mxu0 0
        %2094 = vmatpush1.bf16.msra.mxu0 0
        %2095 = vmatprep.subr.bf16.mxu0 0
        %2096 = vmatpush1.bf16.msra.mxu0 0
        %2097 = vmatprep.subr.bf16.mxu0 0
        %2098 = vmatpush1.bf16.msra.mxu0 0
        %2099 = vmatprep.subr.bf16.mxu0 0
        %2100 = vmatpush1.bf16.msra.mxu0 0
        %2101 = vmatprep.subr.bf16.mxu0 0
        %2102 = vmatpush1.bf16.msra.mxu0 0
        %2103 = vmatprep.subr.bf16.mxu0 0
        %2104 = vmatpush1.bf16.msra.mxu0 0
        %2105 = vmatprep.subr.bf16.mxu0 0
        %2106 = vmatpush1.bf16.msra.mxu0 0
        %2107 = vmatprep.mubr.bf16.mxu0 0
        %2108 = vmatmul.mubr.bf16.gmra.mrb[0].mxu0 %v2073
        %v2109 = vpop.f32.mrb[0].mxu0
        %v2110 = vadd.f32 0.0, %v2109
        %v2111 = vpop.f32.mrb[0].mxu0
        %v2112 = vpop.f32.mrb[0].mxu0
        %v2113 = vpop.f32.mrb[0].mxu0
        %2114 = vdwg.mxu0
        %v2115 = vadd.f32 %v1948, %v2110
        %v2116 = vld [vmem:[%s1127] sm:$0x1]
        %v2118 = vlaneseq
        %v2119 = vshrl.u32 %v2118, 7
        %v2120 = vsub.s32 0, %v2119
        %v2121 = vrot.slane %v2116, %v2120
        %v2123 = vadd.f32 %v2115, %v2121
        %v2124 = vadd.f32 %v2123, %v1163
        %v2125 = vld [vmem:[%s942] sm:$0x1]
        %v2126 = vld [vmem:[%s950] sm:$0x1]
        %2127 = vadd.xlane.f32.xlu0 %v2124
        %v2128 = vpop.xlane.xlu0 %2127
        %v2129 = vrcp.pop 128.0
        %v2130 = vmul.f32 %v2128, %v2129
        %v2131 = vsub.f32 %v2124, %v2130
        %v2132 = vmul.f32 %v2131, %v2131
        %2133 = vadd.xlane.f32.xlu0 %v2132
        %v2134 = vpop.xlane.xlu0 %2133
        %v2135 = vmul.f32 %v2134, %v2129
        %v2136 = vadd.f32 %v2135, 1e-12
        %v2137 = vrsqrt.pop %v2136
        %v2138 = vmul.f32 %v2131, %v2137
        %v2140 = vlaneseq
        %v2141 = vshrl.u32 %v2140, 7
        %v2142 = vsub.s32 0, %v2141
        %v2143 = vrot.slane %v2125, %v2142
        %v2145 = vmul.f32 %v2138, %v2143
        %v2147 = vlaneseq
        %v2148 = vshrl.u32 %v2147, 7
        %v2149 = vsub.s32 0, %v2148
        %v2150 = vrot.slane %v2126, %v2149
        %v2152 = vadd.f32 %v2145, %v2150
        %v2153 = vpack.c.bf16 %v2152, %v2152
        %v2154 = vld [vmem:[%s959] sm:$0xff]
        %v2155 = vld [vmem:[%s959 + $0x8] sm:$0xff]
        %v2156 = vld [vmem:[%s959 + $0x10] sm:$0xff]
        %v2157 = vld [vmem:[%s959 + $0x18] sm:$0xff]
        %v2158 = vld [vmem:[%s959 + $0x20] sm:$0xff]
        %v2159 = vld [vmem:[%s959 + $0x28] sm:$0xff]
        %v2160 = vld [vmem:[%s959 + $0x30] sm:$0xff]
        %v2161 = vld [vmem:[%s959 + $0x38] sm:$0xff]
        %v2162 = vld [vmem:[%s959 + $0x40] sm:$0xff]
        %v2163 = vld [vmem:[%s959 + $0x48] sm:$0xff]
        %v2164 = vld [vmem:[%s959 + $0x50] sm:$0xff]
        %v2165 = vld [vmem:[%s959 + $0x58] sm:$0xff]
        %v2166 = vld [vmem:[%s959 + $0x60] sm:$0xff]
        %v2167 = vld [vmem:[%s959 + $0x68] sm:$0xff]
        %v2168 = vld [vmem:[%s959 + $0x70] sm:$0xff]
        %v2169 = vld [vmem:[%s959 + $0x78] sm:$0xff]
        %v2170 = vld [vmem:[%s959 + $0x80] sm:$0xff]
        %v2171 = vld [vmem:[%s959 + $0x88] sm:$0xff]
        %v2172 = vld [vmem:[%s959 + $0x90] sm:$0xff]
        %v2173 = vld [vmem:[%s959 + $0x98] sm:$0xff]
        %v2174 = vld [vmem:[%s959 + $0xa0] sm:$0xff]
        %v2175 = vld [vmem:[%s959 + $0xa8] sm:$0xff]
        %v2176 = vld [vmem:[%s959 + $0xb0] sm:$0xff]
        %v2177 = vld [vmem:[%s959 + $0xb8] sm:$0xff]
        %v2178 = vld [vmem:[%s959 + $0xc0] sm:$0xff]
        %v2179 = vld [vmem:[%s959 + $0xc8] sm:$0xff]
        %v2180 = vld [vmem:[%s959 + $0xd0] sm:$0xff]
        %v2181 = vld [vmem:[%s959 + $0xd8] sm:$0xff]
        %v2182 = vld [vmem:[%s959 + $0xe0] sm:$0xff]
        %v2183 = vld [vmem:[%s959 + $0xe8] sm:$0xff]
        %v2184 = vld [vmem:[%s959 + $0xf0] sm:$0xff]
        %v2185 = vld [vmem:[%s959 + $0xf8] sm:$0xff]
        %v2186 = vld [vmem:[%s968] sm:$0xf]
        %v2188 = vlaneseq
        %v2189 = vshrl.u32 %v2188, 7
        %v2190 = vsub.s32 0, %v2189
        %v2191 = vrot.slane %v2186, %v2190
        %v2192 = vlaneseq
        %v2193 = vshrl.u32 %v2192, 7
        %v2194 = vsub.s32 1, %v2193
        %v2195 = vrot.slane %v2186, %v2194
        %v2196 = vlaneseq
        %v2197 = vshrl.u32 %v2196, 7
        %v2198 = vsub.s32 2, %v2197
        %v2199 = vrot.slane %v2186, %v2198
        %v2200 = vlaneseq
        %v2201 = vshrl.u32 %v2200, 7
        %v2202 = vsub.s32 3, %v2201
        %v2203 = vrot.slane %v2186, %v2202
        %v2240 = vunpack.c.l.b16 %v2154
        %v2241 = vunpack.c.h.b16 %v2154
        %v2242 = vunpack.c.l.b16 %v2155
        %v2243 = vunpack.c.h.b16 %v2155
        %v2244 = vunpack.c.l.b16 %v2156
        %v2245 = vunpack.c.h.b16 %v2156
        %v2246 = vunpack.c.l.b16 %v2157
        %v2247 = vunpack.c.h.b16 %v2157
        %v2248 = vunpack.c.l.b16 %v2158
        %v2249 = vunpack.c.h.b16 %v2158
        %v2250 = vunpack.c.l.b16 %v2159
        %v2251 = vunpack.c.h.b16 %v2159
        %v2252 = vunpack.c.l.b16 %v2160
        %v2253 = vunpack.c.h.b16 %v2160
        %v2254 = vunpack.c.l.b16 %v2161
        %v2255 = vunpack.c.h.b16 %v2161
        %v2256 = vunpack.c.l.b16 %v2162
        %v2257 = vunpack.c.h.b16 %v2162
        %v2258 = vunpack.c.l.b16 %v2163
        %v2259 = vunpack.c.h.b16 %v2163
        %v2260 = vunpack.c.l.b16 %v2164
        %v2261 = vunpack.c.h.b16 %v2164
        %v2262 = vunpack.c.l.b16 %v2165
        %v2263 = vunpack.c.h.b16 %v2165
        %v2264 = vunpack.c.l.b16 %v2166
        %v2265 = vunpack.c.h.b16 %v2166
        %v2266 = vunpack.c.l.b16 %v2167
        %v2267 = vunpack.c.h.b16 %v2167
        %v2268 = vunpack.c.l.b16 %v2168
        %v2269 = vunpack.c.h.b16 %v2168
        %v2270 = vunpack.c.l.b16 %v2169
        %v2271 = vunpack.c.h.b16 %v2169
        %v2272 = vunpack.c.l.b16 %v2170
        %v2273 = vunpack.c.h.b16 %v2170
        %v2274 = vunpack.c.l.b16 %v2171
        %v2275 = vunpack.c.h.b16 %v2171
        %v2276 = vunpack.c.l.b16 %v2172
        %v2277 = vunpack.c.h.b16 %v2172
        %v2278 = vunpack.c.l.b16 %v2173
        %v2279 = vunpack.c.h.b16 %v2173
        %v2280 = vunpack.c.l.b16 %v2174
        %v2281 = vunpack.c.h.b16 %v2174
        %v2282 = vunpack.c.l.b16 %v2175
        %v2283 = vunpack.c.h.b16 %v2175
        %v2284 = vunpack.c.l.b16 %v2176
        %v2285 = vunpack.c.h.b16 %v2176
        %v2286 = vunpack.c.l.b16 %v2177
        %v2287 = vunpack.c.h.b16 %v2177
        %v2288 = vunpack.c.l.b16 %v2178
        %v2289 = vunpack.c.h.b16 %v2178
        %v2290 = vunpack.c.l.b16 %v2179
        %v2291 = vunpack.c.h.b16 %v2179
        %v2292 = vunpack.c.l.b16 %v2180
        %v2293 = vunpack.c.h.b16 %v2180
        %v2294 = vunpack.c.l.b16 %v2181
        %v2295 = vunpack.c.h.b16 %v2181
        %v2296 = vunpack.c.l.b16 %v2182
        %v2297 = vunpack.c.h.b16 %v2182
        %v2298 = vunpack.c.l.b16 %v2183
        %v2299 = vunpack.c.h.b16 %v2183
        %v2300 = vunpack.c.l.b16 %v2184
        %v2301 = vunpack.c.h.b16 %v2184
        %v2302 = vunpack.c.l.b16 %v2185
        %v2303 = vunpack.c.h.b16 %v2185
        %v2304 = vpack.c.b16 %v2244, %v2240
        %v2305 = vpack.c.b16 %v2245, %v2241
        %v2306 = vpack.c.b16 %v2246, %v2242
        %v2307 = vpack.c.b16 %v2247, %v2243
        %v2308 = vpack.c.b16 %v2252, %v2248
        %v2309 = vpack.c.b16 %v2253, %v2249
        %v2310 = vpack.c.b16 %v2254, %v2250
        %v2311 = vpack.c.b16 %v2255, %v2251
        %v2312 = vpack.c.b16 %v2260, %v2256
        %v2313 = vpack.c.b16 %v2261, %v2257
        %v2314 = vpack.c.b16 %v2262, %v2258
        %v2315 = vpack.c.b16 %v2263, %v2259
        %v2316 = vpack.c.b16 %v2268, %v2264
        %v2317 = vpack.c.b16 %v2269, %v2265
        %v2318 = vpack.c.b16 %v2270, %v2266
        %v2319 = vpack.c.b16 %v2271, %v2267
        %v2320 = vpack.c.b16 %v2276, %v2272
        %v2321 = vpack.c.b16 %v2277, %v2273
        %v2322 = vpack.c.b16 %v2278, %v2274
        %v2323 = vpack.c.b16 %v2279, %v2275
        %v2324 = vpack.c.b16 %v2284, %v2280
        %v2325 = vpack.c.b16 %v2285, %v2281
        %v2326 = vpack.c.b16 %v2286, %v2282
        %v2327 = vpack.c.b16 %v2287, %v2283
        %v2328 = vpack.c.b16 %v2292, %v2288
        %v2329 = vpack.c.b16 %v2293, %v2289
        %v2330 = vpack.c.b16 %v2294, %v2290
        %v2331 = vpack.c.b16 %v2295, %v2291
        %v2332 = vpack.c.b16 %v2300, %v2296
        %v2333 = vpack.c.b16 %v2301, %v2297
        %v2334 = vpack.c.b16 %v2302, %v2298
        %v2335 = vpack.c.b16 %v2303, %v2299
        %2368 = vmatprep.subr.bf16.mxu0 %v2305
        %2369 = vmatpush1.bf16.msra.mxu0 %v2304
        %2370 = vmatprep.subr.bf16.mxu0 %v2309
        %2371 = vmatpush1.bf16.msra.mxu0 %v2308
        %2372 = vmatprep.subr.bf16.mxu0 %v2313
        %2373 = vmatpush1.bf16.msra.mxu0 %v2312
        %2374 = vmatprep.subr.bf16.mxu0 %v2317
        %2375 = vmatpush1.bf16.msra.mxu0 %v2316
        %2376 = vmatprep.subr.bf16.mxu0 %v2321
        %2377 = vmatpush1.bf16.msra.mxu0 %v2320
        %2378 = vmatprep.subr.bf16.mxu0 %v2325
        %2379 = vmatpush1.bf16.msra.mxu0 %v2324
        %2380 = vmatprep.subr.bf16.mxu0 %v2329
        %2381 = vmatpush1.bf16.msra.mxu0 %v2328
        %2382 = vmatprep.subr.bf16.mxu0 %v2333
        %2383 = vmatpush1.bf16.msra.mxu0 %v2332
        %2384 = vmatprep.subr.bf16.mxu0 0
        %2385 = vmatpush1.bf16.msra.mxu0 0
        %2386 = vmatprep.subr.bf16.mxu0 0
        %2387 = vmatpush1.bf16.msra.mxu0 0
        %2388 = vmatprep.subr.bf16.mxu0 0
        %2389 = vmatpush1.bf16.msra.mxu0 0
        %2390 = vmatprep.subr.bf16.mxu0 0
        %2391 = vmatpush1.bf16.msra.mxu0 0
        %2392 = vmatprep.subr.bf16.mxu0 0
        %2393 = vmatpush1.bf16.msra.mxu0 0
        %2394 = vmatprep.subr.bf16.mxu0 0
        %2395 = vmatpush1.bf16.msra.mxu0 0
        %2396 = vmatprep.subr.bf16.mxu0 0
        %2397 = vmatpush1.bf16.msra.mxu0 0
        %2398 = vmatprep.subr.bf16.mxu0 0
        %2399 = vmatpush1.bf16.msra.mxu0 0
        %2400 = vmatprep.mubr.bf16.mxu0 0
        %2401 = vmatmul.mubr.bf16.gmra.mrb[0].mxu0 %v2153
        %v2402 = vpop.f32.mrb[0].mxu0
        %v2403 = vadd.f32 %v2191, %v2402
        %v2404 = vpop.f32.mrb[0].mxu0
        %v2405 = vadd.f32 %v2195, %v2404
        %v2406 = vpop.f32.mrb[0].mxu0
        %v2407 = vpop.f32.mrb[0].mxu0
        %2408 = vdwg.mxu0
        %2409 = vmatprep.subr.bf16.mxu0 %v2307
        %2410 = vmatpush1.bf16.msra.mxu0 %v2306
        %2411 = vmatprep.subr.bf16.mxu0 %v2311
        %2412 = vmatpush1.bf16.msra.mxu0 %v2310
        %2413 = vmatprep.subr.bf16.mxu0 %v2315
        %2414 = vmatpush1.bf16.msra.mxu0 %v2314
        %2415 = vmatprep.subr.bf16.mxu0 %v2319
        %2416 = vmatpush1.bf16.msra.mxu0 %v2318
        %2417 = vmatprep.subr.bf16.mxu0 %v2323
        %2418 = vmatpush1.bf16.msra.mxu0 %v2322
        %2419 = vmatprep.subr.bf16.mxu0 %v2327
        %2420 = vmatpush1.bf16.msra.mxu0 %v2326
        %2421 = vmatprep.subr.bf16.mxu0 %v2331
        %2422 = vmatpush1.bf16.msra.mxu0 %v2330
        %2423 = vmatprep.subr.bf16.mxu0 %v2335
        %2424 = vmatpush1.bf16.msra.mxu0 %v2334
        %2425 = vmatprep.subr.bf16.mxu0 0
        %2426 = vmatpush1.bf16.msra.mxu0 0
        %2427 = vmatprep.subr.bf16.mxu0 0
        %2428 = vmatpush1.bf16.msra.mxu0 0
        %2429 = vmatprep.subr.bf16.mxu0 0
        %2430 = vmatpush1.bf16.msra.mxu0 0
        %2431 = vmatprep.subr.bf16.mxu0 0
        %2432 = vmatpush1.bf16.msra.mxu0 0
        %2433 = vmatprep.subr.bf16.mxu0 0
        %2434 = vmatpush1.bf16.msra.mxu0 0
        %2435 = vmatprep.subr.bf16.mxu0 0
        %2436 = vmatpush1.bf16.msra.mxu0 0
        %2437 = vmatprep.subr.bf16.mxu0 0
        %2438 = vmatpush1.bf16.msra.mxu0 0
        %2439 = vmatprep.subr.bf16.mxu0 0
        %2440 = vmatpush1.bf16.msra.mxu0 0
        %2441 = vmatprep.mubr.bf16.mxu0 0
        %2442 = vmatmul.mubr.bf16.gmra.mrb[0].mxu0 %v2153
        %v2443 = vpop.f32.mrb[0].mxu0
        %v2444 = vadd.f32 %v2199, %v2443
        %v2445 = vpop.f32.mrb[0].mxu0
        %v2446 = vadd.f32 %v2203, %v2445
        %v2447 = vpop.f32.mrb[0].mxu0
        %v2448 = vpop.f32.mrb[0].mxu0
        %2449 = vdwg.mxu0
        %v2450 = vmul.f32 %v2403, 0.5
        %v2451 = vmul.f32 %v2405, 0.5
        %v2452 = vmul.f32 %v2444, 0.5
        %v2453 = vmul.f32 %v2446, 0.5
        %v2454 = vmul.f32 %v2403, 0.044715
        %v2455 = vmul.f32 %v2405, 0.044715
        %v2456 = vmul.f32 %v2444, 0.044715
        %v2457 = vmul.f32 %v2446, 0.044715
        %v2458 = vmul.f32 %v2454, %v2403
        %v2459 = vmul.f32 %v2455, %v2405
        %v2460 = vmul.f32 %v2456, %v2444
        %v2461 = vmul.f32 %v2457, %v2446
        %v2462 = vmul.f32 %v2458, %v2403
        %v2463 = vmul.f32 %v2459, %v2405
        %v2464 = vmul.f32 %v2460, %v2444
        %v2465 = vmul.f32 %v2461, %v2446
        %v2466 = vadd.f32 %v2403, %v2462
        %v2467 = vadd.f32 %v2405, %v2463
        %v2468 = vadd.f32 %v2444, %v2464
        %v2469 = vadd.f32 %v2446, %v2465
        %v2470 = vmul.f32 %v2466, 0.7978846
        %v2471 = vmul.f32 %v2467, 0.7978846
        %v2472 = vmul.f32 %v2468, 0.7978846
        %v2473 = vmul.f32 %v2469, 0.7978846
        %v2474 = vtanh.pop %v2470
        %v2475 = vtanh.pop %v2471
        %v2476 = vtanh.pop %v2472
        %v2477 = vtanh.pop %v2473
        %v2478 = vadd.f32 %v2474, 1.0
        %v2479 = vadd.f32 %v2475, 1.0
        %v2480 = vadd.f32 %v2476, 1.0
        %v2481 = vadd.f32 %v2477, 1.0
        %v2482 = vmul.f32 %v2450, %v2478
        %v2483 = vmul.f32 %v2451, %v2479
        %v2484 = vmul.f32 %v2452, %v2480
        %v2485 = vmul.f32 %v2453, %v2481
        %v2486 = vpack.c.bf16 %v2482, %v2482
        %v2487 = vpack.c.bf16 %v2483, %v2483
        %v2488 = vpack.c.bf16 %v2484, %v2484
        %v2489 = vpack.c.bf16 %v2485, %v2485
        %v2490 = vld [vmem:[%s977] sm:$0xf]
        %v2491 = vld [vmem:[%s977 + $0x4] sm:$0xf]
        %v2492 = vld [vmem:[%s977 + $0x8] sm:$0xf]
        %v2493 = vld [vmem:[%s977 + $0xc] sm:$0xf]
        %v2494 = vld [vmem:[%s977 + $0x10] sm:$0xf]
        %v2495 = vld [vmem:[%s977 + $0x14] sm:$0xf]
        %v2496 = vld [vmem:[%s977 + $0x18] sm:$0xf]
        %v2497 = vld [vmem:[%s977 + $0x1c] sm:$0xf]
        %v2498 = vld [vmem:[%s977 + $0x20] sm:$0xf]
        %v2499 = vld [vmem:[%s977 + $0x24] sm:$0xf]
        %v2500 = vld [vmem:[%s977 + $0x28] sm:$0xf]
        %v2501 = vld [vmem:[%s977 + $0x2c] sm:$0xf]
        %v2502 = vld [vmem:[%s977 + $0x30] sm:$0xf]
        %v2503 = vld [vmem:[%s977 + $0x34] sm:$0xf]
        %v2504 = vld [vmem:[%s977 + $0x38] sm:$0xf]
        %v2505 = vld [vmem:[%s977 + $0x3c] sm:$0xf]
        %v2506 = vld [vmem:[%s977 + $0x40] sm:$0xf]
        %v2507 = vld [vmem:[%s977 + $0x44] sm:$0xf]
        %v2508 = vld [vmem:[%s977 + $0x48] sm:$0xf]
        %v2509 = vld [vmem:[%s977 + $0x4c] sm:$0xf]
        %v2510 = vld [vmem:[%s977 + $0x50] sm:$0xf]
        %v2511 = vld [vmem:[%s977 + $0x54] sm:$0xf]
        %v2512 = vld [vmem:[%s977 + $0x58] sm:$0xf]
        %v2513 = vld [vmem:[%s977 + $0x5c] sm:$0xf]
        %v2514 = vld [vmem:[%s977 + $0x60] sm:$0xf]
        %v2515 = vld [vmem:[%s977 + $0x64] sm:$0xf]
        %v2516 = vld [vmem:[%s977 + $0x68] sm:$0xf]
        %v2517 = vld [vmem:[%s977 + $0x6c] sm:$0xf]
        %v2518 = vld [vmem:[%s977 + $0x70] sm:$0xf]
        %v2519 = vld [vmem:[%s977 + $0x74] sm:$0xf]
        %v2520 = vld [vmem:[%s977 + $0x78] sm:$0xf]
        %v2521 = vld [vmem:[%s977 + $0x7c] sm:$0xf]
        %v2522 = vld [vmem:[%s977 + $0x80] sm:$0xf]
        %v2523 = vld [vmem:[%s977 + $0x84] sm:$0xf]
        %v2524 = vld [vmem:[%s977 + $0x88] sm:$0xf]
        %v2525 = vld [vmem:[%s977 + $0x8c] sm:$0xf]
        %v2526 = vld [vmem:[%s977 + $0x90] sm:$0xf]
        %v2527 = vld [vmem:[%s977 + $0x94] sm:$0xf]
        %v2528 = vld [vmem:[%s977 + $0x98] sm:$0xf]
        %v2529 = vld [vmem:[%s977 + $0x9c] sm:$0xf]
        %v2530 = vld [vmem:[%s977 + $0xa0] sm:$0xf]
        %v2531 = vld [vmem:[%s977 + $0xa4] sm:$0xf]
        %v2532 = vld [vmem:[%s977 + $0xa8] sm:$0xf]
        %v2533 = vld [vmem:[%s977 + $0xac] sm:$0xf]
        %v2534 = vld [vmem:[%s977 + $0xb0] sm:$0xf]
        %v2535 = vld [vmem:[%s977 + $0xb4] sm:$0xf]
        %v2536 = vld [vmem:[%s977 + $0xb8] sm:$0xf]
        %v2537 = vld [vmem:[%s977 + $0xbc] sm:$0xf]
        %v2538 = vld [vmem:[%s977 + $0xc0] sm:$0xf]
        %v2539 = vld [vmem:[%s977 + $0xc4] sm:$0xf]
        %v2540 = vld [vmem:[%s977 + $0xc8] sm:$0xf]
        %v2541 = vld [vmem:[%s977 + $0xcc] sm:$0xf]
        %v2542 = vld [vmem:[%s977 + $0xd0] sm:$0xf]
        %v2543 = vld [vmem:[%s977 + $0xd4] sm:$0xf]
        %v2544 = vld [vmem:[%s977 + $0xd8] sm:$0xf]
        %v2545 = vld [vmem:[%s977 + $0xdc] sm:$0xf]
        %v2546 = vld [vmem:[%s977 + $0xe0] sm:$0xf]
        %v2547 = vld [vmem:[%s977 + $0xe4] sm:$0xf]
        %v2548 = vld [vmem:[%s977 + $0xe8] sm:$0xf]
        %v2549 = vld [vmem:[%s977 + $0xec] sm:$0xf]
        %v2550 = vld [vmem:[%s977 + $0xf0] sm:$0xf]
        %v2551 = vld [vmem:[%s977 + $0xf4] sm:$0xf]
        %v2552 = vld [vmem:[%s977 + $0xf8] sm:$0xf]
        %v2553 = vld [vmem:[%s977 + $0xfc] sm:$0xf]
        %v2554 = vld [vmem:[%s985] sm:$0x1]
        %v2556 = vlaneseq
        %v2557 = vshrl.u32 %v2556, 7
        %v2558 = vsub.s32 0, %v2557
        %v2559 = vrot.slane %v2554, %v2558
        %v2625 = vunpack.c.l.b16 %v2490
        %v2626 = vunpack.c.l.b16 %v2491
        %v2627 = vunpack.c.l.b16 %v2492
        %v2628 = vunpack.c.l.b16 %v2493
        %v2629 = vunpack.c.l.b16 %v2494
        %v2630 = vunpack.c.l.b16 %v2495
        %v2631 = vunpack.c.l.b16 %v2496
        %v2632 = vunpack.c.l.b16 %v2497
        %v2633 = vunpack.c.l.b16 %v2498
        %v2634 = vunpack.c.l.b16 %v2499
        %v2635 = vunpack.c.l.b16 %v2500
        %v2636 = vunpack.c.l.b16 %v2501
        %v2637 = vunpack.c.l.b16 %v2502
        %v2638 = vunpack.c.l.b16 %v2503
        %v2639 = vunpack.c.l.b16 %v2504
        %v2640 = vunpack.c.l.b16 %v2505
        %v2641 = vunpack.c.l.b16 %v2506
        %v2642 = vunpack.c.l.b16 %v2507
        %v2643 = vunpack.c.l.b16 %v2508
        %v2644 = vunpack.c.l.b16 %v2509
        %v2645 = vunpack.c.l.b16 %v2510
        %v2646 = vunpack.c.l.b16 %v2511
        %v2647 = vunpack.c.l.b16 %v2512
        %v2648 = vunpack.c.l.b16 %v2513
        %v2649 = vunpack.c.l.b16 %v2514
        %v2650 = vunpack.c.l.b16 %v2515
        %v2651 = vunpack.c.l.b16 %v2516
        %v2652 = vunpack.c.l.b16 %v2517
        %v2653 = vunpack.c.l.b16 %v2518
        %v2654 = vunpack.c.l.b16 %v2519
        %v2655 = vunpack.c.l.b16 %v2520
        %v2656 = vunpack.c.l.b16 %v2521
        %v2657 = vunpack.c.l.b16 %v2522
        %v2658 = vunpack.c.l.b16 %v2523
        %v2659 = vunpack.c.l.b16 %v2524
        %v2660 = vunpack.c.l.b16 %v2525
        %v2661 = vunpack.c.l.b16 %v2526
        %v2662 = vunpack.c.l.b16 %v2527
        %v2663 = vunpack.c.l.b16 %v2528
        %v2664 = vunpack.c.l.b16 %v2529
        %v2665 = vunpack.c.l.b16 %v2530
        %v2666 = vunpack.c.l.b16 %v2531
        %v2667 = vunpack.c.l.b16 %v2532
        %v2668 = vunpack.c.l.b16 %v2533
        %v2669 = vunpack.c.l.b16 %v2534
        %v2670 = vunpack.c.l.b16 %v2535
        %v2671 = vunpack.c.l.b16 %v2536
        %v2672 = vunpack.c.l.b16 %v2537
        %v2673 = vunpack.c.l.b16 %v2538
        %v2674 = vunpack.c.l.b16 %v2539
        %v2675 = vunpack.c.l.b16 %v2540
        %v2676 = vunpack.c.l.b16 %v2541
        %v2677 = vunpack.c.l.b16 %v2542
        %v2678 = vunpack.c.l.b16 %v2543
        %v2679 = vunpack.c.l.b16 %v2544
        %v2680 = vunpack.c.l.b16 %v2545
        %v2681 = vunpack.c.l.b16 %v2546
        %v2682 = vunpack.c.l.b16 %v2547
        %v2683 = vunpack.c.l.b16 %v2548
        %v2684 = vunpack.c.l.b16 %v2549
        %v2685 = vunpack.c.l.b16 %v2550
        %v2686 = vunpack.c.l.b16 %v2551
        %v2687 = vunpack.c.l.b16 %v2552
        %v2688 = vunpack.c.l.b16 %v2553
        %v2689 = vpack.c.b16 %v2626, %v2625
        %v2690 = vpack.c.b16 %v2628, %v2627
        %v2691 = vpack.c.b16 %v2630, %v2629
        %v2692 = vpack.c.b16 %v2632, %v2631
        %v2693 = vpack.c.b16 %v2634, %v2633
        %v2694 = vpack.c.b16 %v2636, %v2635
        %v2695 = vpack.c.b16 %v2638, %v2637
        %v2696 = vpack.c.b16 %v2640, %v2639
        %v2697 = vpack.c.b16 %v2642, %v2641
        %v2698 = vpack.c.b16 %v2644, %v2643
        %v2699 = vpack.c.b16 %v2646, %v2645
        %v2700 = vpack.c.b16 %v2648, %v2647
        %v2701 = vpack.c.b16 %v2650, %v2649
        %v2702 = vpack.c.b16 %v2652, %v2651
        %v2703 = vpack.c.b16 %v2654, %v2653
        %v2704 = vpack.c.b16 %v2656, %v2655
        %v2705 = vpack.c.b16 %v2658, %v2657
        %v2706 = vpack.c.b16 %v2660, %v2659
        %v2707 = vpack.c.b16 %v2662, %v2661
        %v2708 = vpack.c.b16 %v2664, %v2663
        %v2709 = vpack.c.b16 %v2666, %v2665
        %v2710 = vpack.c.b16 %v2668, %v2667
        %v2711 = vpack.c.b16 %v2670, %v2669
        %v2712 = vpack.c.b16 %v2672, %v2671
        %v2713 = vpack.c.b16 %v2674, %v2673
        %v2714 = vpack.c.b16 %v2676, %v2675
        %v2715 = vpack.c.b16 %v2678, %v2677
        %v2716 = vpack.c.b16 %v2680, %v2679
        %v2717 = vpack.c.b16 %v2682, %v2681
        %v2718 = vpack.c.b16 %v2684, %v2683
        %v2719 = vpack.c.b16 %v2686, %v2685
        %v2720 = vpack.c.b16 %v2688, %v2687
        %2753 = vmatprep.subr.bf16.mxu0 0
        %2754 = vmatpush1.bf16.msra.mxu0 %v2689
        %2755 = vmatprep.subr.bf16.mxu0 0
        %2756 = vmatpush1.bf16.msra.mxu0 %v2690
        %2757 = vmatprep.subr.bf16.mxu0 0
        %2758 = vmatpush1.bf16.msra.mxu0 %v2691
        %2759 = vmatprep.subr.bf16.mxu0 0
        %2760 = vmatpush1.bf16.msra.mxu0 %v2692
        %2761 = vmatprep.subr.bf16.mxu0 0
        %2762 = vmatpush1.bf16.msra.mxu0 %v2693
        %2763 = vmatprep.subr.bf16.mxu0 0
        %2764 = vmatpush1.bf16.msra.mxu0 %v2694
        %2765 = vmatprep.subr.bf16.mxu0 0
        %2766 = vmatpush1.bf16.msra.mxu0 %v2695
        %2767 = vmatprep.subr.bf16.mxu0 0
        %2768 = vmatpush1.bf16.msra.mxu0 %v2696
        %2769 = vmatprep.subr.bf16.mxu0 0
        %2770 = vmatpush1.bf16.msra.mxu0 %v2697
        %2771 = vmatprep.subr.bf16.mxu0 0
        %2772 = vmatpush1.bf16.msra.mxu0 %v2698
        %2773 = vmatprep.subr.bf16.mxu0 0
        %2774 = vmatpush1.bf16.msra.mxu0 %v2699
        %2775 = vmatprep.subr.bf16.mxu0 0
        %2776 = vmatpush1.bf16.msra.mxu0 %v2700
        %2777 = vmatprep.subr.bf16.mxu0 0
        %2778 = vmatpush1.bf16.msra.mxu0 %v2701
        %2779 = vmatprep.subr.bf16.mxu0 0
        %2780 = vmatpush1.bf16.msra.mxu0 %v2702
        %2781 = vmatprep.subr.bf16.mxu0 0
        %2782 = vmatpush1.bf16.msra.mxu0 %v2703
        %2783 = vmatprep.subr.bf16.mxu0 0
        %2784 = vmatpush1.bf16.msra.mxu0 %v2704
        %2785 = vmatprep.mubr.bf16.mxu0 %v2487
        %2786 = vmatmul.mubr.bf16.gmra.mrb[0].mxu0 %v2486
        %v2787 = vpop.f32.mrb[0].mxu0
        %v2788 = vadd.f32 %v2559, %v2787
        %v2789 = vpop.f32.mrb[0].mxu0
        %v2790 = vpop.f32.mrb[0].mxu0
        %v2791 = vpop.f32.mrb[0].mxu0
        %2792 = vdwg.mxu0
        %2793 = vmatprep.subr.bf16.mxu0 0
        %2794 = vmatpush1.bf16.msra.mxu0 %v2705
        %2795 = vmatprep.subr.bf16.mxu0 0
        %2796 = vmatpush1.bf16.msra.mxu0 %v2706
        %2797 = vmatprep.subr.bf16.mxu0 0
        %2798 = vmatpush1.bf16.msra.mxu0 %v2707
        %2799 = vmatprep.subr.bf16.mxu0 0
        %2800 = vmatpush1.bf16.msra.mxu0 %v2708
        %2801 = vmatprep.subr.bf16.mxu0 0
        %2802 = vmatpush1.bf16.msra.mxu0 %v2709
        %2803 = vmatprep.subr.bf16.mxu0 0
        %2804 = vmatpush1.bf16.msra.mxu0 %v2710
        %2805 = vmatprep.subr.bf16.mxu0 0
        %2806 = vmatpush1.bf16.msra.mxu0 %v2711
        %2807 = vmatprep.subr.bf16.mxu0 0
        %2808 = vmatpush1.bf16.msra.mxu0 %v2712
        %2809 = vmatprep.subr.bf16.mxu0 0
        %2810 = vmatpush1.bf16.msra.mxu0 %v2713
        %2811 = vmatprep.subr.bf16.mxu0 0
        %2812 = vmatpush1.bf16.msra.mxu0 %v2714
        %2813 = vmatprep.subr.bf16.mxu0 0
        %2814 = vmatpush1.bf16.msra.mxu0 %v2715
        %2815 = vmatprep.subr.bf16.mxu0 0
        %2816 = vmatpush1.bf16.msra.mxu0 %v2716
        %2817 = vmatprep.subr.bf16.mxu0 0
        %2818 = vmatpush1.bf16.msra.mxu0 %v2717
        %2819 = vmatprep.subr.bf16.mxu0 0
        %2820 = vmatpush1.bf16.msra.mxu0 %v2718
        %2821 = vmatprep.subr.bf16.mxu0 0
        %2822 = vmatpush1.bf16.msra.mxu0 %v2719
        %2823 = vmatprep.subr.bf16.mxu0 0
        %2824 = vmatpush1.bf16.msra.mxu0 %v2720
        %2825 = vmatprep.mubr.bf16.mxu0 %v2489
        %2826 = vmatmul.mubr.bf16.gmra.mrb[0].mxu0 %v2488
        %v2827 = vpop.f32.mrb[0].mxu0
        %v2828 = vadd.f32 %v2788, %v2827
        %v2829 = vpop.f32.mrb[0].mxu0
        %v2830 = vpop.f32.mrb[0].mxu0
        %v2831 = vpop.f32.mrb[0].mxu0
        %2832 = vdwg.mxu0
        %v2833 = vadd.f32 %v2828, %v2152
        %v2834 = vld [vmem:[%s993] sm:$0x1]
        %v2835 = vld [vmem:[%s1001] sm:$0x1]
        %2836 = vadd.xlane.f32.xlu0 %v2833
        %v2837 = vpop.xlane.xlu0 %2836
        %v2838 = vmul.f32 %v2837, %v2129
        %v2839 = vsub.f32 %v2833, %v2838
        %v2840 = vmul.f32 %v2839, %v2839
        %2841 = vadd.xlane.f32.xlu0 %v2840
        %v2842 = vpop.xlane.xlu0 %2841
        %v2843 = vmul.f32 %v2842, %v2129
        %v2844 = vadd.f32 %v2843, 1e-12
        %v2845 = vrsqrt.pop %v2844
        %v2846 = vmul.f32 %v2839, %v2845
        %v2848 = vlaneseq
        %v2849 = vshrl.u32 %v2848, 7
        %v2850 = vsub.s32 0, %v2849
        %v2851 = vrot.slane %v2834, %v2850
        %v2853 = vmul.f32 %v2846, %v2851
        %v2855 = vlaneseq
        %v2856 = vshrl.u32 %v2855, 7
        %v2857 = vsub.s32 0, %v2856
        %v2858 = vrot.slane %v2835, %v2857
        %v2860 = vadd.f32 %v2853, %v2858
        %2861 = vst [vmem:[#allocation2] sm:$0xff] %v2860
        %p2862 = scmp.eq.s32.totalorder %s62, 1
        // Predicated region
        $region169: #{tpu_custom_call.1} parent=99 // pred_check
          %p2863 = pneg %p2862
        $region170: #{tpu_custom_call.1} parent=99 // pred_check_branch
          %2865 = sbr.rel (%p2863) target = $region172
        $region171: #{tpu_custom_call.1} parent=99 // pred_region
          %v2866 = vpack.c.bf16 %v2860, %v2860
          %v2867 = vld [vmem:[#allocation26] sm:$0xf]
          %v2868 = vld [vmem:[#allocation26 + $0x4] sm:$0xf]
          %v2869 = vld [vmem:[#allocation26 + $0x8] sm:$0xf]
          %v2870 = vld [vmem:[#allocation26 + $0xc] sm:$0xf]
          %v2871 = vld [vmem:[#allocation26 + $0x10] sm:$0xf]
          %v2872 = vld [vmem:[#allocation26 + $0x14] sm:$0xf]
          %v2873 = vld [vmem:[#allocation26 + $0x18] sm:$0xf]
          %v2874 = vld [vmem:[#allocation26 + $0x1c] sm:$0xf]
          %v2875 = vld [vmem:[#allocation26 + $0x20] sm:$0xf]
          %v2876 = vld [vmem:[#allocation26 + $0x24] sm:$0xf]
          %v2877 = vld [vmem:[#allocation26 + $0x28] sm:$0xf]
          %v2878 = vld [vmem:[#allocation26 + $0x2c] sm:$0xf]
          %v2879 = vld [vmem:[#allocation26 + $0x30] sm:$0xf]
          %v2880 = vld [vmem:[#allocation26 + $0x34] sm:$0xf]
          %v2881 = vld [vmem:[#allocation26 + $0x38] sm:$0xf]
          %v2882 = vld [vmem:[#allocation26 + $0x3c] sm:$0xf]
          %v2883 = vld [vmem:[#allocation27] sm:$0x1]
          %v2885 = vlaneseq
          %v2886 = vshrl.u32 %v2885, 7
          %v2887 = vsub.s32 0, %v2886
          %v2888 = vrot.slane %v2883, %v2887
          %v2906 = vunpack.c.l.b16 %v2867
          %v2907 = vunpack.c.l.b16 %v2868
          %v2908 = vunpack.c.l.b16 %v2869
          %v2909 = vunpack.c.l.b16 %v2870
          %v2910 = vunpack.c.l.b16 %v2871
          %v2911 = vunpack.c.l.b16 %v2872
          %v2912 = vunpack.c.l.b16 %v2873
          %v2913 = vunpack.c.l.b16 %v2874
          %v2914 = vunpack.c.l.b16 %v2875
          %v2915 = vunpack.c.l.b16 %v2876
          %v2916 = vunpack.c.l.b16 %v2877
          %v2917 = vunpack.c.l.b16 %v2878
          %v2918 = vunpack.c.l.b16 %v2879
          %v2919 = vunpack.c.l.b16 %v2880
          %v2920 = vunpack.c.l.b16 %v2881
          %v2921 = vunpack.c.l.b16 %v2882
          %v2922 = vpack.c.b16 %v2907, %v2906
          %v2923 = vpack.c.b16 %v2909, %v2908
          %v2924 = vpack.c.b16 %v2911, %v2910
          %v2925 = vpack.c.b16 %v2913, %v2912
          %v2926 = vpack.c.b16 %v2915, %v2914
          %v2927 = vpack.c.b16 %v2917, %v2916
          %v2928 = vpack.c.b16 %v2919, %v2918
          %v2929 = vpack.c.b16 %v2921, %v2920
          %2938 = vmatprep.subr.bf16.mxu0 0
          %2939 = vmatpush1.bf16.msra.mxu0 %v2922
          %2940 = vmatprep.subr.bf16.mxu0 0
          %2941 = vmatpush1.bf16.msra.mxu0 %v2923
          %2942 = vmatprep.subr.bf16.mxu0 0
          %2943 = vmatpush1.bf16.msra.mxu0 %v2924
          %2944 = vmatprep.subr.bf16.mxu0 0
          %2945 = vmatpush1.bf16.msra.mxu0 %v2925
          %2946 = vmatprep.subr.bf16.mxu0 0
          %2947 = vmatpush1.bf16.msra.mxu0 %v2926
          %2948 = vmatprep.subr.bf16.mxu0 0
          %2949 = vmatpush1.bf16.msra.mxu0 %v2927
          %2950 = vmatprep.subr.bf16.mxu0 0
          %2951 = vmatpush1.bf16.msra.mxu0 %v2928
          %2952 = vmatprep.subr.bf16.mxu0 0
          %2953 = vmatpush1.bf16.msra.mxu0 %v2929
          %2954 = vmatprep.subr.bf16.mxu0 0
          %2955 = vmatpush1.bf16.msra.mxu0 0
          %2956 = vmatprep.subr.bf16.mxu0 0
          %2957 = vmatpush1.bf16.msra.mxu0 0
          %2958 = vmatprep.subr.bf16.mxu0 0
          %2959 = vmatpush1.bf16.msra.mxu0 0
          %2960 = vmatprep.subr.bf16.mxu0 0
          %2961 = vmatpush1.bf16.msra.mxu0 0
          %2962 = vmatprep.subr.bf16.mxu0 0
          %2963 = vmatpush1.bf16.msra.mxu0 0
          %2964 = vmatprep.subr.bf16.mxu0 0
          %2965 = vmatpush1.bf16.msra.mxu0 0
          %2966 = vmatprep.subr.bf16.mxu0 0
          %2967 = vmatpush1.bf16.msra.mxu0 0
          %2968 = vmatprep.subr.bf16.mxu0 0
          %2969 = vmatpush1.bf16.msra.mxu0 0
          %2970 = vmatprep.mubr.bf16.mxu0 0
          %2971 = vmatmul.mubr.bf16.gmra.mrb[0].mxu0 %v2866
          %v2972 = vpop.f32.mrb[0].mxu0
          %v2973 = vadd.f32 %v2888, %v2972
          %v2974 = vpop.f32.mrb[0].mxu0
          %v2975 = vpop.f32.mrb[0].mxu0
          %v2976 = vpop.f32.mrb[0].mxu0
          %2977 = vdwg.mxu0
          %v2978 = vmax.f32 %v2973, 0.0
          %v2979 = vpack.c.bf16 %v2978, %v2978
          %v2980 = vld [vmem:[%s18] sm:$0xf]
          %v2981 = vld [vmem:[%s18 + $0x4] sm:$0xf]
          %v2982 = vld [vmem:[%s18 + $0x8] sm:$0xf]
          %v2983 = vld [vmem:[%s18 + $0xc] sm:$0xf]
          %v2984 = vld [vmem:[%s18 + $0x10] sm:$0xf]
          %v2985 = vld [vmem:[%s18 + $0x14] sm:$0xf]
          %v2986 = vld [vmem:[%s18 + $0x18] sm:$0xf]
          %v2987 = vld [vmem:[%s18 + $0x1c] sm:$0xf]
          %v2988 = vld [vmem:[%s18 + $0x20] sm:$0xf]
          %v2989 = vld [vmem:[%s18 + $0x24] sm:$0xf]
          %v2990 = vld [vmem:[%s18 + $0x28] sm:$0xf]
          %v2991 = vld [vmem:[%s18 + $0x2c] sm:$0xf]
          %v2992 = vld [vmem:[%s18 + $0x30] sm:$0xf]
          %v2993 = vld [vmem:[%s18 + $0x34] sm:$0xf]
          %v2994 = vld [vmem:[%s18 + $0x38] sm:$0xf]
          %v2995 = vld [vmem:[%s18 + $0x3c] sm:$0xf]
          %v2996 = vld [vmem:[%s19] sm:$0x1]
          %v2998 = vlaneseq
          %v2999 = vshrl.u32 %v2998, 7
          %v3000 = vsub.s32 0, %v2999
          %v3001 = vrot.slane %v2996, %v3000
          %v3019 = vunpack.c.l.b16 %v2980
          %v3020 = vunpack.c.l.b16 %v2981
          %v3021 = vunpack.c.l.b16 %v2982
          %v3022 = vunpack.c.l.b16 %v2983
          %v3023 = vunpack.c.l.b16 %v2984
          %v3024 = vunpack.c.l.b16 %v2985
          %v3025 = vunpack.c.l.b16 %v2986
          %v3026 = vunpack.c.l.b16 %v2987
          %v3027 = vunpack.c.l.b16 %v2988
          %v3028 = vunpack.c.l.b16 %v2989
          %v3029 = vunpack.c.l.b16 %v2990
          %v3030 = vunpack.c.l.b16 %v2991
          %v3031 = vunpack.c.l.b16 %v2992
          %v3032 = vunpack.c.l.b16 %v2993
          %v3033 = vunpack.c.l.b16 %v2994
          %v3034 = vunpack.c.l.b16 %v2995
          %v3035 = vpack.c.b16 %v3020, %v3019
          %v3036 = vpack.c.b16 %v3022, %v3021
          %v3037 = vpack.c.b16 %v3024, %v3023
          %v3038 = vpack.c.b16 %v3026, %v3025
          %v3039 = vpack.c.b16 %v3028, %v3027
          %v3040 = vpack.c.b16 %v3030, %v3029
          %v3041 = vpack.c.b16 %v3032, %v3031
          %v3042 = vpack.c.b16 %v3034, %v3033
          %3051 = vmatprep.subr.bf16.mxu0 0
          %3052 = vmatpush1.bf16.msra.mxu0 %v3035
          %3053 = vmatprep.subr.bf16.mxu0 0
          %3054 = vmatpush1.bf16.msra.mxu0 %v3036
          %3055 = vmatprep.subr.bf16.mxu0 0
          %3056 = vmatpush1.bf16.msra.mxu0 %v3037
          %3057 = vmatprep.subr.bf16.mxu0 0
          %3058 = vmatpush1.bf16.msra.mxu0 %v3038
          %3059 = vmatprep.subr.bf16.mxu0 0
          %3060 = vmatpush1.bf16.msra.mxu0 %v3039
          %3061 = vmatprep.subr.bf16.mxu0 0
          %3062 = vmatpush1.bf16.msra.mxu0 %v3040
          %3063 = vmatprep.subr.bf16.mxu0 0
          %3064 = vmatpush1.bf16.msra.mxu0 %v3041
          %3065 = vmatprep.subr.bf16.mxu0 0
          %3066 = vmatpush1.bf16.msra.mxu0 %v3042
          %3067 = vmatprep.subr.bf16.mxu0 0
          %3068 = vmatpush1.bf16.msra.mxu0 0
          %3069 = vmatprep.subr.bf16.mxu0 0
          %3070 = vmatpush1.bf16.msra.mxu0 0
          %3071 = vmatprep.subr.bf16.mxu0 0
          %3072 = vmatpush1.bf16.msra.mxu0 0
          %3073 = vmatprep.subr.bf16.mxu0 0
          %3074 = vmatpush1.bf16.msra.mxu0 0
          %3075 = vmatprep.subr.bf16.mxu0 0
          %3076 = vmatpush1.bf16.msra.mxu0 0
          %3077 = vmatprep.subr.bf16.mxu0 0
          %3078 = vmatpush1.bf16.msra.mxu0 0
          %3079 = vmatprep.subr.bf16.mxu0 0
          %3080 = vmatpush1.bf16.msra.mxu0 0
          %3081 = vmatprep.subr.bf16.mxu0 0
          %3082 = vmatpush1.bf16.msra.mxu0 0
          %3083 = vmatprep.mubr.bf16.mxu0 0
          %3084 = vmatmul.mubr.bf16.gmra.mrb[0].mxu0 %v2979
          %v3085 = vpop.f32.mrb[0].mxu0
          %v3086 = vadd.f32 %v3001, %v3085
          %v3087 = vpop.f32.mrb[0].mxu0
          %v3088 = vpop.f32.mrb[0].mxu0
          %v3089 = vpop.f32.mrb[0].mxu0
          %3090 = vdwg.mxu0
          %3091 = vst [vmem:[%s1121] sm:$0xff] %v3086
        $region172: #{tpu_custom_call.1} parent=99 // pred_fallthru
          _
        %s3092 = sand.u32 %s567, 1
        %s3093 = scalar_lea.sflag [#allocation5], %s3092
        %s3094 = sand.u32 %s567, 1
        %s3095 = smul.addr %s3094, 8
        %s3096 = scalar_lea.vmem [#allocation29], %s3095
        // Predicated region
        $region173: #{tpu_custom_call.1} parent=99 // pred_check
          %p3097 = pneg %p577
        $region174: #{tpu_custom_call.1} parent=99 // pred_check_branch
          %3099 = sbr.rel (%p3097) target = $region176
        $region175: #{tpu_custom_call.1} parent=99 // pred_region
          %s3101 = ssub.s32 128, 128
          %3102 = vsyncadd %s3093, %s3101
          %s3103 = smul.addr %s61, 128
          %s3104 = scalar_lea.hbm %s20, %s3103
          %s3106 = sshll.u32 %s3096, 4
          %s3107 = int_to_ptr.vmem [resolvable:$true] %s3106
          %3109 = dma.vmem_to_hbm [thread:$0]  %s3107, 128, %s3104, %s3093
        $region176: #{tpu_custom_call.1} parent=99 // pred_fallthru
          _
      $region100: #{tpu_custom_call.1} parent=5 // pred_fallthru
        _
      %p3110 = scmp.le.s32.totalorder 2, %s52
      // Predicated region
      $region177: #{tpu_custom_call.1} parent=5 // pred_check
        %p3111 = pneg %p3110
      $region178: #{tpu_custom_call.1} parent=5 // pred_check_branch
        %3113 = sbr.rel (%p3111) target = $region180
      $region179: #{tpu_custom_call.1} parent=5 // pred_region
        %s3114 = ssub.s32 %s52, 2
        // Predicated region
        $region181: #{tpu_custom_call.1} parent=179 // pred_check
          %p3115 = pneg %p583
        $region182: #{tpu_custom_call.1} parent=179 // pred_check_branch
          %3117 = sbr.rel (%p3115) target = $region184
        $region183: #{tpu_custom_call.1} parent=179 // pred_region
          %s3118 = sand.u32 %s568, 1
          %s3119 = scalar_lea.sflag [#allocation5], %s3118
          %s3120 = sand.u32 %s568, 1
          %s3121 = smul.addr %s3120, 8
          %s3122 = scalar_lea.vmem [#allocation29], %s3121
          %3123 = dma.done %s3119, 128
        $region184: #{tpu_custom_call.1} parent=179 // pred_fallthru
          _
      $region180: #{tpu_custom_call.1} parent=5 // pred_fallthru
        _
    $region6: #{tpu_custom_call.1} parent=1 // loop_footer
      %s56 = sadd.s32 1, %s52
    $region7: #{tpu_custom_call.1} parent=1 // loop_footer_branch
      %51 = sbr.rel target = $region3
    $region8: #{tpu_custom_call.1} parent=1 // loop_exit
      _
    %3124 = vsyncpa [#allocation4], 1
    %s3125 = scalar_lea.sflag [#allocation4], 1
    %3126 = vsyncpa %s3125, 1
    %3127 = vsyncpa [#allocation7], 1
    %3128 = vsyncpa [#allocation10], 1
    %s3129 = scalar_lea.sflag [#allocation10], 1
    %3130 = vsyncpa %s3129, 1
    %3131 = vsyncpa [#allocation13], 1
    %s3132 = scalar_lea.sflag [#allocation13], 1
    %3133 = vsyncpa %s3132, 1
    %3134 = vsyncpa [#allocation16], 1
    %s3135 = scalar_lea.sflag [#allocation16], 1
    %3136 = vsyncpa %s3135, 1
    %3137 = vsyncpa [#allocation19], 1
    %s3138 = scalar_lea.sflag [#allocation19], 1
    %3139 = vsyncpa %s3138, 1
    %3140 = vsyncpa [#allocation22], 1
    %s3141 = scalar_lea.sflag [#allocation22], 1
    %3142 = vsyncpa %s3141, 1
    %3143 = vsyncpa [#allocation25], 1
    %s3144 = scalar_lea.sflag [#allocation25], 1
    %3145 = vsyncpa %s3144, 1
    %3146 = vsyncpa [#allocation28], 1
    %3147 = vsyncpa [#allocation5], 1
    %s3148 = scalar_lea.sflag [#allocation5], 1
    %3149 = vsyncpa %s3148, 1

</llo_original>
